<compile_context>
chip_gen: v7x
topology: tpu7x:2x2x1
jax: 0.10.0
libtpu: 0.0.40
codegen_flags: <defaults>
</compile_context>

<pallas_src>
import math

import jax
import jax.numpy as jnp
from jax import lax
from jax.experimental import pallas as pl
from jax.experimental.pallas import tpu as pltpu

# ---- small synthetic "bert" config ------------------------------------------
HIDDEN = 32
HEADS = 4
HEAD_DIM = HIDDEN // HEADS
INTERMEDIATE = 64
LAYERS = 2
VOCAB = 30
TYPE_VOCAB = 2
MAX_POS = 16
LN_EPS = 1e-12


def _layernorm(x, g, b):
    mu = jnp.mean(x, axis=-1, keepdims=True)
    var = jnp.mean((x - mu) ** 2, axis=-1, keepdims=True)
    return (x - mu) * lax.rsqrt(var + LN_EPS) * g + b


# ---------------------------- fused encoder kernel ----------------------------
def _encoder_kernel(
    emb_ref,             # (B*S, HIDDEN)        embeddings, batch folded into sublanes
    bias_ref,            # (B*S, B*S)           precomputed additive attention bias
    eg_ref, eb_ref,      # (1, HIDDEN)          embedding LayerNorm gamma / beta
    wqkv_ref, bqkv_ref,  # (L, H, 3H) / (L, 1, 3H)   fused Q|K|V (Q pre-scaled)
    wo_ref, bo_ref,      # (L, H, H)  / (L, 1, H)    attention output proj
    g1_ref, b1_ref,      # (L, 1, H)                 post-attention LN
    wi_ref, bi_ref,      # (L, H, I)  / (L, 1, I)    FFN up
    wo2_ref, bo2_ref,    # (L, I, H)  / (L, 1, H)    FFN down
    g2_ref, b2_ref,      # (L, 1, H)                 post-FFN LN
    pw_ref, pb_ref,      # (H, H) / (1, H)           pooler
    seq_ref,             # out: (B*S, HIDDEN)
    pooled_ref,          # out: (B, HIDDEN)
):
    BS, _ = seq_ref.shape
    B = pooled_ref.shape[0]
    S = BS // B

    # embedding LayerNorm on the whole (B*S, HIDDEN) slab
    x = _layernorm(emb_ref[...], eg_ref[...], eb_ref[...])

    # additive mask bias (padding + block-diagonal batch structure): read once
    bias = bias_ref[...]                                   # (B*S, B*S)

    nt_dims = (((1,), (1,)), ((), ()))                     # q @ k^T without kh.T

    for li in range(LAYERS):                               # static unroll, resident weights
        # fused QKV projection (1/sqrt(HEAD_DIM) already folded into Q columns)
        qkv = jnp.dot(x, wqkv_ref[li], preferred_element_type=jnp.float32) + bqkv_ref[li]

        ctx_parts = []
        for h in range(HEADS):
            lo = h * HEAD_DIM
            qh = qkv[:, lo:lo + HEAD_DIM]                            # (BS, Dh)
            kh = qkv[:, HIDDEN + lo:HIDDEN + lo + HEAD_DIM]          # (BS, Dh)
            vh = qkv[:, 2 * HIDDEN + lo:2 * HIDDEN + lo + HEAD_DIM]  # (BS, Dh)
            s = lax.dot_general(qh, kh, nt_dims,
                                preferred_element_type=jnp.float32) + bias
            m = jnp.max(s, axis=-1, keepdims=True)
            p = jnp.exp(s - m)
            denom = jnp.sum(p, axis=-1, keepdims=True)
            ctx_h = jnp.dot(p, vh, preferred_element_type=jnp.float32)   # (BS, Dh)
            # deferred softmax normalization: EUP reciprocal, small multiply
            ctx_parts.append(ctx_h * pl.reciprocal(denom, approx=True))
        ctx = jnp.concatenate(ctx_parts, axis=-1)          # (B*S, HIDDEN)

        attn_out = jnp.dot(ctx, wo_ref[li],
                           preferred_element_type=jnp.float32) + bo_ref[li]
        x = _layernorm(attn_out + x, g1_ref[li], b1_ref[li])

        inter = jnp.dot(x, wi_ref[li], preferred_element_type=jnp.float32) + bi_ref[li]
        # TODO(synk): HF BERT uses exact erf-GELU; tanh approximation used here.
        inter = jax.nn.gelu(inter, approximate=True)
        ffn = jnp.dot(inter, wo2_ref[li],
                      preferred_element_type=jnp.float32) + bo2_ref[li]
        x = _layernorm(ffn + x, g2_ref[li], b2_ref[li])

    seq_ref[...] = x

    # pooler on the CLS rows (row b*S of each batch), inside the same kernel
    cls = jnp.concatenate([x[b * S:b * S + 1, :] for b in range(B)], axis=0)  # (B, H)
    pooled_ref[...] = jnp.tanh(
        jnp.dot(cls, pw_ref[...], preferred_element_type=jnp.float32) + pb_ref[...])


# ---------------------------- parameter init ----------------------------------
def init_params(key):
    k = jax.random.split(key, 8)

    def w(key, shape):
        return 0.02 * jax.random.normal(key, shape, jnp.float32)

    # fold the 1/sqrt(HEAD_DIM) attention scale into the Q projection at init
    scale = 1.0 / math.sqrt(HEAD_DIM)
    wqkv = w(k[3], (LAYERS, HIDDEN, 3 * HIDDEN))
    wqkv = wqkv.at[:, :, :HIDDEN].multiply(scale)
    bqkv = jnp.zeros((LAYERS, 1, 3 * HIDDEN), jnp.float32)
    bqkv = bqkv.at[:, :, :HIDDEN].multiply(scale)

    return {
        "word_emb": w(k[0], (VOCAB, HIDDEN)),
        "pos_emb": w(k[1], (MAX_POS, HIDDEN)),
        "type_emb": w(k[2], (TYPE_VOCAB, HIDDEN)),
        "emb_ln_g": jnp.ones((1, HIDDEN), jnp.float32),
        "emb_ln_b": jnp.zeros((1, HIDDEN), jnp.float32),
        # per-layer stacks; Q|K|V fused along the output dim (Q pre-scaled)
        "wqkv": wqkv,
        "bqkv": bqkv,
        "wo": w(k[4], (LAYERS, HIDDEN, HIDDEN)),
        "bo": jnp.zeros((LAYERS, 1, HIDDEN), jnp.float32),
        "ln1_g": jnp.ones((LAYERS, 1, HIDDEN), jnp.float32),
        "ln1_b": jnp.zeros((LAYERS, 1, HIDDEN), jnp.float32),
        "wi": w(k[5], (LAYERS, HIDDEN, INTERMEDIATE)),
        "bi": jnp.zeros((LAYERS, 1, INTERMEDIATE), jnp.float32),
        "wo2": w(k[6], (LAYERS, INTERMEDIATE, HIDDEN)),
        "bo2": jnp.zeros((LAYERS, 1, HIDDEN), jnp.float32),
        "ln2_g": jnp.ones((LAYERS, 1, HIDDEN), jnp.float32),
        "ln2_b": jnp.zeros((LAYERS, 1, HIDDEN), jnp.float32),
        "pool_w": w(k[7], (HIDDEN, HIDDEN)),
        "pool_b": jnp.zeros((1, HIDDEN), jnp.float32),
    }


# ---------------------------- BERT forward ------------------------------------
def bert_forward(params, input_ids, token_type_ids, attention_mask):
    B, S = input_ids.shape
    BS = B * S

    # embeddings (gather = glue, in plain JAX); batch folded into sublane axis
    emb = (params["word_emb"][input_ids]
           + params["pos_emb"][jnp.arange(S)][None, :, :]
           + params["type_emb"][token_type_ids])                     # (B, S, H)
    emb2d = emb.reshape(BS, HIDDEN)

    # precomputed additive attention bias:
    #   -10000 for padded keys (HF convention), -1e9 for cross-batch positions
    #   (block-diagonal so folded batches never attend to each other).
    key_bias = (1.0 - attention_mask.astype(jnp.float32)) * -10000.0  # (B, S)
    row_batch = jnp.repeat(jnp.arange(B), S)                          # (BS,)
    same_batch = row_batch[:, None] == row_batch[None, :]             # (BS, BS)
    bias = jnp.where(same_batch, key_bias.reshape(1, BS), jnp.float32(-1e9))

    def spec(shape):
        nd = len(shape)
        return pl.BlockSpec(shape, lambda i, _nd=nd: (0,) * _nd)

    seq2d, pooled = pl.pallas_call(
        _encoder_kernel,
        out_shape=(
            jax.ShapeDtypeStruct((BS, HIDDEN), jnp.float32),
            jax.ShapeDtypeStruct((B, HIDDEN), jnp.float32),
        ),
        grid=(1,),
        in_specs=[
            spec((BS, HIDDEN)),                                      # emb
            spec((BS, BS)),                                          # mask bias
            spec((1, HIDDEN)), spec((1, HIDDEN)),                    # emb LN g/b
            spec((LAYERS, HIDDEN, 3 * HIDDEN)),                      # wqkv
            spec((LAYERS, 1, 3 * HIDDEN)),                           # bqkv
            spec((LAYERS, HIDDEN, HIDDEN)),                          # wo
            spec((LAYERS, 1, HIDDEN)),                               # bo
            spec((LAYERS, 1, HIDDEN)), spec((LAYERS, 1, HIDDEN)),    # ln1 g/b
            spec((LAYERS, HIDDEN, INTERMEDIATE)),                    # wi
            spec((LAYERS, 1, INTERMEDIATE)),                         # bi
            spec((LAYERS, INTERMEDIATE, HIDDEN)),                    # wo2
            spec((LAYERS, 1, HIDDEN)),                               # bo2
            spec((LAYERS, 1, HIDDEN)), spec((LAYERS, 1, HIDDEN)),    # ln2 g/b
            spec((HIDDEN, HIDDEN)), spec((1, HIDDEN)),               # pooler
        ],
        out_specs=(
            spec((BS, HIDDEN)),
            spec((B, HIDDEN)),
        ),
        compiler_params=pltpu.CompilerParams(
            dimension_semantics=("arbitrary",)),
    )(
        emb2d, bias,
        params["emb_ln_g"], params["emb_ln_b"],
        params["wqkv"], params["bqkv"],
        params["wo"], params["bo"],
        params["ln1_g"], params["ln1_b"],
        params["wi"], params["bi"],
        params["wo2"], params["bo2"],
        params["ln2_g"], params["ln2_b"],
        params["pool_w"], params["pool_b"],
    )

    # mirrors BaseModelOutputWithPooling: (last_hidden_state, pooler_output)
    return seq2d.reshape(B, S, HIDDEN), pooled


# ---------------------------------- main ---------------------------------------
if __name__ == "__main__":
    key = jax.random.PRNGKey(0)
    kp, ki, kt, km = jax.random.split(key, 4)

    B, S = 2, 8
    params = init_params(kp)
    input_ids = jax.random.randint(ki, (B, S), 0, VOCAB, dtype=jnp.int32)
    token_type_ids = jax.random.randint(kt, (B, S), 0, TYPE_VOCAB, dtype=jnp.int32)
    # mask out the trailing 2 tokens of the second sequence
    attention_mask = jnp.ones((B, S), jnp.int32).at[1, -2:].set(0)

    fwd = jax.jit(bert_forward)
    seq_out, pooled = fwd(params, input_ids, token_type_ids, attention_mask)
    jax.block_until_ready((seq_out, pooled))

    assert seq_out.shape == (B, S, HIDDEN) and pooled.shape == (B, HIDDEN)
    assert bool(jnp.all(jnp.isfinite(seq_out))) and bool(jnp.all(jnp.isfinite(pooled)))
    print("KERNEL_OK")
</pallas_src>

<mosaic_0001>
module attributes {stable_mosaic.version = 11 : i64} {
  func.func @_encoder_kernel(%arg0: i32, %arg1: memref<16x32xf32, #tpu.memory_space<vmem>>, %arg2: memref<16x16xf32, #tpu.memory_space<vmem>>, %arg3: memref<1x32xf32, #tpu.memory_space<vmem>>, %arg4: memref<1x32xf32, #tpu.memory_space<vmem>>, %arg5: memref<2x32x96xf32, #tpu.memory_space<vmem>>, %arg6: memref<2x1x96xf32, #tpu.memory_space<vmem>>, %arg7: memref<2x32x32xf32, #tpu.memory_space<vmem>>, %arg8: memref<2x1x32xf32, #tpu.memory_space<vmem>>, %arg9: memref<2x1x32xf32, #tpu.memory_space<vmem>>, %arg10: memref<2x1x32xf32, #tpu.memory_space<vmem>>, %arg11: memref<2x32x64xf32, #tpu.memory_space<vmem>>, %arg12: memref<2x1x64xf32, #tpu.memory_space<vmem>>, %arg13: memref<2x64x32xf32, #tpu.memory_space<vmem>>, %arg14: memref<2x1x32xf32, #tpu.memory_space<vmem>>, %arg15: memref<2x1x32xf32, #tpu.memory_space<vmem>>, %arg16: memref<2x1x32xf32, #tpu.memory_space<vmem>>, %arg17: memref<32x32xf32, #tpu.memory_space<vmem>>, %arg18: memref<1x32xf32, #tpu.memory_space<vmem>>, %arg19: memref<16x32xf32, #tpu.memory_space<vmem>>, %arg20: memref<2x32xf32, #tpu.memory_space<vmem>>) attributes {dimension_semantics = [#tpu.dimension_semantics<arbitrary>], iteration_bounds = array<i64: 1>, scalar_prefetch = 0 : i64, scratch_operands = 0 : i64, tpu.core_type = #tpu.core_type<tc>, window_params = [{pipeline_mode = #tpu.pipeline_mode<synchronous>, transform_indices = @transform_0, window_bounds = array<i64: 16, 32>}, {pipeline_mode = #tpu.pipeline_mode<synchronous>, transform_indices = @transform_1, window_bounds = array<i64: 16, 16>}, {pipeline_mode = #tpu.pipeline_mode<synchronous>, transform_indices = @transform_2, window_bounds = array<i64: 1, 32>}, {pipeline_mode = #tpu.pipeline_mode<synchronous>, transform_indices = @transform_3, window_bounds = array<i64: 1, 32>}, {pipeline_mode = #tpu.pipeline_mode<synchronous>, transform_indices = @transform_4, window_bounds = array<i64: 2, 32, 96>}, {pipeline_mode = #tpu.pipeline_mode<synchronous>, transform_indices = @transform_5, window_bounds = array<i64: 2, 1, 96>}, {pipeline_mode = #tpu.pipeline_mode<synchronous>, transform_indices = @transform_6, window_bounds = array<i64: 2, 32, 32>}, {pipeline_mode = #tpu.pipeline_mode<synchronous>, transform_indices = @transform_7, window_bounds = array<i64: 2, 1, 32>}, {pipeline_mode = #tpu.pipeline_mode<synchronous>, transform_indices = @transform_8, window_bounds = array<i64: 2, 1, 32>}, {pipeline_mode = #tpu.pipeline_mode<synchronous>, transform_indices = @transform_9, window_bounds = array<i64: 2, 1, 32>}, {pipeline_mode = #tpu.pipeline_mode<synchronous>, transform_indices = @transform_10, window_bounds = array<i64: 2, 32, 64>}, {pipeline_mode = #tpu.pipeline_mode<synchronous>, transform_indices = @transform_11, window_bounds = array<i64: 2, 1, 64>}, {pipeline_mode = #tpu.pipeline_mode<synchronous>, transform_indices = @transform_12, window_bounds = array<i64: 2, 64, 32>}, {pipeline_mode = #tpu.pipeline_mode<synchronous>, transform_indices = @transform_13, window_bounds = array<i64: 2, 1, 32>}, {pipeline_mode = #tpu.pipeline_mode<synchronous>, transform_indices = @transform_14, window_bounds = array<i64: 2, 1, 32>}, {pipeline_mode = #tpu.pipeline_mode<synchronous>, transform_indices = @transform_15, window_bounds = array<i64: 2, 1, 32>}, {pipeline_mode = #tpu.pipeline_mode<synchronous>, transform_indices = @transform_16, window_bounds = array<i64: 32, 32>}, {pipeline_mode = #tpu.pipeline_mode<synchronous>, transform_indices = @transform_17, window_bounds = array<i64: 1, 32>}, {pipeline_mode = #tpu.pipeline_mode<synchronous>, transform_indices = @transform_18, window_bounds = array<i64: 16, 32>}, {pipeline_mode = #tpu.pipeline_mode<synchronous>, transform_indices = @transform_19, window_bounds = array<i64: 2, 32>}]} {
    %c0 = arith.constant 0 : index
    %c0_0 = arith.constant 0 : index
    %0 = vector.load %arg1[%c0, %c0_0] : memref<16x32xf32, #tpu.memory_space<vmem>>, vector<16x32xf32>
    %c0_1 = arith.constant 0 : index
    %c0_2 = arith.constant 0 : index
    %1 = vector.load %arg3[%c0_1, %c0_2] : memref<1x32xf32, #tpu.memory_space<vmem>>, vector<1x32xf32>
    %c0_3 = arith.constant 0 : index
    %c0_4 = arith.constant 0 : index
    %2 = vector.load %arg4[%c0_3, %c0_4] : memref<1x32xf32, #tpu.memory_space<vmem>>, vector<1x32xf32>
    %cst = arith.constant dense<0.000000e+00> : vector<16xf32>
    %3 = vector.multi_reduction <add>, %0, %cst [1] : vector<16x32xf32> to vector<16xf32>
    %4 = vector.shape_cast %3 : vector<16xf32> to vector<16x1xf32>
    %cst_5 = arith.constant 3.200000e+01 : f32
    %5 = vector.broadcast %cst_5 : f32 to vector<16x1xf32>
    %6 = arith.divf %4, %5 : vector<16x1xf32>
    %7 = vector.broadcast %6 : vector<16x1xf32> to vector<16x32xf32>
    %8 = arith.subf %0, %7 : vector<16x32xf32>
    %9 = arith.mulf %8, %8 : vector<16x32xf32>
    %cst_6 = arith.constant dense<0.000000e+00> : vector<16xf32>
    %10 = vector.multi_reduction <add>, %9, %cst_6 [1] : vector<16x32xf32> to vector<16xf32>
    %11 = vector.shape_cast %10 : vector<16xf32> to vector<16x1xf32>
    %cst_7 = arith.constant 3.200000e+01 : f32
    %12 = vector.broadcast %cst_7 : f32 to vector<16x1xf32>
    %13 = arith.divf %11, %12 : vector<16x1xf32>
    %14 = vector.broadcast %6 : vector<16x1xf32> to vector<16x32xf32>
    %15 = arith.subf %0, %14 : vector<16x32xf32>
    %cst_8 = arith.constant 9.99999996E-13 : f32
    %16 = vector.broadcast %cst_8 : f32 to vector<16x1xf32>
    %17 = arith.addf %13, %16 : vector<16x1xf32>
    %18 = math.rsqrt %17 : vector<16x1xf32>
    %19 = vector.broadcast %18 : vector<16x1xf32> to vector<16x32xf32>
    %20 = arith.mulf %15, %19 : vector<16x32xf32>
    %21 = vector.broadcast %1 : vector<1x32xf32> to vector<16x32xf32>
    %22 = arith.mulf %20, %21 : vector<16x32xf32>
    %23 = vector.broadcast %2 : vector<1x32xf32> to vector<16x32xf32>
    %24 = arith.addf %22, %23 : vector<16x32xf32>
    %c0_9 = arith.constant 0 : index
    %c0_10 = arith.constant 0 : index
    %25 = vector.load %arg2[%c0_9, %c0_10] : memref<16x16xf32, #tpu.memory_space<vmem>>, vector<16x16xf32>
    %c0_11 = arith.constant 0 : index
    %c0_12 = arith.constant 0 : index
    %c0_13 = arith.constant 0 : index
    %26 = vector.load %arg5[%c0_11, %c0_12, %c0_13] : memref<2x32x96xf32, #tpu.memory_space<vmem>>, vector<1x32x96xf32>
    %27 = vector.shape_cast %26 : vector<1x32x96xf32> to vector<32x96xf32>
    %cst_14 = arith.constant dense<0.000000e+00> : vector<16x96xf32>
    %28 = tpu.matmul %24, %27, %cst_14 {dimension_numbers = #tpu.dot_dimension_numbers<[1], [0], [0], [1], [0, 0, 1, 1], [], []>} : vector<16x32xf32>, vector<32x96xf32>, vector<16x96xf32> -> vector<16x96xf32>
    %c0_15 = arith.constant 0 : index
    %c0_16 = arith.constant 0 : index
    %c0_17 = arith.constant 0 : index
    %29 = vector.load %arg6[%c0_15, %c0_16, %c0_17] : memref<2x1x96xf32, #tpu.memory_space<vmem>>, vector<1x1x96xf32>
    %30 = vector.shape_cast %29 : vector<1x1x96xf32> to vector<1x96xf32>
    %31 = vector.broadcast %30 : vector<1x96xf32> to vector<16x96xf32>
    %32 = arith.addf %28, %31 : vector<16x96xf32>
    %33 = vector.extract_strided_slice %32 {offsets = [0, 0], sizes = [16, 8], strides = [1, 1]} : vector<16x96xf32> to vector<16x8xf32>
    %34 = vector.extract_strided_slice %32 {offsets = [0, 32], sizes = [16, 8], strides = [1, 1]} : vector<16x96xf32> to vector<16x8xf32>
    %35 = vector.extract_strided_slice %32 {offsets = [0, 64], sizes = [16, 8], strides = [1, 1]} : vector<16x96xf32> to vector<16x8xf32>
    %cst_18 = arith.constant dense<0.000000e+00> : vector<16x16xf32>
    %36 = tpu.matmul %33, %34, %cst_18 {dimension_numbers = #tpu.dot_dimension_numbers<[1], [1], [0], [0], [0, 0, 1, 0], [], []>} : vector<16x8xf32>, vector<16x8xf32>, vector<16x16xf32> -> vector<16x16xf32>
    %37 = arith.addf %36, %25 : vector<16x16xf32>
    %cst_19 = arith.constant dense<0xFF800000> : vector<16xf32>
    %38 = vector.multi_reduction <maximumf>, %37, %cst_19 [1] : vector<16x16xf32> to vector<16xf32>
    %39 = vector.shape_cast %38 : vector<16xf32> to vector<16x1xf32>
    %40 = vector.broadcast %39 : vector<16x1xf32> to vector<16x16xf32>
    %41 = arith.subf %37, %40 : vector<16x16xf32>
    %42 = math.exp %41 : vector<16x16xf32>
    %cst_20 = arith.constant dense<0.000000e+00> : vector<16xf32>
    %43 = vector.multi_reduction <add>, %42, %cst_20 [1] : vector<16x16xf32> to vector<16xf32>
    %44 = vector.shape_cast %43 : vector<16xf32> to vector<16x1xf32>
    %cst_21 = arith.constant dense<0.000000e+00> : vector<16x8xf32>
    %45 = tpu.matmul %42, %35, %cst_21 {dimension_numbers = #tpu.dot_dimension_numbers<[1], [0], [0], [1], [0, 0, 1, 1], [], []>} : vector<16x16xf32>, vector<16x8xf32>, vector<16x8xf32> -> vector<16x8xf32>
    %46 = tpu.reciprocal %44 {approx = true} : vector<16x1xf32> -> vector<16x1xf32>
    %47 = vector.broadcast %46 : vector<16x1xf32> to vector<16x8xf32>
    %48 = arith.mulf %45, %47 : vector<16x8xf32>
    %49 = vector.extract_strided_slice %32 {offsets = [0, 8], sizes = [16, 8], strides = [1, 1]} : vector<16x96xf32> to vector<16x8xf32>
    %50 = vector.extract_strided_slice %32 {offsets = [0, 40], sizes = [16, 8], strides = [1, 1]} : vector<16x96xf32> to vector<16x8xf32>
    %51 = vector.extract_strided_slice %32 {offsets = [0, 72], sizes = [16, 8], strides = [1, 1]} : vector<16x96xf32> to vector<16x8xf32>
    %cst_22 = arith.constant dense<0.000000e+00> : vector<16x16xf32>
    %52 = tpu.matmul %49, %50, %cst_22 {dimension_numbers = #tpu.dot_dimension_numbers<[1], [1], [0], [0], [0, 0, 1, 0], [], []>} : vector<16x8xf32>, vector<16x8xf32>, vector<16x16xf32> -> vector<16x16xf32>
    %53 = arith.addf %52, %25 : vector<16x16xf32>
    %cst_23 = arith.constant dense<0xFF800000> : vector<16xf32>
    %54 = vector.multi_reduction <maximumf>, %53, %cst_23 [1] : vector<16x16xf32> to vector<16xf32>
    %55 = vector.shape_cast %54 : vector<16xf32> to vector<16x1xf32>
    %56 = vector.broadcast %55 : vector<16x1xf32> to vector<16x16xf32>
    %57 = arith.subf %53, %56 : vector<16x16xf32>
    %58 = math.exp %57 : vector<16x16xf32>
    %cst_24 = arith.constant dense<0.000000e+00> : vector<16xf32>
    %59 = vector.multi_reduction <add>, %58, %cst_24 [1] : vector<16x16xf32> to vector<16xf32>
    %60 = vector.shape_cast %59 : vector<16xf32> to vector<16x1xf32>
    %cst_25 = arith.constant dense<0.000000e+00> : vector<16x8xf32>
    %61 = tpu.matmul %58, %51, %cst_25 {dimension_numbers = #tpu.dot_dimension_numbers<[1], [0], [0], [1], [0, 0, 1, 1], [], []>} : vector<16x16xf32>, vector<16x8xf32>, vector<16x8xf32> -> vector<16x8xf32>
    %62 = tpu.reciprocal %60 {approx = true} : vector<16x1xf32> -> vector<16x1xf32>
    %63 = vector.broadcast %62 : vector<16x1xf32> to vector<16x8xf32>
    %64 = arith.mulf %61, %63 : vector<16x8xf32>
    %65 = vector.extract_strided_slice %32 {offsets = [0, 16], sizes = [16, 8], strides = [1, 1]} : vector<16x96xf32> to vector<16x8xf32>
    %66 = vector.extract_strided_slice %32 {offsets = [0, 48], sizes = [16, 8], strides = [1, 1]} : vector<16x96xf32> to vector<16x8xf32>
    %67 = vector.extract_strided_slice %32 {offsets = [0, 80], sizes = [16, 8], strides = [1, 1]} : vector<16x96xf32> to vector<16x8xf32>
    %cst_26 = arith.constant dense<0.000000e+00> : vector<16x16xf32>
    %68 = tpu.matmul %65, %66, %cst_26 {dimension_numbers = #tpu.dot_dimension_numbers<[1], [1], [0], [0], [0, 0, 1, 0], [], []>} : vector<16x8xf32>, vector<16x8xf32>, vector<16x16xf32> -> vector<16x16xf32>
    %69 = arith.addf %68, %25 : vector<16x16xf32>
    %cst_27 = arith.constant dense<0xFF800000> : vector<16xf32>
    %70 = vector.multi_reduction <maximumf>, %69, %cst_27 [1] : vector<16x16xf32> to vector<16xf32>
    %71 = vector.shape_cast %70 : vector<16xf32> to vector<16x1xf32>
    %72 = vector.broadcast %71 : vector<16x1xf32> to vector<16x16xf32>
    %73 = arith.subf %69, %72 : vector<16x16xf32>
    %74 = math.exp %73 : vector<16x16xf32>
    %cst_28 = arith.constant dense<0.000000e+00> : vector<16xf32>
    %75 = vector.multi_reduction <add>, %74, %cst_28 [1] : vector<16x16xf32> to vector<16xf32>
    %76 = vector.shape_cast %75 : vector<16xf32> to vector<16x1xf32>
    %cst_29 = arith.constant dense<0.000000e+00> : vector<16x8xf32>
    %77 = tpu.matmul %74, %67, %cst_29 {dimension_numbers = #tpu.dot_dimension_numbers<[1], [0], [0], [1], [0, 0, 1, 1], [], []>} : vector<16x16xf32>, vector<16x8xf32>, vector<16x8xf32> -> vector<16x8xf32>
    %78 = tpu.reciprocal %76 {approx = true} : vector<16x1xf32> -> vector<16x1xf32>
    %79 = vector.broadcast %78 : vector<16x1xf32> to vector<16x8xf32>
    %80 = arith.mulf %77, %79 : vector<16x8xf32>
    %81 = vector.extract_strided_slice %32 {offsets = [0, 24], sizes = [16, 8], strides = [1, 1]} : vector<16x96xf32> to vector<16x8xf32>
    %82 = vector.extract_strided_slice %32 {offsets = [0, 56], sizes = [16, 8], strides = [1, 1]} : vector<16x96xf32> to vector<16x8xf32>
    %83 = vector.extract_strided_slice %32 {offsets = [0, 88], sizes = [16, 8], strides = [1, 1]} : vector<16x96xf32> to vector<16x8xf32>
    %cst_30 = arith.constant dense<0.000000e+00> : vector<16x16xf32>
    %84 = tpu.matmul %81, %82, %cst_30 {dimension_numbers = #tpu.dot_dimension_numbers<[1], [1], [0], [0], [0, 0, 1, 0], [], []>} : vector<16x8xf32>, vector<16x8xf32>, vector<16x16xf32> -> vector<16x16xf32>
    %85 = arith.addf %84, %25 : vector<16x16xf32>
    %cst_31 = arith.constant dense<0xFF800000> : vector<16xf32>
    %86 = vector.multi_reduction <maximumf>, %85, %cst_31 [1] : vector<16x16xf32> to vector<16xf32>
    %87 = vector.shape_cast %86 : vector<16xf32> to vector<16x1xf32>
    %88 = vector.broadcast %87 : vector<16x1xf32> to vector<16x16xf32>
    %89 = arith.subf %85, %88 : vector<16x16xf32>
    %90 = math.exp %89 : vector<16x16xf32>
    %cst_32 = arith.constant dense<0.000000e+00> : vector<16xf32>
    %91 = vector.multi_reduction <add>, %90, %cst_32 [1] : vector<16x16xf32> to vector<16xf32>
    %92 = vector.shape_cast %91 : vector<16xf32> to vector<16x1xf32>
    %cst_33 = arith.constant dense<0.000000e+00> : vector<16x8xf32>
    %93 = tpu.matmul %90, %83, %cst_33 {dimension_numbers = #tpu.dot_dimension_numbers<[1], [0], [0], [1], [0, 0, 1, 1], [], []>} : vector<16x16xf32>, vector<16x8xf32>, vector<16x8xf32> -> vector<16x8xf32>
    %94 = tpu.reciprocal %92 {approx = true} : vector<16x1xf32> -> vector<16x1xf32>
    %95 = vector.broadcast %94 : vector<16x1xf32> to vector<16x8xf32>
    %96 = arith.mulf %93, %95 : vector<16x8xf32>
    %97 = tpu.concatenate %48, %64, %80, %96 in 1 : vector<16x8xf32>, vector<16x8xf32>, vector<16x8xf32>, vector<16x8xf32> -> vector<16x32xf32>
    %c0_34 = arith.constant 0 : index
    %c0_35 = arith.constant 0 : index
    %c0_36 = arith.constant 0 : index
    %98 = vector.load %arg7[%c0_34, %c0_35, %c0_36] : memref<2x32x32xf32, #tpu.memory_space<vmem>>, vector<1x32x32xf32>
    %99 = vector.shape_cast %98 : vector<1x32x32xf32> to vector<32x32xf32>
    %cst_37 = arith.constant dense<0.000000e+00> : vector<16x32xf32>
    %100 = tpu.matmul %97, %99, %cst_37 {dimension_numbers = #tpu.dot_dimension_numbers<[1], [0], [0], [1], [0, 0, 1, 1], [], []>} : vector<16x32xf32>, vector<32x32xf32>, vector<16x32xf32> -> vector<16x32xf32>
    %c0_38 = arith.constant 0 : index
    %c0_39 = arith.constant 0 : index
    %c0_40 = arith.constant 0 : index
    %101 = vector.load %arg8[%c0_38, %c0_39, %c0_40] : memref<2x1x32xf32, #tpu.memory_space<vmem>>, vector<1x1x32xf32>
    %102 = vector.shape_cast %101 : vector<1x1x32xf32> to vector<1x32xf32>
    %103 = vector.broadcast %102 : vector<1x32xf32> to vector<16x32xf32>
    %104 = arith.addf %100, %103 : vector<16x32xf32>
    %105 = arith.addf %104, %24 : vector<16x32xf32>
    %c0_41 = arith.constant 0 : index
    %c0_42 = arith.constant 0 : index
    %c0_43 = arith.constant 0 : index
    %106 = vector.load %arg9[%c0_41, %c0_42, %c0_43] : memref<2x1x32xf32, #tpu.memory_space<vmem>>, vector<1x1x32xf32>
    %107 = vector.shape_cast %106 : vector<1x1x32xf32> to vector<1x32xf32>
    %c0_44 = arith.constant 0 : index
    %c0_45 = arith.constant 0 : index
    %c0_46 = arith.constant 0 : index
    %108 = vector.load %arg10[%c0_44, %c0_45, %c0_46] : memref<2x1x32xf32, #tpu.memory_space<vmem>>, vector<1x1x32xf32>
    %109 = vector.shape_cast %108 : vector<1x1x32xf32> to vector<1x32xf32>
    %cst_47 = arith.constant dense<0.000000e+00> : vector<16xf32>
    %110 = vector.multi_reduction <add>, %105, %cst_47 [1] : vector<16x32xf32> to vector<16xf32>
    %111 = vector.shape_cast %110 : vector<16xf32> to vector<16x1xf32>
    %cst_48 = arith.constant 3.200000e+01 : f32
    %112 = vector.broadcast %cst_48 : f32 to vector<16x1xf32>
    %113 = arith.divf %111, %112 : vector<16x1xf32>
    %114 = vector.broadcast %113 : vector<16x1xf32> to vector<16x32xf32>
    %115 = arith.subf %105, %114 : vector<16x32xf32>
    %116 = arith.mulf %115, %115 : vector<16x32xf32>
    %cst_49 = arith.constant dense<0.000000e+00> : vector<16xf32>
    %117 = vector.multi_reduction <add>, %116, %cst_49 [1] : vector<16x32xf32> to vector<16xf32>
    %118 = vector.shape_cast %117 : vector<16xf32> to vector<16x1xf32>
    %cst_50 = arith.constant 3.200000e+01 : f32
    %119 = vector.broadcast %cst_50 : f32 to vector<16x1xf32>
    %120 = arith.divf %118, %119 : vector<16x1xf32>
    %121 = vector.broadcast %113 : vector<16x1xf32> to vector<16x32xf32>
    %122 = arith.subf %105, %121 : vector<16x32xf32>
    %cst_51 = arith.constant 9.99999996E-13 : f32
    %123 = vector.broadcast %cst_51 : f32 to vector<16x1xf32>
    %124 = arith.addf %120, %123 : vector<16x1xf32>
    %125 = math.rsqrt %124 : vector<16x1xf32>
    %126 = vector.broadcast %125 : vector<16x1xf32> to vector<16x32xf32>
    %127 = arith.mulf %122, %126 : vector<16x32xf32>
    %128 = vector.broadcast %107 : vector<1x32xf32> to vector<16x32xf32>
    %129 = arith.mulf %127, %128 : vector<16x32xf32>
    %130 = vector.broadcast %109 : vector<1x32xf32> to vector<16x32xf32>
    %131 = arith.addf %129, %130 : vector<16x32xf32>
    %c0_52 = arith.constant 0 : index
    %c0_53 = arith.constant 0 : index
    %c0_54 = arith.constant 0 : index
    %132 = vector.load %arg11[%c0_52, %c0_53, %c0_54] : memref<2x32x64xf32, #tpu.memory_space<vmem>>, vector<1x32x64xf32>
    %133 = vector.shape_cast %132 : vector<1x32x64xf32> to vector<32x64xf32>
    %cst_55 = arith.constant dense<0.000000e+00> : vector<16x64xf32>
    %134 = tpu.matmul %131, %133, %cst_55 {dimension_numbers = #tpu.dot_dimension_numbers<[1], [0], [0], [1], [0, 0, 1, 1], [], []>} : vector<16x32xf32>, vector<32x64xf32>, vector<16x64xf32> -> vector<16x64xf32>
    %c0_56 = arith.constant 0 : index
    %c0_57 = arith.constant 0 : index
    %c0_58 = arith.constant 0 : index
    %135 = vector.load %arg12[%c0_56, %c0_57, %c0_58] : memref<2x1x64xf32, #tpu.memory_space<vmem>>, vector<1x1x64xf32>
    %136 = vector.shape_cast %135 : vector<1x1x64xf32> to vector<1x64xf32>
    %137 = vector.broadcast %136 : vector<1x64xf32> to vector<16x64xf32>
    %138 = arith.addf %134, %137 : vector<16x64xf32>
    %139 = arith.mulf %138, %138 : vector<16x64xf32>
    %140 = arith.mulf %138, %139 : vector<16x64xf32>
    %cst_59 = arith.constant 4.471500e-02 : f32
    %141 = vector.broadcast %cst_59 : f32 to vector<16x64xf32>
    %142 = arith.mulf %141, %140 : vector<16x64xf32>
    %143 = arith.addf %138, %142 : vector<16x64xf32>
    %cst_60 = arith.constant 0.797884583 : f32
    %144 = vector.broadcast %cst_60 : f32 to vector<16x64xf32>
    %145 = arith.mulf %144, %143 : vector<16x64xf32>
    %146 = math.tanh %145 : vector<16x64xf32>
    %cst_61 = arith.constant 1.000000e+00 : f32
    %147 = vector.broadcast %cst_61 : f32 to vector<16x64xf32>
    %148 = arith.addf %147, %146 : vector<16x64xf32>
    %cst_62 = arith.constant 5.000000e-01 : f32
    %149 = vector.broadcast %cst_62 : f32 to vector<16x64xf32>
    %150 = arith.mulf %149, %148 : vector<16x64xf32>
    %151 = arith.mulf %138, %150 : vector<16x64xf32>
    %c0_63 = arith.constant 0 : index
    %c0_64 = arith.constant 0 : index
    %c0_65 = arith.constant 0 : index
    %152 = vector.load %arg13[%c0_63, %c0_64, %c0_65] : memref<2x64x32xf32, #tpu.memory_space<vmem>>, vector<1x64x32xf32>
    %153 = vector.shape_cast %152 : vector<1x64x32xf32> to vector<64x32xf32>
    %cst_66 = arith.constant dense<0.000000e+00> : vector<16x32xf32>
    %154 = tpu.matmul %151, %153, %cst_66 {dimension_numbers = #tpu.dot_dimension_numbers<[1], [0], [0], [1], [0, 0, 1, 1], [], []>} : vector<16x64xf32>, vector<64x32xf32>, vector<16x32xf32> -> vector<16x32xf32>
    %c0_67 = arith.constant 0 : index
    %c0_68 = arith.constant 0 : index
    %c0_69 = arith.constant 0 : index
    %155 = vector.load %arg14[%c0_67, %c0_68, %c0_69] : memref<2x1x32xf32, #tpu.memory_space<vmem>>, vector<1x1x32xf32>
    %156 = vector.shape_cast %155 : vector<1x1x32xf32> to vector<1x32xf32>
    %157 = vector.broadcast %156 : vector<1x32xf32> to vector<16x32xf32>
    %158 = arith.addf %154, %157 : vector<16x32xf32>
    %159 = arith.addf %158, %131 : vector<16x32xf32>
    %c0_70 = arith.constant 0 : index
    %c0_71 = arith.constant 0 : index
    %c0_72 = arith.constant 0 : index
    %160 = vector.load %arg15[%c0_70, %c0_71, %c0_72] : memref<2x1x32xf32, #tpu.memory_space<vmem>>, vector<1x1x32xf32>
    %161 = vector.shape_cast %160 : vector<1x1x32xf32> to vector<1x32xf32>
    %c0_73 = arith.constant 0 : index
    %c0_74 = arith.constant 0 : index
    %c0_75 = arith.constant 0 : index
    %162 = vector.load %arg16[%c0_73, %c0_74, %c0_75] : memref<2x1x32xf32, #tpu.memory_space<vmem>>, vector<1x1x32xf32>
    %163 = vector.shape_cast %162 : vector<1x1x32xf32> to vector<1x32xf32>
    %cst_76 = arith.constant dense<0.000000e+00> : vector<16xf32>
    %164 = vector.multi_reduction <add>, %159, %cst_76 [1] : vector<16x32xf32> to vector<16xf32>
    %165 = vector.shape_cast %164 : vector<16xf32> to vector<16x1xf32>
    %cst_77 = arith.constant 3.200000e+01 : f32
    %166 = vector.broadcast %cst_77 : f32 to vector<16x1xf32>
    %167 = arith.divf %165, %166 : vector<16x1xf32>
    %168 = vector.broadcast %167 : vector<16x1xf32> to vector<16x32xf32>
    %169 = arith.subf %159, %168 : vector<16x32xf32>
    %170 = arith.mulf %169, %169 : vector<16x32xf32>
    %cst_78 = arith.constant dense<0.000000e+00> : vector<16xf32>
    %171 = vector.multi_reduction <add>, %170, %cst_78 [1] : vector<16x32xf32> to vector<16xf32>
    %172 = vector.shape_cast %171 : vector<16xf32> to vector<16x1xf32>
    %cst_79 = arith.constant 3.200000e+01 : f32
    %173 = vector.broadcast %cst_79 : f32 to vector<16x1xf32>
    %174 = arith.divf %172, %173 : vector<16x1xf32>
    %175 = vector.broadcast %167 : vector<16x1xf32> to vector<16x32xf32>
    %176 = arith.subf %159, %175 : vector<16x32xf32>
    %cst_80 = arith.constant 9.99999996E-13 : f32
    %177 = vector.broadcast %cst_80 : f32 to vector<16x1xf32>
    %178 = arith.addf %174, %177 : vector<16x1xf32>
    %179 = math.rsqrt %178 : vector<16x1xf32>
    %180 = vector.broadcast %179 : vector<16x1xf32> to vector<16x32xf32>
    %181 = arith.mulf %176, %180 : vector<16x32xf32>
    %182 = vector.broadcast %161 : vector<1x32xf32> to vector<16x32xf32>
    %183 = arith.mulf %181, %182 : vector<16x32xf32>
    %184 = vector.broadcast %163 : vector<1x32xf32> to vector<16x32xf32>
    %185 = arith.addf %183, %184 : vector<16x32xf32>
    %c1 = arith.constant 1 : index
    %c0_81 = arith.constant 0 : index
    %c0_82 = arith.constant 0 : index
    %186 = vector.load %arg5[%c1, %c0_81, %c0_82] : memref<2x32x96xf32, #tpu.memory_space<vmem>>, vector<1x32x96xf32>
    %187 = vector.shape_cast %186 : vector<1x32x96xf32> to vector<32x96xf32>
    %cst_83 = arith.constant dense<0.000000e+00> : vector<16x96xf32>
    %188 = tpu.matmul %185, %187, %cst_83 {dimension_numbers = #tpu.dot_dimension_numbers<[1], [0], [0], [1], [0, 0, 1, 1], [], []>} : vector<16x32xf32>, vector<32x96xf32>, vector<16x96xf32> -> vector<16x96xf32>
    %c1_84 = arith.constant 1 : index
    %c0_85 = arith.constant 0 : index
    %c0_86 = arith.constant 0 : index
    %189 = vector.load %arg6[%c1_84, %c0_85, %c0_86] : memref<2x1x96xf32, #tpu.memory_space<vmem>>, vector<1x1x96xf32>
    %190 = vector.shape_cast %189 : vector<1x1x96xf32> to vector<1x96xf32>
    %191 = vector.broadcast %190 : vector<1x96xf32> to vector<16x96xf32>
    %192 = arith.addf %188, %191 : vector<16x96xf32>
    %193 = vector.extract_strided_slice %192 {offsets = [0, 0], sizes = [16, 8], strides = [1, 1]} : vector<16x96xf32> to vector<16x8xf32>
    %194 = vector.extract_strided_slice %192 {offsets = [0, 32], sizes = [16, 8], strides = [1, 1]} : vector<16x96xf32> to vector<16x8xf32>
    %195 = vector.extract_strided_slice %192 {offsets = [0, 64], sizes = [16, 8], strides = [1, 1]} : vector<16x96xf32> to vector<16x8xf32>
    %cst_87 = arith.constant dense<0.000000e+00> : vector<16x16xf32>
    %196 = tpu.matmul %193, %194, %cst_87 {dimension_numbers = #tpu.dot_dimension_numbers<[1], [1], [0], [0], [0, 0, 1, 0], [], []>} : vector<16x8xf32>, vector<16x8xf32>, vector<16x16xf32> -> vector<16x16xf32>
    %197 = arith.addf %196, %25 : vector<16x16xf32>
    %cst_88 = arith.constant dense<0xFF800000> : vector<16xf32>
    %198 = vector.multi_reduction <maximumf>, %197, %cst_88 [1] : vector<16x16xf32> to vector<16xf32>
    %199 = vector.shape_cast %198 : vector<16xf32> to vector<16x1xf32>
    %200 = vector.broadcast %199 : vector<16x1xf32> to vector<16x16xf32>
    %201 = arith.subf %197, %200 : vector<16x16xf32>
    %202 = math.exp %201 : vector<16x16xf32>
    %cst_89 = arith.constant dense<0.000000e+00> : vector<16xf32>
    %203 = vector.multi_reduction <add>, %202, %cst_89 [1] : vector<16x16xf32> to vector<16xf32>
    %204 = vector.shape_cast %203 : vector<16xf32> to vector<16x1xf32>
    %cst_90 = arith.constant dense<0.000000e+00> : vector<16x8xf32>
    %205 = tpu.matmul %202, %195, %cst_90 {dimension_numbers = #tpu.dot_dimension_numbers<[1], [0], [0], [1], [0, 0, 1, 1], [], []>} : vector<16x16xf32>, vector<16x8xf32>, vector<16x8xf32> -> vector<16x8xf32>
    %206 = tpu.reciprocal %204 {approx = true} : vector<16x1xf32> -> vector<16x1xf32>
    %207 = vector.broadcast %206 : vector<16x1xf32> to vector<16x8xf32>
    %208 = arith.mulf %205, %207 : vector<16x8xf32>
    %209 = vector.extract_strided_slice %192 {offsets = [0, 8], sizes = [16, 8], strides = [1, 1]} : vector<16x96xf32> to vector<16x8xf32>
    %210 = vector.extract_strided_slice %192 {offsets = [0, 40], sizes = [16, 8], strides = [1, 1]} : vector<16x96xf32> to vector<16x8xf32>
    %211 = vector.extract_strided_slice %192 {offsets = [0, 72], sizes = [16, 8], strides = [1, 1]} : vector<16x96xf32> to vector<16x8xf32>
    %cst_91 = arith.constant dense<0.000000e+00> : vector<16x16xf32>
    %212 = tpu.matmul %209, %210, %cst_91 {dimension_numbers = #tpu.dot_dimension_numbers<[1], [1], [0], [0], [0, 0, 1, 0], [], []>} : vector<16x8xf32>, vector<16x8xf32>, vector<16x16xf32> -> vector<16x16xf32>
    %213 = arith.addf %212, %25 : vector<16x16xf32>
    %cst_92 = arith.constant dense<0xFF800000> : vector<16xf32>
    %214 = vector.multi_reduction <maximumf>, %213, %cst_92 [1] : vector<16x16xf32> to vector<16xf32>
    %215 = vector.shape_cast %214 : vector<16xf32> to vector<16x1xf32>
    %216 = vector.broadcast %215 : vector<16x1xf32> to vector<16x16xf32>
    %217 = arith.subf %213, %216 : vector<16x16xf32>
    %218 = math.exp %217 : vector<16x16xf32>
    %cst_93 = arith.constant dense<0.000000e+00> : vector<16xf32>
    %219 = vector.multi_reduction <add>, %218, %cst_93 [1] : vector<16x16xf32> to vector<16xf32>
    %220 = vector.shape_cast %219 : vector<16xf32> to vector<16x1xf32>
    %cst_94 = arith.constant dense<0.000000e+00> : vector<16x8xf32>
    %221 = tpu.matmul %218, %211, %cst_94 {dimension_numbers = #tpu.dot_dimension_numbers<[1], [0], [0], [1], [0, 0, 1, 1], [], []>} : vector<16x16xf32>, vector<16x8xf32>, vector<16x8xf32> -> vector<16x8xf32>
    %222 = tpu.reciprocal %220 {approx = true} : vector<16x1xf32> -> vector<16x1xf32>
    %223 = vector.broadcast %222 : vector<16x1xf32> to vector<16x8xf32>
    %224 = arith.mulf %221, %223 : vector<16x8xf32>
    %225 = vector.extract_strided_slice %192 {offsets = [0, 16], sizes = [16, 8], strides = [1, 1]} : vector<16x96xf32> to vector<16x8xf32>
    %226 = vector.extract_strided_slice %192 {offsets = [0, 48], sizes = [16, 8], strides = [1, 1]} : vector<16x96xf32> to vector<16x8xf32>
    %227 = vector.extract_strided_slice %192 {offsets = [0, 80], sizes = [16, 8], strides = [1, 1]} : vector<16x96xf32> to vector<16x8xf32>
    %cst_95 = arith.constant dense<0.000000e+00> : vector<16x16xf32>
    %228 = tpu.matmul %225, %226, %cst_95 {dimension_numbers = #tpu.dot_dimension_numbers<[1], [1], [0], [0], [0, 0, 1, 0], [], []>} : vector<16x8xf32>, vector<16x8xf32>, vector<16x16xf32> -> vector<16x16xf32>
    %229 = arith.addf %228, %25 : vector<16x16xf32>
    %cst_96 = arith.constant dense<0xFF800000> : vector<16xf32>
    %230 = vector.multi_reduction <maximumf>, %229, %cst_96 [1] : vector<16x16xf32> to vector<16xf32>
    %231 = vector.shape_cast %230 : vector<16xf32> to vector<16x1xf32>
    %232 = vector.broadcast %231 : vector<16x1xf32> to vector<16x16xf32>
    %233 = arith.subf %229, %232 : vector<16x16xf32>
    %234 = math.exp %233 : vector<16x16xf32>
    %cst_97 = arith.constant dense<0.000000e+00> : vector<16xf32>
    %235 = vector.multi_reduction <add>, %234, %cst_97 [1] : vector<16x16xf32> to vector<16xf32>
    %236 = vector.shape_cast %235 : vector<16xf32> to vector<16x1xf32>
    %cst_98 = arith.constant dense<0.000000e+00> : vector<16x8xf32>
    %237 = tpu.matmul %234, %227, %cst_98 {dimension_numbers = #tpu.dot_dimension_numbers<[1], [0], [0], [1], [0, 0, 1, 1], [], []>} : vector<16x16xf32>, vector<16x8xf32>, vector<16x8xf32> -> vector<16x8xf32>
    %238 = tpu.reciprocal %236 {approx = true} : vector<16x1xf32> -> vector<16x1xf32>
    %239 = vector.broadcast %238 : vector<16x1xf32> to vector<16x8xf32>
    %240 = arith.mulf %237, %239 : vector<16x8xf32>
    %241 = vector.extract_strided_slice %192 {offsets = [0, 24], sizes = [16, 8], strides = [1, 1]} : vector<16x96xf32> to vector<16x8xf32>
    %242 = vector.extract_strided_slice %192 {offsets = [0, 56], sizes = [16, 8], strides = [1, 1]} : vector<16x96xf32> to vector<16x8xf32>
    %243 = vector.extract_strided_slice %192 {offsets = [0, 88], sizes = [16, 8], strides = [1, 1]} : vector<16x96xf32> to vector<16x8xf32>
    %cst_99 = arith.constant dense<0.000000e+00> : vector<16x16xf32>
    %244 = tpu.matmul %241, %242, %cst_99 {dimension_numbers = #tpu.dot_dimension_numbers<[1], [1], [0], [0], [0, 0, 1, 0], [], []>} : vector<16x8xf32>, vector<16x8xf32>, vector<16x16xf32> -> vector<16x16xf32>
    %245 = arith.addf %244, %25 : vector<16x16xf32>
    %cst_100 = arith.constant dense<0xFF800000> : vector<16xf32>
    %246 = vector.multi_reduction <maximumf>, %245, %cst_100 [1] : vector<16x16xf32> to vector<16xf32>
    %247 = vector.shape_cast %246 : vector<16xf32> to vector<16x1xf32>
    %248 = vector.broadcast %247 : vector<16x1xf32> to vector<16x16xf32>
    %249 = arith.subf %245, %248 : vector<16x16xf32>
    %250 = math.exp %249 : vector<16x16xf32>
    %cst_101 = arith.constant dense<0.000000e+00> : vector<16xf32>
    %251 = vector.multi_reduction <add>, %250, %cst_101 [1] : vector<16x16xf32> to vector<16xf32>
    %252 = vector.shape_cast %251 : vector<16xf32> to vector<16x1xf32>
    %cst_102 = arith.constant dense<0.000000e+00> : vector<16x8xf32>
    %253 = tpu.matmul %250, %243, %cst_102 {dimension_numbers = #tpu.dot_dimension_numbers<[1], [0], [0], [1], [0, 0, 1, 1], [], []>} : vector<16x16xf32>, vector<16x8xf32>, vector<16x8xf32> -> vector<16x8xf32>
    %254 = tpu.reciprocal %252 {approx = true} : vector<16x1xf32> -> vector<16x1xf32>
    %255 = vector.broadcast %254 : vector<16x1xf32> to vector<16x8xf32>
    %256 = arith.mulf %253, %255 : vector<16x8xf32>
    %257 = tpu.concatenate %208, %224, %240, %256 in 1 : vector<16x8xf32>, vector<16x8xf32>, vector<16x8xf32>, vector<16x8xf32> -> vector<16x32xf32>
    %c1_103 = arith.constant 1 : index
    %c0_104 = arith.constant 0 : index
    %c0_105 = arith.constant 0 : index
    %258 = vector.load %arg7[%c1_103, %c0_104, %c0_105] : memref<2x32x32xf32, #tpu.memory_space<vmem>>, vector<1x32x32xf32>
    %259 = vector.shape_cast %258 : vector<1x32x32xf32> to vector<32x32xf32>
    %cst_106 = arith.constant dense<0.000000e+00> : vector<16x32xf32>
    %260 = tpu.matmul %257, %259, %cst_106 {dimension_numbers = #tpu.dot_dimension_numbers<[1], [0], [0], [1], [0, 0, 1, 1], [], []>} : vector<16x32xf32>, vector<32x32xf32>, vector<16x32xf32> -> vector<16x32xf32>
    %c1_107 = arith.constant 1 : index
    %c0_108 = arith.constant 0 : index
    %c0_109 = arith.constant 0 : index
    %261 = vector.load %arg8[%c1_107, %c0_108, %c0_109] : memref<2x1x32xf32, #tpu.memory_space<vmem>>, vector<1x1x32xf32>
    %262 = vector.shape_cast %261 : vector<1x1x32xf32> to vector<1x32xf32>
    %263 = vector.broadcast %262 : vector<1x32xf32> to vector<16x32xf32>
    %264 = arith.addf %260, %263 : vector<16x32xf32>
    %265 = arith.addf %264, %185 : vector<16x32xf32>
    %c1_110 = arith.constant 1 : index
    %c0_111 = arith.constant 0 : index
    %c0_112 = arith.constant 0 : index
    %266 = vector.load %arg9[%c1_110, %c0_111, %c0_112] : memref<2x1x32xf32, #tpu.memory_space<vmem>>, vector<1x1x32xf32>
    %267 = vector.shape_cast %266 : vector<1x1x32xf32> to vector<1x32xf32>
    %c1_113 = arith.constant 1 : index
    %c0_114 = arith.constant 0 : index
    %c0_115 = arith.constant 0 : index
    %268 = vector.load %arg10[%c1_113, %c0_114, %c0_115] : memref<2x1x32xf32, #tpu.memory_space<vmem>>, vector<1x1x32xf32>
    %269 = vector.shape_cast %268 : vector<1x1x32xf32> to vector<1x32xf32>
    %cst_116 = arith.constant dense<0.000000e+00> : vector<16xf32>
    %270 = vector.multi_reduction <add>, %265, %cst_116 [1] : vector<16x32xf32> to vector<16xf32>
    %271 = vector.shape_cast %270 : vector<16xf32> to vector<16x1xf32>
    %cst_117 = arith.constant 3.200000e+01 : f32
    %272 = vector.broadcast %cst_117 : f32 to vector<16x1xf32>
    %273 = arith.divf %271, %272 : vector<16x1xf32>
    %274 = vector.broadcast %273 : vector<16x1xf32> to vector<16x32xf32>
    %275 = arith.subf %265, %274 : vector<16x32xf32>
    %276 = arith.mulf %275, %275 : vector<16x32xf32>
    %cst_118 = arith.constant dense<0.000000e+00> : vector<16xf32>
    %277 = vector.multi_reduction <add>, %276, %cst_118 [1] : vector<16x32xf32> to vector<16xf32>
    %278 = vector.shape_cast %277 : vector<16xf32> to vector<16x1xf32>
    %cst_119 = arith.constant 3.200000e+01 : f32
    %279 = vector.broadcast %cst_119 : f32 to vector<16x1xf32>
    %280 = arith.divf %278, %279 : vector<16x1xf32>
    %281 = vector.broadcast %273 : vector<16x1xf32> to vector<16x32xf32>
    %282 = arith.subf %265, %281 : vector<16x32xf32>
    %cst_120 = arith.constant 9.99999996E-13 : f32
    %283 = vector.broadcast %cst_120 : f32 to vector<16x1xf32>
    %284 = arith.addf %280, %283 : vector<16x1xf32>
    %285 = math.rsqrt %284 : vector<16x1xf32>
    %286 = vector.broadcast %285 : vector<16x1xf32> to vector<16x32xf32>
    %287 = arith.mulf %282, %286 : vector<16x32xf32>
    %288 = vector.broadcast %267 : vector<1x32xf32> to vector<16x32xf32>
    %289 = arith.mulf %287, %288 : vector<16x32xf32>
    %290 = vector.broadcast %269 : vector<1x32xf32> to vector<16x32xf32>
    %291 = arith.addf %289, %290 : vector<16x32xf32>
    %c1_121 = arith.constant 1 : index
    %c0_122 = arith.constant 0 : index
    %c0_123 = arith.constant 0 : index
    %292 = vector.load %arg11[%c1_121, %c0_122, %c0_123] : memref<2x32x64xf32, #tpu.memory_space<vmem>>, vector<1x32x64xf32>
    %293 = vector.shape_cast %292 : vector<1x32x64xf32> to vector<32x64xf32>
    %cst_124 = arith.constant dense<0.000000e+00> : vector<16x64xf32>
    %294 = tpu.matmul %291, %293, %cst_124 {dimension_numbers = #tpu.dot_dimension_numbers<[1], [0], [0], [1], [0, 0, 1, 1], [], []>} : vector<16x32xf32>, vector<32x64xf32>, vector<16x64xf32> -> vector<16x64xf32>
    %c1_125 = arith.constant 1 : index
    %c0_126 = arith.constant 0 : index
    %c0_127 = arith.constant 0 : index
    %295 = vector.load %arg12[%c1_125, %c0_126, %c0_127] : memref<2x1x64xf32, #tpu.memory_space<vmem>>, vector<1x1x64xf32>
    %296 = vector.shape_cast %295 : vector<1x1x64xf32> to vector<1x64xf32>
    %297 = vector.broadcast %296 : vector<1x64xf32> to vector<16x64xf32>
    %298 = arith.addf %294, %297 : vector<16x64xf32>
    %299 = arith.mulf %298, %298 : vector<16x64xf32>
    %300 = arith.mulf %298, %299 : vector<16x64xf32>
    %cst_128 = arith.constant 4.471500e-02 : f32
    %301 = vector.broadcast %cst_128 : f32 to vector<16x64xf32>
    %302 = arith.mulf %301, %300 : vector<16x64xf32>
    %303 = arith.addf %298, %302 : vector<16x64xf32>
    %cst_129 = arith.constant 0.797884583 : f32
    %304 = vector.broadcast %cst_129 : f32 to vector<16x64xf32>
    %305 = arith.mulf %304, %303 : vector<16x64xf32>
    %306 = math.tanh %305 : vector<16x64xf32>
    %cst_130 = arith.constant 1.000000e+00 : f32
    %307 = vector.broadcast %cst_130 : f32 to vector<16x64xf32>
    %308 = arith.addf %307, %306 : vector<16x64xf32>
    %cst_131 = arith.constant 5.000000e-01 : f32
    %309 = vector.broadcast %cst_131 : f32 to vector<16x64xf32>
    %310 = arith.mulf %309, %308 : vector<16x64xf32>
    %311 = arith.mulf %298, %310 : vector<16x64xf32>
    %c1_132 = arith.constant 1 : index
    %c0_133 = arith.constant 0 : index
    %c0_134 = arith.constant 0 : index
    %312 = vector.load %arg13[%c1_132, %c0_133, %c0_134] : memref<2x64x32xf32, #tpu.memory_space<vmem>>, vector<1x64x32xf32>
    %313 = vector.shape_cast %312 : vector<1x64x32xf32> to vector<64x32xf32>
    %cst_135 = arith.constant dense<0.000000e+00> : vector<16x32xf32>
    %314 = tpu.matmul %311, %313, %cst_135 {dimension_numbers = #tpu.dot_dimension_numbers<[1], [0], [0], [1], [0, 0, 1, 1], [], []>} : vector<16x64xf32>, vector<64x32xf32>, vector<16x32xf32> -> vector<16x32xf32>
    %c1_136 = arith.constant 1 : index
    %c0_137 = arith.constant 0 : index
    %c0_138 = arith.constant 0 : index
    %315 = vector.load %arg14[%c1_136, %c0_137, %c0_138] : memref<2x1x32xf32, #tpu.memory_space<vmem>>, vector<1x1x32xf32>
    %316 = vector.shape_cast %315 : vector<1x1x32xf32> to vector<1x32xf32>
    %317 = vector.broadcast %316 : vector<1x32xf32> to vector<16x32xf32>
    %318 = arith.addf %314, %317 : vector<16x32xf32>
    %319 = arith.addf %318, %291 : vector<16x32xf32>
    %c1_139 = arith.constant 1 : index
    %c0_140 = arith.constant 0 : index
    %c0_141 = arith.constant 0 : index
    %320 = vector.load %arg15[%c1_139, %c0_140, %c0_141] : memref<2x1x32xf32, #tpu.memory_space<vmem>>, vector<1x1x32xf32>
    %321 = vector.shape_cast %320 : vector<1x1x32xf32> to vector<1x32xf32>
    %c1_142 = arith.constant 1 : index
    %c0_143 = arith.constant 0 : index
    %c0_144 = arith.constant 0 : index
    %322 = vector.load %arg16[%c1_142, %c0_143, %c0_144] : memref<2x1x32xf32, #tpu.memory_space<vmem>>, vector<1x1x32xf32>
    %323 = vector.shape_cast %322 : vector<1x1x32xf32> to vector<1x32xf32>
    %cst_145 = arith.constant dense<0.000000e+00> : vector<16xf32>
    %324 = vector.multi_reduction <add>, %319, %cst_145 [1] : vector<16x32xf32> to vector<16xf32>
    %325 = vector.shape_cast %324 : vector<16xf32> to vector<16x1xf32>
    %cst_146 = arith.constant 3.200000e+01 : f32
    %326 = vector.broadcast %cst_146 : f32 to vector<16x1xf32>
    %327 = arith.divf %325, %326 : vector<16x1xf32>
    %328 = vector.broadcast %327 : vector<16x1xf32> to vector<16x32xf32>
    %329 = arith.subf %319, %328 : vector<16x32xf32>
    %330 = arith.mulf %329, %329 : vector<16x32xf32>
    %cst_147 = arith.constant dense<0.000000e+00> : vector<16xf32>
    %331 = vector.multi_reduction <add>, %330, %cst_147 [1] : vector<16x32xf32> to vector<16xf32>
    %332 = vector.shape_cast %331 : vector<16xf32> to vector<16x1xf32>
    %cst_148 = arith.constant 3.200000e+01 : f32
    %333 = vector.broadcast %cst_148 : f32 to vector<16x1xf32>
    %334 = arith.divf %332, %333 : vector<16x1xf32>
    %335 = vector.broadcast %327 : vector<16x1xf32> to vector<16x32xf32>
    %336 = arith.subf %319, %335 : vector<16x32xf32>
    %cst_149 = arith.constant 9.99999996E-13 : f32
    %337 = vector.broadcast %cst_149 : f32 to vector<16x1xf32>
    %338 = arith.addf %334, %337 : vector<16x1xf32>
    %339 = math.rsqrt %338 : vector<16x1xf32>
    %340 = vector.broadcast %339 : vector<16x1xf32> to vector<16x32xf32>
    %341 = arith.mulf %336, %340 : vector<16x32xf32>
    %342 = vector.broadcast %321 : vector<1x32xf32> to vector<16x32xf32>
    %343 = arith.mulf %341, %342 : vector<16x32xf32>
    %344 = vector.broadcast %323 : vector<1x32xf32> to vector<16x32xf32>
    %345 = arith.addf %343, %344 : vector<16x32xf32>
    %c0_150 = arith.constant 0 : index
    %c0_151 = arith.constant 0 : index
    %346 = vector.load %arg19[%c0_150, %c0_151] : memref<16x32xf32, #tpu.memory_space<vmem>>, vector<16x32xf32>
    tpu.vector_store %arg19[%c0_150, %c0_151], %345 {strides = array<i32>} : memref<16x32xf32, #tpu.memory_space<vmem>>, vector<16x32xf32>,
    %347 = vector.extract_strided_slice %345 {offsets = [0, 0], sizes = [1, 32], strides = [1, 1]} : vector<16x32xf32> to vector<1x32xf32>
    %348 = vector.extract_strided_slice %345 {offsets = [8, 0], sizes = [1, 32], strides = [1, 1]} : vector<16x32xf32> to vector<1x32xf32>
    %349 = tpu.concatenate %347, %348 in 0 : vector<1x32xf32>, vector<1x32xf32> -> vector<2x32xf32>
    %c0_152 = arith.constant 0 : index
    %c0_153 = arith.constant 0 : index
    %350 = vector.load %arg17[%c0_152, %c0_153] : memref<32x32xf32, #tpu.memory_space<vmem>>, vector<32x32xf32>
    %cst_154 = arith.constant dense<0.000000e+00> : vector<2x32xf32>
    %351 = tpu.matmul %349, %350, %cst_154 {dimension_numbers = #tpu.dot_dimension_numbers<[1], [0], [0], [1], [0, 0, 1, 1], [], []>} : vector<2x32xf32>, vector<32x32xf32>, vector<2x32xf32> -> vector<2x32xf32>
    %c0_155 = arith.constant 0 : index
    %c0_156 = arith.constant 0 : index
    %352 = vector.load %arg18[%c0_155, %c0_156] : memref<1x32xf32, #tpu.memory_space<vmem>>, vector<1x32xf32>
    %353 = vector.broadcast %352 : vector<1x32xf32> to vector<2x32xf32>
    %354 = arith.addf %351, %353 : vector<2x32xf32>
    %355 = math.tanh %354 : vector<2x32xf32>
    %c0_157 = arith.constant 0 : index
    %c0_158 = arith.constant 0 : index
    %356 = vector.load %arg20[%c0_157, %c0_158] : memref<2x32xf32, #tpu.memory_space<vmem>>, vector<2x32xf32>
    tpu.vector_store %arg20[%c0_157, %c0_158], %355 {strides = array<i32>} : memref<2x32xf32, #tpu.memory_space<vmem>>, vector<2x32xf32>,
    return
  }
  func.func @transform_0(%arg0: i32) -> (i32, i32) {
    %c0_i32 = arith.constant 0 : i32
    %c0_i32_0 = arith.constant 0 : i32
    %c0_i32_1 = arith.constant 0 : i32
    return %c0_i32, %c0_i32_0 : i32, i32
  }
  func.func @transform_1(%arg0: i32) -> (i32, i32) {
    %c0_i32 = arith.constant 0 : i32
    %c0_i32_0 = arith.constant 0 : i32
    %c0_i32_1 = arith.constant 0 : i32
    return %c0_i32, %c0_i32_0 : i32, i32
  }
  func.func @transform_2(%arg0: i32) -> (i32, i32) {
    %c0_i32 = arith.constant 0 : i32
    %c0_i32_0 = arith.constant 0 : i32
    %c0_i32_1 = arith.constant 0 : i32
    return %c0_i32, %c0_i32_0 : i32, i32
  }
  func.func @transform_3(%arg0: i32) -> (i32, i32) {
    %c0_i32 = arith.constant 0 : i32
    %c0_i32_0 = arith.constant 0 : i32
    %c0_i32_1 = arith.constant 0 : i32
    return %c0_i32, %c0_i32_0 : i32, i32
  }
  func.func @transform_4(%arg0: i32) -> (i32, i32, i32) {
    %c0_i32 = arith.constant 0 : i32
    %c0_i32_0 = arith.constant 0 : i32
    %c0_i32_1 = arith.constant 0 : i32
    %c0_i32_2 = arith.constant 0 : i32
    return %c0_i32, %c0_i32_0, %c0_i32_1 : i32, i32, i32
  }
  func.func @transform_5(%arg0: i32) -> (i32, i32, i32) {
    %c0_i32 = arith.constant 0 : i32
    %c0_i32_0 = arith.constant 0 : i32
    %c0_i32_1 = arith.constant 0 : i32
    %c0_i32_2 = arith.constant 0 : i32
    return %c0_i32, %c0_i32_0, %c0_i32_1 : i32, i32, i32
  }
  func.func @transform_6(%arg0: i32) -> (i32, i32, i32) {
    %c0_i32 = arith.constant 0 : i32
    %c0_i32_0 = arith.constant 0 : i32
    %c0_i32_1 = arith.constant 0 : i32
    %c0_i32_2 = arith.constant 0 : i32
    return %c0_i32, %c0_i32_0, %c0_i32_1 : i32, i32, i32
  }
  func.func @transform_7(%arg0: i32) -> (i32, i32, i32) {
    %c0_i32 = arith.constant 0 : i32
    %c0_i32_0 = arith.constant 0 : i32
    %c0_i32_1 = arith.constant 0 : i32
    %c0_i32_2 = arith.constant 0 : i32
    return %c0_i32, %c0_i32_0, %c0_i32_1 : i32, i32, i32
  }
  func.func @transform_8(%arg0: i32) -> (i32, i32, i32) {
    %c0_i32 = arith.constant 0 : i32
    %c0_i32_0 = arith.constant 0 : i32
    %c0_i32_1 = arith.constant 0 : i32
    %c0_i32_2 = arith.constant 0 : i32
    return %c0_i32, %c0_i32_0, %c0_i32_1 : i32, i32, i32
  }
  func.func @transform_9(%arg0: i32) -> (i32, i32, i32) {
    %c0_i32 = arith.constant 0 : i32
    %c0_i32_0 = arith.constant 0 : i32
    %c0_i32_1 = arith.constant 0 : i32
    %c0_i32_2 = arith.constant 0 : i32
    return %c0_i32, %c0_i32_0, %c0_i32_1 : i32, i32, i32
  }
  func.func @transform_10(%arg0: i32) -> (i32, i32, i32) {
    %c0_i32 = arith.constant 0 : i32
    %c0_i32_0 = arith.constant 0 : i32
    %c0_i32_1 = arith.constant 0 : i32
    %c0_i32_2 = arith.constant 0 : i32
    return %c0_i32, %c0_i32_0, %c0_i32_1 : i32, i32, i32
  }
  func.func @transform_11(%arg0: i32) -> (i32, i32, i32) {
    %c0_i32 = arith.constant 0 : i32
    %c0_i32_0 = arith.constant 0 : i32
    %c0_i32_1 = arith.constant 0 : i32
    %c0_i32_2 = arith.constant 0 : i32
    return %c0_i32, %c0_i32_0, %c0_i32_1 : i32, i32, i32
  }
  func.func @transform_12(%arg0: i32) -> (i32, i32, i32) {
    %c0_i32 = arith.constant 0 : i32
    %c0_i32_0 = arith.constant 0 : i32
    %c0_i32_1 = arith.constant 0 : i32
    %c0_i32_2 = arith.constant 0 : i32
    return %c0_i32, %c0_i32_0, %c0_i32_1 : i32, i32, i32
  }
  func.func @transform_13(%arg0: i32) -> (i32, i32, i32) {
    %c0_i32 = arith.constant 0 : i32
    %c0_i32_0 = arith.constant 0 : i32
    %c0_i32_1 = arith.constant 0 : i32
    %c0_i32_2 = arith.constant 0 : i32
    return %c0_i32, %c0_i32_0, %c0_i32_1 : i32, i32, i32
  }
  func.func @transform_14(%arg0: i32) -> (i32, i32, i32) {
    %c0_i32 = arith.constant 0 : i32
    %c0_i32_0 = arith.constant 0 : i32
    %c0_i32_1 = arith.constant 0 : i32
    %c0_i32_2 = arith.constant 0 : i32
    return %c0_i32, %c0_i32_0, %c0_i32_1 : i32, i32, i32
  }
  func.func @transform_15(%arg0: i32) -> (i32, i32, i32) {
    %c0_i32 = arith.constant 0 : i32
    %c0_i32_0 = arith.constant 0 : i32
    %c0_i32_1 = arith.constant 0 : i32
    %c0_i32_2 = arith.constant 0 : i32
    return %c0_i32, %c0_i32_0, %c0_i32_1 : i32, i32, i32
  }
  func.func @transform_16(%arg0: i32) -> (i32, i32) {
    %c0_i32 = arith.constant 0 : i32
    %c0_i32_0 = arith.constant 0 : i32
    %c0_i32_1 = arith.constant 0 : i32
    return %c0_i32, %c0_i32_0 : i32, i32
  }
  func.func @transform_17(%arg0: i32) -> (i32, i32) {
    %c0_i32 = arith.constant 0 : i32
    %c0_i32_0 = arith.constant 0 : i32
    %c0_i32_1 = arith.constant 0 : i32
    return %c0_i32, %c0_i32_0 : i32, i32
  }
  func.func @transform_18(%arg0: i32) -> (i32, i32) {
    %c0_i32 = arith.constant 0 : i32
    %c0_i32_0 = arith.constant 0 : i32
    %c0_i32_1 = arith.constant 0 : i32
    return %c0_i32, %c0_i32_0 : i32, i32
  }
  func.func @transform_19(%arg0: i32) -> (i32, i32) {
    %c0_i32 = arith.constant 0 : i32
    %c0_i32_0 = arith.constant 0 : i32
    %c0_i32_1 = arith.constant 0 : i32
    return %c0_i32, %c0_i32_0 : i32, i32
  }
}

</mosaic_0001>

<llo_original>
// kernel: bert_forward.1
$region0: #{bert_forward.1}
  #allocation0 [shape = 'u32[]', space=smem, size = 0x4, offset = 0x4, fixed_abs, tag = 'smem constant byte address 0x4 - core index']
  #allocation1 [shape = 'u32[144,128]{1,0:T(1,128)}', space=vmem, size = 0x12000, scoped, tag = 'internal scratch']
  %s0 = inlined_call_operand.vmem [shape: f32[16,32], index: 0, kind: input, shape index: {}]
  %s1 = inlined_call_operand.vmem [shape: f32[16,16], index: 1, kind: input, shape index: {}]
  %s2 = inlined_call_operand.vmem [shape: f32[1,32], index: 2, kind: input, shape index: {}]
  %s3 = inlined_call_operand.vmem [shape: f32[1,32], index: 3, kind: input, shape index: {}]
  %s4 = inlined_call_operand.vmem [shape: f32[2,32,96], index: 4, kind: input, shape index: {}]
  %s5 = inlined_call_operand.vmem [shape: f32[2,1,96], index: 5, kind: input, shape index: {}]
  %s6 = inlined_call_operand.vmem [shape: f32[2,32,32], index: 6, kind: input, shape index: {}]
  %s7 = inlined_call_operand.vmem [shape: f32[2,1,32], index: 7, kind: input, shape index: {}]
  %s8 = inlined_call_operand.vmem [shape: f32[2,1,32], index: 8, kind: input, shape index: {}]
  %s9 = inlined_call_operand.vmem [shape: f32[2,1,32], index: 9, kind: input, shape index: {}]
  %s10 = inlined_call_operand.vmem [shape: f32[2,32,64], index: 10, kind: input, shape index: {}]
  %s11 = inlined_call_operand.vmem [shape: f32[2,1,64], index: 11, kind: input, shape index: {}]
  %s12 = inlined_call_operand.vmem [shape: f32[2,64,32], index: 12, kind: input, shape index: {}]
  %s13 = inlined_call_operand.vmem [shape: f32[2,1,32], index: 13, kind: input, shape index: {}]
  %s14 = inlined_call_operand.vmem [shape: f32[2,1,32], index: 14, kind: input, shape index: {}]
  %s15 = inlined_call_operand.vmem [shape: f32[2,1,32], index: 15, kind: input, shape index: {}]
  %s16 = inlined_call_operand.vmem [shape: f32[32,32], index: 16, kind: input, shape index: {}]
  %s17 = inlined_call_operand.vmem [shape: f32[1,32], index: 17, kind: input, shape index: {}]
  %s18 = inlined_call_operand.hbm [shape: f32[16,32], index: 18, kind: output, shape index: {0}]
  %s19 = inlined_call_operand.hbm [shape: f32[2,32], index: 19, kind: output, shape index: {1}]
  %20 = xla_tuple %s18, %s19
  %s21 = sld [smem:[#allocation0]]
  $region90: #{bert_forward.1} parent=0
    _
  %s23 = ssub.s32 1, %s21
  %s24 = scalar_select 0, %s23, %s21
  $region1: #{bert_forward.1} parent=0
    #allocation2 [shape = 'u8[8192]{0}', space=vmem, size = 0x2000, scoped, tag = 'output window, operand 0, single buffered']
    #allocation3 [shape = 's32[1]{0}', space=sflag, size = 0x4, scoped, tag = 'scoped memory for bert_forward.1']
    #allocation4 [shape = 'u8[1024]{0}', space=vmem, size = 0x400, scoped, tag = 'output window, operand 1, single buffered']
    #allocation5 [shape = 's32[1]{0}', space=sflag, size = 0x4, scoped, tag = 'scoped memory for bert_forward.1']
    %25 = vsyncpa [#allocation3], 0
    %26 = vsyncpa [#allocation5], 0
    // Predicated region
    $region2: #{bert_forward.1} parent=1 // pred_check
      _
    $region3: #{bert_forward.1} parent=1 // pred_check_branch
      %28 = sbr.rel (0) target = $region5
    $region4: #{bert_forward.1} parent=1 // pred_region
      _
    $region5: #{bert_forward.1} parent=1 // pred_fallthru
      _
    // Predicated region
    $region6: #{bert_forward.1} parent=1 // pred_check
      _
    $region7: #{bert_forward.1} parent=1 // pred_check_branch
      %30 = sbr.rel (0) target = $region9
    $region8: #{bert_forward.1} parent=1 // pred_region
      _
    $region9: #{bert_forward.1} parent=1 // pred_fallthru
      _
    // Predicated region
    $region10: #{bert_forward.1} parent=1 // pred_check
      _
    $region11: #{bert_forward.1} parent=1 // pred_check_branch
      %32 = sbr.rel (0) target = $region13
    $region12: #{bert_forward.1} parent=1 // pred_region
      _
    $region13: #{bert_forward.1} parent=1 // pred_fallthru
      _
    // Predicated region
    $region14: #{bert_forward.1} parent=1 // pred_check
      _
    $region15: #{bert_forward.1} parent=1 // pred_check_branch
      %34 = sbr.rel (0) target = $region17
    $region16: #{bert_forward.1} parent=1 // pred_region
      _
    $region17: #{bert_forward.1} parent=1 // pred_fallthru
      _
    // Predicated region
    $region18: #{bert_forward.1} parent=1 // pred_check
      _
    $region19: #{bert_forward.1} parent=1 // pred_check_branch
      %36 = sbr.rel (0) target = $region21
    $region20: #{bert_forward.1} parent=1 // pred_region
      _
    $region21: #{bert_forward.1} parent=1 // pred_fallthru
      _
    // Predicated region
    $region22: #{bert_forward.1} parent=1 // pred_check
      _
    $region23: #{bert_forward.1} parent=1 // pred_check_branch
      %38 = sbr.rel (0) target = $region25
    $region24: #{bert_forward.1} parent=1 // pred_region
      _
    $region25: #{bert_forward.1} parent=1 // pred_fallthru
      _
    // Predicated region
    $region26: #{bert_forward.1} parent=1 // pred_check
      _
    $region27: #{bert_forward.1} parent=1 // pred_check_branch
      %40 = sbr.rel (0) target = $region29
    $region28: #{bert_forward.1} parent=1 // pred_region
      _
    $region29: #{bert_forward.1} parent=1 // pred_fallthru
      _
    // Predicated region
    $region30: #{bert_forward.1} parent=1 // pred_check
      _
    $region31: #{bert_forward.1} parent=1 // pred_check_branch
      %42 = sbr.rel (0) target = $region33
    $region32: #{bert_forward.1} parent=1 // pred_region
      _
    $region33: #{bert_forward.1} parent=1 // pred_fallthru
      _
    // Predicated region
    $region34: #{bert_forward.1} parent=1 // pred_check
      _
    $region35: #{bert_forward.1} parent=1 // pred_check_branch
      %44 = sbr.rel (0) target = $region37
    $region36: #{bert_forward.1} parent=1 // pred_region
      _
    $region37: #{bert_forward.1} parent=1 // pred_fallthru
      _
    // Predicated region
    $region38: #{bert_forward.1} parent=1 // pred_check
      _
    $region39: #{bert_forward.1} parent=1 // pred_check_branch
      %46 = sbr.rel (0) target = $region41
    $region40: #{bert_forward.1} parent=1 // pred_region
      _
    $region41: #{bert_forward.1} parent=1 // pred_fallthru
      _
    // Predicated region
    $region42: #{bert_forward.1} parent=1 // pred_check
      _
    $region43: #{bert_forward.1} parent=1 // pred_check_branch
      %48 = sbr.rel (0) target = $region45
    $region44: #{bert_forward.1} parent=1 // pred_region
      _
    $region45: #{bert_forward.1} parent=1 // pred_fallthru
      _
    // Predicated region
    $region46: #{bert_forward.1} parent=1 // pred_check
      _
    $region47: #{bert_forward.1} parent=1 // pred_check_branch
      %50 = sbr.rel (0) target = $region49
    $region48: #{bert_forward.1} parent=1 // pred_region
      _
    $region49: #{bert_forward.1} parent=1 // pred_fallthru
      _
    // Predicated region
    $region50: #{bert_forward.1} parent=1 // pred_check
      _
    $region51: #{bert_forward.1} parent=1 // pred_check_branch
      %52 = sbr.rel (0) target = $region53
    $region52: #{bert_forward.1} parent=1 // pred_region
      _
    $region53: #{bert_forward.1} parent=1 // pred_fallthru
      _
    // Predicated region
    $region54: #{bert_forward.1} parent=1 // pred_check
      _
    $region55: #{bert_forward.1} parent=1 // pred_check_branch
      %54 = sbr.rel (0) target = $region57
    $region56: #{bert_forward.1} parent=1 // pred_region
      _
    $region57: #{bert_forward.1} parent=1 // pred_fallthru
      _
    // Predicated region
    $region58: #{bert_forward.1} parent=1 // pred_check
      _
    $region59: #{bert_forward.1} parent=1 // pred_check_branch
      %56 = sbr.rel (0) target = $region61
    $region60: #{bert_forward.1} parent=1 // pred_region
      _
    $region61: #{bert_forward.1} parent=1 // pred_fallthru
      _
    // Predicated region
    $region62: #{bert_forward.1} parent=1 // pred_check
      _
    $region63: #{bert_forward.1} parent=1 // pred_check_branch
      %58 = sbr.rel (0) target = $region65
    $region64: #{bert_forward.1} parent=1 // pred_region
      _
    $region65: #{bert_forward.1} parent=1 // pred_fallthru
      _
    // Predicated region
    $region66: #{bert_forward.1} parent=1 // pred_check
      _
    $region67: #{bert_forward.1} parent=1 // pred_check_branch
      %60 = sbr.rel (0) target = $region69
    $region68: #{bert_forward.1} parent=1 // pred_region
      _
    $region69: #{bert_forward.1} parent=1 // pred_fallthru
      _
    // Predicated region
    $region70: #{bert_forward.1} parent=1 // pred_check
      _
    $region71: #{bert_forward.1} parent=1 // pred_check_branch
      %62 = sbr.rel (0) target = $region73
    $region72: #{bert_forward.1} parent=1 // pred_region
      _
    $region73: #{bert_forward.1} parent=1 // pred_fallthru
      _
    %v63 = vld [vmem:[%s0] sm:$0xff]
    %v64 = vld [vmem:[%s0 + $0x8] sm:$0xff]
    %v65 = vld [vmem:[%s2] sm:$0x1]
    %v66 = vld [vmem:[%s3] sm:$0x1]
    %vm67 = vcmask 261120
    %v68 = vsel %vm67, %v63, 0.0
    %69 = vadd.xlane.f32.xlu0 %v68
    %v70 = vpop.xlane.xlu0 %69
    %v71 = vsel %vm67, %v64, 0.0
    %72 = vadd.xlane.f32.xlu0 %v71
    %v73 = vpop.xlane.xlu0 %72
    %v74 = vrcp.pop 32.0
    %v75 = vmul.f32 %v70, %v74
    %v76 = vmul.f32 %v73, %v74
    %v77 = vsub.f32 %v63, %v75
    %v78 = vsub.f32 %v64, %v76
    %v79 = vmul.f32 %v77, %v77
    %v80 = vmul.f32 %v78, %v78
    %v81 = vsel %vm67, %v79, 0.0
    %82 = vadd.xlane.f32.xlu0 %v81
    %v83 = vpop.xlane.xlu0 %82
    %v84 = vsel %vm67, %v80, 0.0
    %85 = vadd.xlane.f32.xlu0 %v84
    %v86 = vpop.xlane.xlu0 %85
    %v87 = vmul.f32 %v83, %v74
    %v88 = vmul.f32 %v86, %v74
    %v89 = vadd.f32 %v87, 1e-12
    %v90 = vadd.f32 %v88, 1e-12
    %v91 = vrsqrt.pop %v89
    %v92 = vrsqrt.pop %v90
    %v93 = vmul.f32 %v77, %v91
    %v94 = vmul.f32 %v78, %v92
    %v96 = vlaneseq
    %v97 = vshrl.u32 %v96, 7
    %v98 = vsub.s32 0, %v97
    %v99 = vrot.slane %v65, %v98
    %v101 = vmul.f32 %v93, %v99
    %v102 = vmul.f32 %v94, %v99
    %v104 = vlaneseq
    %v105 = vshrl.u32 %v104, 7
    %v106 = vsub.s32 0, %v105
    %v107 = vrot.slane %v66, %v106
    %v109 = vadd.f32 %v101, %v107
    %v110 = vadd.f32 %v102, %v107
    %v111 = vld [vmem:[%s1] sm:$0xff]
    %v112 = vld [vmem:[%s1 + $0x8] sm:$0xff]
    %v113 = vld [vmem:[%s4] sm:$0xff]
    %v114 = vld [vmem:[%s4 + $0x8] sm:$0xff]
    %v115 = vld [vmem:[%s4 + $0x10] sm:$0xff]
    %v116 = vld [vmem:[%s4 + $0x18] sm:$0xff]
    %v117 = vld [vmem:[%s5] sm:$0x1]
    %v119 = vlaneseq
    %v120 = vshrl.u32 %v119, 7
    %v121 = vsub.s32 0, %v120
    %v122 = vrot.slane %v117, %v121
    %v125 = vsel %vm67, %v109, 0
    %v128 = vsel %vm67, %v110, 0
    %130 = vmatprep.subr.mxu0 0.0
    %131 = vmatpush1.msra.mxu0 %v113
    %132 = vmatprep.subr.mxu0 0.0
    %133 = vmatpush1.msra.mxu0 %v114
    %134 = vmatprep.subr.mxu0 0.0
    %135 = vmatpush1.msra.mxu0 %v115
    %136 = vmatprep.subr.mxu0 0.0
    %137 = vmatpush1.msra.mxu0 %v116
    %138 = vmatprep.subr.mxu0 0.0
    %139 = vmatpush1.msra.mxu0 0.0
    %140 = vmatprep.subr.mxu0 0.0
    %141 = vmatpush1.msra.mxu0 0.0
    %142 = vmatprep.subr.mxu0 0.0
    %143 = vmatpush1.msra.mxu0 0.0
    %144 = vmatprep.subr.mxu0 0.0
    %145 = vmatpush1.msra.mxu0 0.0
    %146 = vmatprep.subr.mxu0 0.0
    %147 = vmatpush1.msra.mxu0 0.0
    %148 = vmatprep.subr.mxu0 0.0
    %149 = vmatpush1.msra.mxu0 0.0
    %150 = vmatprep.subr.mxu0 0.0
    %151 = vmatpush1.msra.mxu0 0.0
    %152 = vmatprep.subr.mxu0 0.0
    %153 = vmatpush1.msra.mxu0 0.0
    %154 = vmatprep.subr.mxu0 0.0
    %155 = vmatpush1.msra.mxu0 0.0
    %156 = vmatprep.subr.mxu0 0.0
    %157 = vmatpush1.msra.mxu0 0.0
    %158 = vmatprep.subr.mxu0 0.0
    %159 = vmatpush1.msra.mxu0 0.0
    %160 = vmatprep.subr.mxu0 0.0
    %161 = vmatpush1.msra.mxu0 0.0
    %162 = vmatprep.subr.mxu0 0.0
    %163 = vmatpush1.msra.mxu0 0.0
    %164 = vmatprep.subr.mxu0 0.0
    %165 = vmatpush1.msra.mxu0 0.0
    %166 = vmatprep.subr.mxu0 0.0
    %167 = vmatpush1.msra.mxu0 0.0
    %168 = vmatprep.subr.mxu0 0.0
    %169 = vmatpush1.msra.mxu0 0.0
    %170 = vmatprep.subr.mxu0 0.0
    %171 = vmatpush1.msra.mxu0 0.0
    %172 = vmatprep.subr.mxu0 0.0
    %173 = vmatpush1.msra.mxu0 0.0
    %174 = vmatprep.subr.mxu0 0.0
    %175 = vmatpush1.msra.mxu0 0.0
    %176 = vmatprep.subr.mxu0 0.0
    %177 = vmatpush1.msra.mxu0 0.0
    %178 = vmatprep.subr.mxu0 0.0
    %179 = vmatpush1.msra.mxu0 0.0
    %180 = vmatprep.subr.mxu0 0.0
    %181 = vmatpush1.msra.mxu0 0.0
    %182 = vmatprep.subr.mxu0 0.0
    %183 = vmatpush1.msra.mxu0 0.0
    %184 = vmatprep.subr.mxu0 0.0
    %185 = vmatpush1.msra.mxu0 0.0
    %186 = vmatprep.subr.mxu0 0.0
    %187 = vmatpush1.msra.mxu0 0.0
    %188 = vmatprep.subr.mxu0 0.0
    %189 = vmatpush1.msra.mxu0 0.0
    %190 = vmatprep.subr.mxu0 0.0
    %191 = vmatpush1.msra.mxu0 0.0
    %192 = vmatprep.subr.mxu0 0.0
    %193 = vmatpush1.msra.mxu0 0.0
    %194 = vmatprep.mubr.f32.mxu0 0.0
    %195 = vmatmul.mubr.f32.gmra.mrb[0].mxu0 %v125
    %v196 = vpop.f32.mrb[0].mxu0
    %v197 = vadd.f32 %v122, %v196
    %v198 = vpop.f32.mrb[0].mxu0
    %199 = vmatprep.mubr.f32.mxu0 0.0
    %200 = vmatmul.mubr.f32.gmra.mrb[0].mxu0 %v128
    %v201 = vpop.f32.mrb[0].mxu0
    %v202 = vadd.f32 %v122, %v201
    %v203 = vpop.f32.mrb[0].mxu0
    %204 = vdwg.mxu0
    %207 = vrot.lane.b32.xlu0 %v197, 96
    %v208 = vpop.permute.xlu0 %207
    %209 = vrot.lane.b32.xlu0 %v202, 96
    %v210 = vpop.permute.xlu0 %209
    %vm211 = vcmask 64512
    %v212 = vsel %vm211, %v197, 0
    %v214 = vsel %vm211, %v202, 0
    %v216 = vsel %vm211, %v208, 0
    %v218 = vsel %vm211, %v210, 0
    %220 = vmatprep.subr.mxu0 0.0
    %221 = vmatpush1.xpose.msra.mxu0 %v216
    %222 = vmatprep.subr.mxu0 0.0
    %223 = vmatpush1.xpose.msra.mxu0 %v218
    %224 = vmatprep.subr.mxu0 0.0
    %225 = vmatpush1.xpose.msra.mxu0 0.0
    %226 = vmatprep.subr.mxu0 0.0
    %227 = vmatpush1.xpose.msra.mxu0 0.0
    %228 = vmatprep.subr.mxu0 0.0
    %229 = vmatpush1.xpose.msra.mxu0 0.0
    %230 = vmatprep.subr.mxu0 0.0
    %231 = vmatpush1.xpose.msra.mxu0 0.0
    %232 = vmatprep.subr.mxu0 0.0
    %233 = vmatpush1.xpose.msra.mxu0 0.0
    %234 = vmatprep.subr.mxu0 0.0
    %235 = vmatpush1.xpose.msra.mxu0 0.0
    %236 = vmatprep.subr.mxu0 0.0
    %237 = vmatpush1.xpose.msra.mxu0 0.0
    %238 = vmatprep.subr.mxu0 0.0
    %239 = vmatpush1.xpose.msra.mxu0 0.0
    %240 = vmatprep.subr.mxu0 0.0
    %241 = vmatpush1.xpose.msra.mxu0 0.0
    %242 = vmatprep.subr.mxu0 0.0
    %243 = vmatpush1.xpose.msra.mxu0 0.0
    %244 = vmatprep.subr.mxu0 0.0
    %245 = vmatpush1.xpose.msra.mxu0 0.0
    %246 = vmatprep.subr.mxu0 0.0
    %247 = vmatpush1.xpose.msra.mxu0 0.0
    %248 = vmatprep.subr.mxu0 0.0
    %249 = vmatpush1.xpose.msra.mxu0 0.0
    %250 = vmatprep.subr.mxu0 0.0
    %251 = vmatpush1.xpose.msra.mxu0 0.0
    %252 = vmatprep.subr.mxu0 0.0
    %253 = vmatpush1.xpose.msra.mxu0 0.0
    %254 = vmatprep.subr.mxu0 0.0
    %255 = vmatpush1.xpose.msra.mxu0 0.0
    %256 = vmatprep.subr.mxu0 0.0
    %257 = vmatpush1.xpose.msra.mxu0 0.0
    %258 = vmatprep.subr.mxu0 0.0
    %259 = vmatpush1.xpose.msra.mxu0 0.0
    %260 = vmatprep.subr.mxu0 0.0
    %261 = vmatpush1.xpose.msra.mxu0 0.0
    %262 = vmatprep.subr.mxu0 0.0
    %263 = vmatpush1.xpose.msra.mxu0 0.0
    %264 = vmatprep.subr.mxu0 0.0
    %265 = vmatpush1.xpose.msra.mxu0 0.0
    %266 = vmatprep.subr.mxu0 0.0
    %267 = vmatpush1.xpose.msra.mxu0 0.0
    %268 = vmatprep.subr.mxu0 0.0
    %269 = vmatpush1.xpose.msra.mxu0 0.0
    %270 = vmatprep.subr.mxu0 0.0
    %271 = vmatpush1.xpose.msra.mxu0 0.0
    %272 = vmatprep.subr.mxu0 0.0
    %273 = vmatpush1.xpose.msra.mxu0 0.0
    %274 = vmatprep.subr.mxu0 0.0
    %275 = vmatpush1.xpose.msra.mxu0 0.0
    %276 = vmatprep.subr.mxu0 0.0
    %277 = vmatpush1.xpose.msra.mxu0 0.0
    %278 = vmatprep.subr.mxu0 0.0
    %279 = vmatpush1.xpose.msra.mxu0 0.0
    %280 = vmatprep.subr.mxu0 0.0
    %281 = vmatpush1.xpose.msra.mxu0 0.0
    %282 = vmatprep.subr.mxu0 0.0
    %283 = vmatpush1.xpose.msra.mxu0 0.0
    %284 = vmatprep.mubr.f32.mxu0 0.0
    %285 = vmatmul.mubr.f32.gmra.mrb[0].mxu0 %v212
    %v286 = vpop.f32.mrb[0].mxu0
    %v287 = vadd.f32 %v111, %v286
    %v288 = vpop.f32.mrb[0].mxu0
    %289 = vmatprep.mubr.f32.mxu0 0.0
    %290 = vmatmul.mubr.f32.gmra.mrb[0].mxu0 %v214
    %v291 = vpop.f32.mrb[0].mxu0
    %v292 = vadd.f32 %v112, %v291
    %v293 = vpop.f32.mrb[0].mxu0
    %294 = vdwg.mxu0
    %vm295 = vcmask 130048
    %v296 = vsel %vm295, %v287, -inf
    %297 = vmax.xlane.f32.xlu0 %v296
    %v298 = vpop.xlane.xlu0 %297
    %v299 = vsel %vm295, %v292, -inf
    %300 = vmax.xlane.f32.xlu0 %v299
    %v301 = vpop.xlane.xlu0 %300
    %v302 = vsub.f32 %v287, %v298
    %v303 = vsub.f32 %v292, %v301
    %v304 = vmul.f32 %v302, 1.442695
    %v305 = vpow.pop %v304
    %v306 = vmul.f32 %v303, 1.442695
    %v307 = vpow.pop %v306
    %v308 = vsel %vm295, %v305, 0.0
    %309 = vadd.xlane.f32.xlu0 %v308
    %v310 = vpop.xlane.xlu0 %309
    %v311 = vsel %vm295, %v307, 0.0
    %312 = vadd.xlane.f32.xlu0 %v311
    %v313 = vpop.xlane.xlu0 %312
    %314 = vrot.lane.b32.xlu0 %v197, 64
    %v315 = vpop.permute.xlu0 %314
    %316 = vrot.lane.b32.xlu0 %v202, 64
    %v317 = vpop.permute.xlu0 %316
    %v321 = vsel %vm295, %v305, 0
    %v324 = vsel %vm295, %v307, 0
    %326 = vmatprep.subr.mxu0 0.0
    %327 = vmatpush1.msra.mxu0 %v315
    %328 = vmatprep.subr.mxu0 0.0
    %329 = vmatpush1.msra.mxu0 %v317
    %330 = vmatprep.subr.mxu0 0.0
    %331 = vmatpush1.msra.mxu0 0.0
    %332 = vmatprep.subr.mxu0 0.0
    %333 = vmatpush1.msra.mxu0 0.0
    %334 = vmatprep.subr.mxu0 0.0
    %335 = vmatpush1.msra.mxu0 0.0
    %336 = vmatprep.subr.mxu0 0.0
    %337 = vmatpush1.msra.mxu0 0.0
    %338 = vmatprep.subr.mxu0 0.0
    %339 = vmatpush1.msra.mxu0 0.0
    %340 = vmatprep.subr.mxu0 0.0
    %341 = vmatpush1.msra.mxu0 0.0
    %342 = vmatprep.subr.mxu0 0.0
    %343 = vmatpush1.msra.mxu0 0.0
    %344 = vmatprep.subr.mxu0 0.0
    %345 = vmatpush1.msra.mxu0 0.0
    %346 = vmatprep.subr.mxu0 0.0
    %347 = vmatpush1.msra.mxu0 0.0
    %348 = vmatprep.subr.mxu0 0.0
    %349 = vmatpush1.msra.mxu0 0.0
    %350 = vmatprep.subr.mxu0 0.0
    %351 = vmatpush1.msra.mxu0 0.0
    %352 = vmatprep.subr.mxu0 0.0
    %353 = vmatpush1.msra.mxu0 0.0
    %354 = vmatprep.subr.mxu0 0.0
    %355 = vmatpush1.msra.mxu0 0.0
    %356 = vmatprep.subr.mxu0 0.0
    %357 = vmatpush1.msra.mxu0 0.0
    %358 = vmatprep.subr.mxu0 0.0
    %359 = vmatpush1.msra.mxu0 0.0
    %360 = vmatprep.subr.mxu0 0.0
    %361 = vmatpush1.msra.mxu0 0.0
    %362 = vmatprep.subr.mxu0 0.0
    %363 = vmatpush1.msra.mxu0 0.0
    %364 = vmatprep.subr.mxu0 0.0
    %365 = vmatpush1.msra.mxu0 0.0
    %366 = vmatprep.subr.mxu0 0.0
    %367 = vmatpush1.msra.mxu0 0.0
    %368 = vmatprep.subr.mxu0 0.0
    %369 = vmatpush1.msra.mxu0 0.0
    %370 = vmatprep.subr.mxu0 0.0
    %371 = vmatpush1.msra.mxu0 0.0
    %372 = vmatprep.subr.mxu0 0.0
    %373 = vmatpush1.msra.mxu0 0.0
    %374 = vmatprep.subr.mxu0 0.0
    %375 = vmatpush1.msra.mxu0 0.0
    %376 = vmatprep.subr.mxu0 0.0
    %377 = vmatpush1.msra.mxu0 0.0
    %378 = vmatprep.subr.mxu0 0.0
    %379 = vmatpush1.msra.mxu0 0.0
    %380 = vmatprep.subr.mxu0 0.0
    %381 = vmatpush1.msra.mxu0 0.0
    %382 = vmatprep.subr.mxu0 0.0
    %383 = vmatpush1.msra.mxu0 0.0
    %384 = vmatprep.subr.mxu0 0.0
    %385 = vmatpush1.msra.mxu0 0.0
    %386 = vmatprep.subr.mxu0 0.0
    %387 = vmatpush1.msra.mxu0 0.0
    %388 = vmatprep.subr.mxu0 0.0
    %389 = vmatpush1.msra.mxu0 0.0
    %390 = vmatprep.mubr.f32.mxu0 0.0
    %391 = vmatmul.mubr.f32.gmra.mrb[0].mxu0 %v321
    %v392 = vpop.f32.mrb[0].mxu0
    %v393 = vadd.f32 0.0, %v392
    %v394 = vpop.f32.mrb[0].mxu0
    %395 = vmatprep.mubr.f32.mxu0 0.0
    %396 = vmatmul.mubr.f32.gmra.mrb[0].mxu0 %v324
    %v397 = vpop.f32.mrb[0].mxu0
    %v398 = vadd.f32 0.0, %v397
    %v399 = vpop.f32.mrb[0].mxu0
    %400 = vdwg.mxu0
    %v401 = vrcp.pop %v310
    %v402 = vrcp.pop %v313
    %v403 = vmul.f32 %v393, %v401
    %v404 = vmul.f32 %v398, %v402
    %405 = vrot.lane.b32.xlu0 %v197, 120
    %v406 = vpop.permute.xlu0 %405
    %407 = vrot.lane.b32.xlu0 %v202, 120
    %v408 = vpop.permute.xlu0 %407
    %409 = vrot.lane.b32.xlu0 %v197, 88
    %v410 = vpop.permute.xlu0 %409
    %411 = vrot.lane.b32.xlu0 %v202, 88
    %v412 = vpop.permute.xlu0 %411
    %v413 = vsel %vm211, %v406, 0
    %v415 = vsel %vm211, %v408, 0
    %v417 = vsel %vm211, %v410, 0
    %v419 = vsel %vm211, %v412, 0
    %421 = vmatprep.subr.mxu0 0.0
    %422 = vmatpush1.xpose.msra.mxu0 %v417
    %423 = vmatprep.subr.mxu0 0.0
    %424 = vmatpush1.xpose.msra.mxu0 %v419
    %425 = vmatprep.subr.mxu0 0.0
    %426 = vmatpush1.xpose.msra.mxu0 0.0
    %427 = vmatprep.subr.mxu0 0.0
    %428 = vmatpush1.xpose.msra.mxu0 0.0
    %429 = vmatprep.subr.mxu0 0.0
    %430 = vmatpush1.xpose.msra.mxu0 0.0
    %431 = vmatprep.subr.mxu0 0.0
    %432 = vmatpush1.xpose.msra.mxu0 0.0
    %433 = vmatprep.subr.mxu0 0.0
    %434 = vmatpush1.xpose.msra.mxu0 0.0
    %435 = vmatprep.subr.mxu0 0.0
    %436 = vmatpush1.xpose.msra.mxu0 0.0
    %437 = vmatprep.subr.mxu0 0.0
    %438 = vmatpush1.xpose.msra.mxu0 0.0
    %439 = vmatprep.subr.mxu0 0.0
    %440 = vmatpush1.xpose.msra.mxu0 0.0
    %441 = vmatprep.subr.mxu0 0.0
    %442 = vmatpush1.xpose.msra.mxu0 0.0
    %443 = vmatprep.subr.mxu0 0.0
    %444 = vmatpush1.xpose.msra.mxu0 0.0
    %445 = vmatprep.subr.mxu0 0.0
    %446 = vmatpush1.xpose.msra.mxu0 0.0
    %447 = vmatprep.subr.mxu0 0.0
    %448 = vmatpush1.xpose.msra.mxu0 0.0
    %449 = vmatprep.subr.mxu0 0.0
    %450 = vmatpush1.xpose.msra.mxu0 0.0
    %451 = vmatprep.subr.mxu0 0.0
    %452 = vmatpush1.xpose.msra.mxu0 0.0
    %453 = vmatprep.subr.mxu0 0.0
    %454 = vmatpush1.xpose.msra.mxu0 0.0
    %455 = vmatprep.subr.mxu0 0.0
    %456 = vmatpush1.xpose.msra.mxu0 0.0
    %457 = vmatprep.subr.mxu0 0.0
    %458 = vmatpush1.xpose.msra.mxu0 0.0
    %459 = vmatprep.subr.mxu0 0.0
    %460 = vmatpush1.xpose.msra.mxu0 0.0
    %461 = vmatprep.subr.mxu0 0.0
    %462 = vmatpush1.xpose.msra.mxu0 0.0
    %463 = vmatprep.subr.mxu0 0.0
    %464 = vmatpush1.xpose.msra.mxu0 0.0
    %465 = vmatprep.subr.mxu0 0.0
    %466 = vmatpush1.xpose.msra.mxu0 0.0
    %467 = vmatprep.subr.mxu0 0.0
    %468 = vmatpush1.xpose.msra.mxu0 0.0
    %469 = vmatprep.subr.mxu0 0.0
    %470 = vmatpush1.xpose.msra.mxu0 0.0
    %471 = vmatprep.subr.mxu0 0.0
    %472 = vmatpush1.xpose.msra.mxu0 0.0
    %473 = vmatprep.subr.mxu0 0.0
    %474 = vmatpush1.xpose.msra.mxu0 0.0
    %475 = vmatprep.subr.mxu0 0.0
    %476 = vmatpush1.xpose.msra.mxu0 0.0
    %477 = vmatprep.subr.mxu0 0.0
    %478 = vmatpush1.xpose.msra.mxu0 0.0
    %479 = vmatprep.subr.mxu0 0.0
    %480 = vmatpush1.xpose.msra.mxu0 0.0
    %481 = vmatprep.subr.mxu0 0.0
    %482 = vmatpush1.xpose.msra.mxu0 0.0
    %483 = vmatprep.subr.mxu0 0.0
    %484 = vmatpush1.xpose.msra.mxu0 0.0
    %485 = vmatprep.mubr.f32.mxu0 0.0
    %486 = vmatmul.mubr.f32.gmra.mrb[0].mxu0 %v413
    %v487 = vpop.f32.mrb[0].mxu0
    %v488 = vadd.f32 %v111, %v487
    %v489 = vpop.f32.mrb[0].mxu0
    %490 = vmatprep.mubr.f32.mxu0 0.0
    %491 = vmatmul.mubr.f32.gmra.mrb[0].mxu0 %v415
    %v492 = vpop.f32.mrb[0].mxu0
    %v493 = vadd.f32 %v112, %v492
    %v494 = vpop.f32.mrb[0].mxu0
    %495 = vdwg.mxu0
    %v496 = vsel %vm295, %v488, -inf
    %497 = vmax.xlane.f32.xlu0 %v496
    %v498 = vpop.xlane.xlu0 %497
    %v499 = vsel %vm295, %v493, -inf
    %500 = vmax.xlane.f32.xlu0 %v499
    %v501 = vpop.xlane.xlu0 %500
    %v502 = vsub.f32 %v488, %v498
    %v503 = vsub.f32 %v493, %v501
    %v504 = vmul.f32 %v502, 1.442695
    %v505 = vpow.pop %v504
    %v506 = vmul.f32 %v503, 1.442695
    %v507 = vpow.pop %v506
    %v508 = vsel %vm295, %v505, 0.0
    %509 = vadd.xlane.f32.xlu0 %v508
    %v510 = vpop.xlane.xlu0 %509
    %v511 = vsel %vm295, %v507, 0.0
    %512 = vadd.xlane.f32.xlu0 %v511
    %v513 = vpop.xlane.xlu0 %512
    %514 = vrot.lane.b32.xlu0 %v197, 56
    %v515 = vpop.permute.xlu0 %514
    %516 = vrot.lane.b32.xlu0 %v202, 56
    %v517 = vpop.permute.xlu0 %516
    %v521 = vsel %vm295, %v505, 0
    %v524 = vsel %vm295, %v507, 0
    %526 = vmatprep.subr.mxu0 0.0
    %527 = vmatpush1.msra.mxu0 %v515
    %528 = vmatprep.subr.mxu0 0.0
    %529 = vmatpush1.msra.mxu0 %v517
    %530 = vmatprep.subr.mxu0 0.0
    %531 = vmatpush1.msra.mxu0 0.0
    %532 = vmatprep.subr.mxu0 0.0
    %533 = vmatpush1.msra.mxu0 0.0
    %534 = vmatprep.subr.mxu0 0.0
    %535 = vmatpush1.msra.mxu0 0.0
    %536 = vmatprep.subr.mxu0 0.0
    %537 = vmatpush1.msra.mxu0 0.0
    %538 = vmatprep.subr.mxu0 0.0
    %539 = vmatpush1.msra.mxu0 0.0
    %540 = vmatprep.subr.mxu0 0.0
    %541 = vmatpush1.msra.mxu0 0.0
    %542 = vmatprep.subr.mxu0 0.0
    %543 = vmatpush1.msra.mxu0 0.0
    %544 = vmatprep.subr.mxu0 0.0
    %545 = vmatpush1.msra.mxu0 0.0
    %546 = vmatprep.subr.mxu0 0.0
    %547 = vmatpush1.msra.mxu0 0.0
    %548 = vmatprep.subr.mxu0 0.0
    %549 = vmatpush1.msra.mxu0 0.0
    %550 = vmatprep.subr.mxu0 0.0
    %551 = vmatpush1.msra.mxu0 0.0
    %552 = vmatprep.subr.mxu0 0.0
    %553 = vmatpush1.msra.mxu0 0.0
    %554 = vmatprep.subr.mxu0 0.0
    %555 = vmatpush1.msra.mxu0 0.0
    %556 = vmatprep.subr.mxu0 0.0
    %557 = vmatpush1.msra.mxu0 0.0
    %558 = vmatprep.subr.mxu0 0.0
    %559 = vmatpush1.msra.mxu0 0.0
    %560 = vmatprep.subr.mxu0 0.0
    %561 = vmatpush1.msra.mxu0 0.0
    %562 = vmatprep.subr.mxu0 0.0
    %563 = vmatpush1.msra.mxu0 0.0
    %564 = vmatprep.subr.mxu0 0.0
    %565 = vmatpush1.msra.mxu0 0.0
    %566 = vmatprep.subr.mxu0 0.0
    %567 = vmatpush1.msra.mxu0 0.0
    %568 = vmatprep.subr.mxu0 0.0
    %569 = vmatpush1.msra.mxu0 0.0
    %570 = vmatprep.subr.mxu0 0.0
    %571 = vmatpush1.msra.mxu0 0.0
    %572 = vmatprep.subr.mxu0 0.0
    %573 = vmatpush1.msra.mxu0 0.0
    %574 = vmatprep.subr.mxu0 0.0
    %575 = vmatpush1.msra.mxu0 0.0
    %576 = vmatprep.subr.mxu0 0.0
    %577 = vmatpush1.msra.mxu0 0.0
    %578 = vmatprep.subr.mxu0 0.0
    %579 = vmatpush1.msra.mxu0 0.0
    %580 = vmatprep.subr.mxu0 0.0
    %581 = vmatpush1.msra.mxu0 0.0
    %582 = vmatprep.subr.mxu0 0.0
    %583 = vmatpush1.msra.mxu0 0.0
    %584 = vmatprep.subr.mxu0 0.0
    %585 = vmatpush1.msra.mxu0 0.0
    %586 = vmatprep.subr.mxu0 0.0
    %587 = vmatpush1.msra.mxu0 0.0
    %588 = vmatprep.subr.mxu0 0.0
    %589 = vmatpush1.msra.mxu0 0.0
    %590 = vmatprep.mubr.f32.mxu0 0.0
    %591 = vmatmul.mubr.f32.gmra.mrb[0].mxu0 %v521
    %v592 = vpop.f32.mrb[0].mxu0
    %v593 = vadd.f32 0.0, %v592
    %v594 = vpop.f32.mrb[0].mxu0
    %595 = vmatprep.mubr.f32.mxu0 0.0
    %596 = vmatmul.mubr.f32.gmra.mrb[0].mxu0 %v524
    %v597 = vpop.f32.mrb[0].mxu0
    %v598 = vadd.f32 0.0, %v597
    %v599 = vpop.f32.mrb[0].mxu0
    %600 = vdwg.mxu0
    %v601 = vrcp.pop %v510
    %v602 = vrcp.pop %v513
    %v603 = vmul.f32 %v593, %v601
    %v604 = vmul.f32 %v598, %v602
    %605 = vrot.lane.b32.xlu0 %v197, 112
    %v606 = vpop.permute.xlu0 %605
    %607 = vrot.lane.b32.xlu0 %v202, 112
    %v608 = vpop.permute.xlu0 %607
    %609 = vrot.lane.b32.xlu0 %v197, 80
    %v610 = vpop.permute.xlu0 %609
    %611 = vrot.lane.b32.xlu0 %v202, 80
    %v612 = vpop.permute.xlu0 %611
    %v613 = vsel %vm211, %v606, 0
    %v615 = vsel %vm211, %v608, 0
    %v617 = vsel %vm211, %v610, 0
    %v619 = vsel %vm211, %v612, 0
    %621 = vmatprep.subr.mxu0 0.0
    %622 = vmatpush1.xpose.msra.mxu0 %v617
    %623 = vmatprep.subr.mxu0 0.0
    %624 = vmatpush1.xpose.msra.mxu0 %v619
    %625 = vmatprep.subr.mxu0 0.0
    %626 = vmatpush1.xpose.msra.mxu0 0.0
    %627 = vmatprep.subr.mxu0 0.0
    %628 = vmatpush1.xpose.msra.mxu0 0.0
    %629 = vmatprep.subr.mxu0 0.0
    %630 = vmatpush1.xpose.msra.mxu0 0.0
    %631 = vmatprep.subr.mxu0 0.0
    %632 = vmatpush1.xpose.msra.mxu0 0.0
    %633 = vmatprep.subr.mxu0 0.0
    %634 = vmatpush1.xpose.msra.mxu0 0.0
    %635 = vmatprep.subr.mxu0 0.0
    %636 = vmatpush1.xpose.msra.mxu0 0.0
    %637 = vmatprep.subr.mxu0 0.0
    %638 = vmatpush1.xpose.msra.mxu0 0.0
    %639 = vmatprep.subr.mxu0 0.0
    %640 = vmatpush1.xpose.msra.mxu0 0.0
    %641 = vmatprep.subr.mxu0 0.0
    %642 = vmatpush1.xpose.msra.mxu0 0.0
    %643 = vmatprep.subr.mxu0 0.0
    %644 = vmatpush1.xpose.msra.mxu0 0.0
    %645 = vmatprep.subr.mxu0 0.0
    %646 = vmatpush1.xpose.msra.mxu0 0.0
    %647 = vmatprep.subr.mxu0 0.0
    %648 = vmatpush1.xpose.msra.mxu0 0.0
    %649 = vmatprep.subr.mxu0 0.0
    %650 = vmatpush1.xpose.msra.mxu0 0.0
    %651 = vmatprep.subr.mxu0 0.0
    %652 = vmatpush1.xpose.msra.mxu0 0.0
    %653 = vmatprep.subr.mxu0 0.0
    %654 = vmatpush1.xpose.msra.mxu0 0.0
    %655 = vmatprep.subr.mxu0 0.0
    %656 = vmatpush1.xpose.msra.mxu0 0.0
    %657 = vmatprep.subr.mxu0 0.0
    %658 = vmatpush1.xpose.msra.mxu0 0.0
    %659 = vmatprep.subr.mxu0 0.0
    %660 = vmatpush1.xpose.msra.mxu0 0.0
    %661 = vmatprep.subr.mxu0 0.0
    %662 = vmatpush1.xpose.msra.mxu0 0.0
    %663 = vmatprep.subr.mxu0 0.0
    %664 = vmatpush1.xpose.msra.mxu0 0.0
    %665 = vmatprep.subr.mxu0 0.0
    %666 = vmatpush1.xpose.msra.mxu0 0.0
    %667 = vmatprep.subr.mxu0 0.0
    %668 = vmatpush1.xpose.msra.mxu0 0.0
    %669 = vmatprep.subr.mxu0 0.0
    %670 = vmatpush1.xpose.msra.mxu0 0.0
    %671 = vmatprep.subr.mxu0 0.0
    %672 = vmatpush1.xpose.msra.mxu0 0.0
    %673 = vmatprep.subr.mxu0 0.0
    %674 = vmatpush1.xpose.msra.mxu0 0.0
    %675 = vmatprep.subr.mxu0 0.0
    %676 = vmatpush1.xpose.msra.mxu0 0.0
    %677 = vmatprep.subr.mxu0 0.0
    %678 = vmatpush1.xpose.msra.mxu0 0.0
    %679 = vmatprep.subr.mxu0 0.0
    %680 = vmatpush1.xpose.msra.mxu0 0.0
    %681 = vmatprep.subr.mxu0 0.0
    %682 = vmatpush1.xpose.msra.mxu0 0.0
    %683 = vmatprep.subr.mxu0 0.0
    %684 = vmatpush1.xpose.msra.mxu0 0.0
    %685 = vmatprep.mubr.f32.mxu0 0.0
    %686 = vmatmul.mubr.f32.gmra.mrb[0].mxu0 %v613
    %v687 = vpop.f32.mrb[0].mxu0
    %v688 = vadd.f32 %v111, %v687
    %v689 = vpop.f32.mrb[0].mxu0
    %690 = vmatprep.mubr.f32.mxu0 0.0
    %691 = vmatmul.mubr.f32.gmra.mrb[0].mxu0 %v615
    %v692 = vpop.f32.mrb[0].mxu0
    %v693 = vadd.f32 %v112, %v692
    %v694 = vpop.f32.mrb[0].mxu0
    %695 = vdwg.mxu0
    %v696 = vsel %vm295, %v688, -inf
    %697 = vmax.xlane.f32.xlu0 %v696
    %v698 = vpop.xlane.xlu0 %697
    %v699 = vsel %vm295, %v693, -inf
    %700 = vmax.xlane.f32.xlu0 %v699
    %v701 = vpop.xlane.xlu0 %700
    %v702 = vsub.f32 %v688, %v698
    %v703 = vsub.f32 %v693, %v701
    %v704 = vmul.f32 %v702, 1.442695
    %v705 = vpow.pop %v704
    %v706 = vmul.f32 %v703, 1.442695
    %v707 = vpow.pop %v706
    %v708 = vsel %vm295, %v705, 0.0
    %709 = vadd.xlane.f32.xlu0 %v708
    %v710 = vpop.xlane.xlu0 %709
    %v711 = vsel %vm295, %v707, 0.0
    %712 = vadd.xlane.f32.xlu0 %v711
    %v713 = vpop.xlane.xlu0 %712
    %714 = vrot.lane.b32.xlu0 %v197, 48
    %v715 = vpop.permute.xlu0 %714
    %716 = vrot.lane.b32.xlu0 %v202, 48
    %v717 = vpop.permute.xlu0 %716
    %v721 = vsel %vm295, %v705, 0
    %v724 = vsel %vm295, %v707, 0
    %726 = vmatprep.subr.mxu0 0.0
    %727 = vmatpush1.msra.mxu0 %v715
    %728 = vmatprep.subr.mxu0 0.0
    %729 = vmatpush1.msra.mxu0 %v717
    %730 = vmatprep.subr.mxu0 0.0
    %731 = vmatpush1.msra.mxu0 0.0
    %732 = vmatprep.subr.mxu0 0.0
    %733 = vmatpush1.msra.mxu0 0.0
    %734 = vmatprep.subr.mxu0 0.0
    %735 = vmatpush1.msra.mxu0 0.0
    %736 = vmatprep.subr.mxu0 0.0
    %737 = vmatpush1.msra.mxu0 0.0
    %738 = vmatprep.subr.mxu0 0.0
    %739 = vmatpush1.msra.mxu0 0.0
    %740 = vmatprep.subr.mxu0 0.0
    %741 = vmatpush1.msra.mxu0 0.0
    %742 = vmatprep.subr.mxu0 0.0
    %743 = vmatpush1.msra.mxu0 0.0
    %744 = vmatprep.subr.mxu0 0.0
    %745 = vmatpush1.msra.mxu0 0.0
    %746 = vmatprep.subr.mxu0 0.0
    %747 = vmatpush1.msra.mxu0 0.0
    %748 = vmatprep.subr.mxu0 0.0
    %749 = vmatpush1.msra.mxu0 0.0
    %750 = vmatprep.subr.mxu0 0.0
    %751 = vmatpush1.msra.mxu0 0.0
    %752 = vmatprep.subr.mxu0 0.0
    %753 = vmatpush1.msra.mxu0 0.0
    %754 = vmatprep.subr.mxu0 0.0
    %755 = vmatpush1.msra.mxu0 0.0
    %756 = vmatprep.subr.mxu0 0.0
    %757 = vmatpush1.msra.mxu0 0.0
    %758 = vmatprep.subr.mxu0 0.0
    %759 = vmatpush1.msra.mxu0 0.0
    %760 = vmatprep.subr.mxu0 0.0
    %761 = vmatpush1.msra.mxu0 0.0
    %762 = vmatprep.subr.mxu0 0.0
    %763 = vmatpush1.msra.mxu0 0.0
    %764 = vmatprep.subr.mxu0 0.0
    %765 = vmatpush1.msra.mxu0 0.0
    %766 = vmatprep.subr.mxu0 0.0
    %767 = vmatpush1.msra.mxu0 0.0
    %768 = vmatprep.subr.mxu0 0.0
    %769 = vmatpush1.msra.mxu0 0.0
    %770 = vmatprep.subr.mxu0 0.0
    %771 = vmatpush1.msra.mxu0 0.0
    %772 = vmatprep.subr.mxu0 0.0
    %773 = vmatpush1.msra.mxu0 0.0
    %774 = vmatprep.subr.mxu0 0.0
    %775 = vmatpush1.msra.mxu0 0.0
    %776 = vmatprep.subr.mxu0 0.0
    %777 = vmatpush1.msra.mxu0 0.0
    %778 = vmatprep.subr.mxu0 0.0
    %779 = vmatpush1.msra.mxu0 0.0
    %780 = vmatprep.subr.mxu0 0.0
    %781 = vmatpush1.msra.mxu0 0.0
    %782 = vmatprep.subr.mxu0 0.0
    %783 = vmatpush1.msra.mxu0 0.0
    %784 = vmatprep.subr.mxu0 0.0
    %785 = vmatpush1.msra.mxu0 0.0
    %786 = vmatprep.subr.mxu0 0.0
    %787 = vmatpush1.msra.mxu0 0.0
    %788 = vmatprep.subr.mxu0 0.0
    %789 = vmatpush1.msra.mxu0 0.0
    %790 = vmatprep.mubr.f32.mxu0 0.0
    %791 = vmatmul.mubr.f32.gmra.mrb[0].mxu0 %v721
    %v792 = vpop.f32.mrb[0].mxu0
    %v793 = vadd.f32 0.0, %v792
    %v794 = vpop.f32.mrb[0].mxu0
    %795 = vmatprep.mubr.f32.mxu0 0.0
    %796 = vmatmul.mubr.f32.gmra.mrb[0].mxu0 %v724
    %v797 = vpop.f32.mrb[0].mxu0
    %v798 = vadd.f32 0.0, %v797
    %v799 = vpop.f32.mrb[0].mxu0
    %800 = vdwg.mxu0
    %v801 = vrcp.pop %v710
    %v802 = vrcp.pop %v713
    %v803 = vmul.f32 %v793, %v801
    %v804 = vmul.f32 %v798, %v802
    %805 = vrot.lane.b32.xlu0 %v197, 104
    %v806 = vpop.permute.xlu0 %805
    %807 = vrot.lane.b32.xlu0 %v202, 104
    %v808 = vpop.permute.xlu0 %807
    %809 = vrot.lane.b32.xlu0 %v197, 72
    %v810 = vpop.permute.xlu0 %809
    %811 = vrot.lane.b32.xlu0 %v202, 72
    %v812 = vpop.permute.xlu0 %811
    %v813 = vsel %vm211, %v806, 0
    %v815 = vsel %vm211, %v808, 0
    %v817 = vsel %vm211, %v810, 0
    %v819 = vsel %vm211, %v812, 0
    %821 = vmatprep.subr.mxu0 0.0
    %822 = vmatpush1.xpose.msra.mxu0 %v817
    %823 = vmatprep.subr.mxu0 0.0
    %824 = vmatpush1.xpose.msra.mxu0 %v819
    %825 = vmatprep.subr.mxu0 0.0
    %826 = vmatpush1.xpose.msra.mxu0 0.0
    %827 = vmatprep.subr.mxu0 0.0
    %828 = vmatpush1.xpose.msra.mxu0 0.0
    %829 = vmatprep.subr.mxu0 0.0
    %830 = vmatpush1.xpose.msra.mxu0 0.0
    %831 = vmatprep.subr.mxu0 0.0
    %832 = vmatpush1.xpose.msra.mxu0 0.0
    %833 = vmatprep.subr.mxu0 0.0
    %834 = vmatpush1.xpose.msra.mxu0 0.0
    %835 = vmatprep.subr.mxu0 0.0
    %836 = vmatpush1.xpose.msra.mxu0 0.0
    %837 = vmatprep.subr.mxu0 0.0
    %838 = vmatpush1.xpose.msra.mxu0 0.0
    %839 = vmatprep.subr.mxu0 0.0
    %840 = vmatpush1.xpose.msra.mxu0 0.0
    %841 = vmatprep.subr.mxu0 0.0
    %842 = vmatpush1.xpose.msra.mxu0 0.0
    %843 = vmatprep.subr.mxu0 0.0
    %844 = vmatpush1.xpose.msra.mxu0 0.0
    %845 = vmatprep.subr.mxu0 0.0
    %846 = vmatpush1.xpose.msra.mxu0 0.0
    %847 = vmatprep.subr.mxu0 0.0
    %848 = vmatpush1.xpose.msra.mxu0 0.0
    %849 = vmatprep.subr.mxu0 0.0
    %850 = vmatpush1.xpose.msra.mxu0 0.0
    %851 = vmatprep.subr.mxu0 0.0
    %852 = vmatpush1.xpose.msra.mxu0 0.0
    %853 = vmatprep.subr.mxu0 0.0
    %854 = vmatpush1.xpose.msra.mxu0 0.0
    %855 = vmatprep.subr.mxu0 0.0
    %856 = vmatpush1.xpose.msra.mxu0 0.0
    %857 = vmatprep.subr.mxu0 0.0
    %858 = vmatpush1.xpose.msra.mxu0 0.0
    %859 = vmatprep.subr.mxu0 0.0
    %860 = vmatpush1.xpose.msra.mxu0 0.0
    %861 = vmatprep.subr.mxu0 0.0
    %862 = vmatpush1.xpose.msra.mxu0 0.0
    %863 = vmatprep.subr.mxu0 0.0
    %864 = vmatpush1.xpose.msra.mxu0 0.0
    %865 = vmatprep.subr.mxu0 0.0
    %866 = vmatpush1.xpose.msra.mxu0 0.0
    %867 = vmatprep.subr.mxu0 0.0
    %868 = vmatpush1.xpose.msra.mxu0 0.0
    %869 = vmatprep.subr.mxu0 0.0
    %870 = vmatpush1.xpose.msra.mxu0 0.0
    %871 = vmatprep.subr.mxu0 0.0
    %872 = vmatpush1.xpose.msra.mxu0 0.0
    %873 = vmatprep.subr.mxu0 0.0
    %874 = vmatpush1.xpose.msra.mxu0 0.0
    %875 = vmatprep.subr.mxu0 0.0
    %876 = vmatpush1.xpose.msra.mxu0 0.0
    %877 = vmatprep.subr.mxu0 0.0
    %878 = vmatpush1.xpose.msra.mxu0 0.0
    %879 = vmatprep.subr.mxu0 0.0
    %880 = vmatpush1.xpose.msra.mxu0 0.0
    %881 = vmatprep.subr.mxu0 0.0
    %882 = vmatpush1.xpose.msra.mxu0 0.0
    %883 = vmatprep.subr.mxu0 0.0
    %884 = vmatpush1.xpose.msra.mxu0 0.0
    %885 = vmatprep.mubr.f32.mxu0 0.0
    %886 = vmatmul.mubr.f32.gmra.mrb[0].mxu0 %v813
    %v887 = vpop.f32.mrb[0].mxu0
    %v888 = vadd.f32 %v111, %v887
    %v889 = vpop.f32.mrb[0].mxu0
    %890 = vmatprep.mubr.f32.mxu0 0.0
    %891 = vmatmul.mubr.f32.gmra.mrb[0].mxu0 %v815
    %v892 = vpop.f32.mrb[0].mxu0
    %v893 = vadd.f32 %v112, %v892
    %v894 = vpop.f32.mrb[0].mxu0
    %895 = vdwg.mxu0
    %v896 = vsel %vm295, %v888, -inf
    %897 = vmax.xlane.f32.xlu0 %v896
    %v898 = vpop.xlane.xlu0 %897
    %v899 = vsel %vm295, %v893, -inf
    %900 = vmax.xlane.f32.xlu0 %v899
    %v901 = vpop.xlane.xlu0 %900
    %v902 = vsub.f32 %v888, %v898
    %v903 = vsub.f32 %v893, %v901
    %v904 = vmul.f32 %v902, 1.442695
    %v905 = vpow.pop %v904
    %v906 = vmul.f32 %v903, 1.442695
    %v907 = vpow.pop %v906
    %v908 = vsel %vm295, %v905, 0.0
    %909 = vadd.xlane.f32.xlu0 %v908
    %v910 = vpop.xlane.xlu0 %909
    %v911 = vsel %vm295, %v907, 0.0
    %912 = vadd.xlane.f32.xlu0 %v911
    %v913 = vpop.xlane.xlu0 %912
    %914 = vrot.lane.b32.xlu0 %v197, 40
    %v915 = vpop.permute.xlu0 %914
    %916 = vrot.lane.b32.xlu0 %v202, 40
    %v917 = vpop.permute.xlu0 %916
    %v921 = vsel %vm295, %v905, 0
    %v924 = vsel %vm295, %v907, 0
    %926 = vmatprep.subr.mxu0 0.0
    %927 = vmatpush1.msra.mxu0 %v915
    %928 = vmatprep.subr.mxu0 0.0
    %929 = vmatpush1.msra.mxu0 %v917
    %930 = vmatprep.subr.mxu0 0.0
    %931 = vmatpush1.msra.mxu0 0.0
    %932 = vmatprep.subr.mxu0 0.0
    %933 = vmatpush1.msra.mxu0 0.0
    %934 = vmatprep.subr.mxu0 0.0
    %935 = vmatpush1.msra.mxu0 0.0
    %936 = vmatprep.subr.mxu0 0.0
    %937 = vmatpush1.msra.mxu0 0.0
    %938 = vmatprep.subr.mxu0 0.0
    %939 = vmatpush1.msra.mxu0 0.0
    %940 = vmatprep.subr.mxu0 0.0
    %941 = vmatpush1.msra.mxu0 0.0
    %942 = vmatprep.subr.mxu0 0.0
    %943 = vmatpush1.msra.mxu0 0.0
    %944 = vmatprep.subr.mxu0 0.0
    %945 = vmatpush1.msra.mxu0 0.0
    %946 = vmatprep.subr.mxu0 0.0
    %947 = vmatpush1.msra.mxu0 0.0
    %948 = vmatprep.subr.mxu0 0.0
    %949 = vmatpush1.msra.mxu0 0.0
    %950 = vmatprep.subr.mxu0 0.0
    %951 = vmatpush1.msra.mxu0 0.0
    %952 = vmatprep.subr.mxu0 0.0
    %953 = vmatpush1.msra.mxu0 0.0
    %954 = vmatprep.subr.mxu0 0.0
    %955 = vmatpush1.msra.mxu0 0.0
    %956 = vmatprep.subr.mxu0 0.0
    %957 = vmatpush1.msra.mxu0 0.0
    %958 = vmatprep.subr.mxu0 0.0
    %959 = vmatpush1.msra.mxu0 0.0
    %960 = vmatprep.subr.mxu0 0.0
    %961 = vmatpush1.msra.mxu0 0.0
    %962 = vmatprep.subr.mxu0 0.0
    %963 = vmatpush1.msra.mxu0 0.0
    %964 = vmatprep.subr.mxu0 0.0
    %965 = vmatpush1.msra.mxu0 0.0
    %966 = vmatprep.subr.mxu0 0.0
    %967 = vmatpush1.msra.mxu0 0.0
    %968 = vmatprep.subr.mxu0 0.0
    %969 = vmatpush1.msra.mxu0 0.0
    %970 = vmatprep.subr.mxu0 0.0
    %971 = vmatpush1.msra.mxu0 0.0
    %972 = vmatprep.subr.mxu0 0.0
    %973 = vmatpush1.msra.mxu0 0.0
    %974 = vmatprep.subr.mxu0 0.0
    %975 = vmatpush1.msra.mxu0 0.0
    %976 = vmatprep.subr.mxu0 0.0
    %977 = vmatpush1.msra.mxu0 0.0
    %978 = vmatprep.subr.mxu0 0.0
    %979 = vmatpush1.msra.mxu0 0.0
    %980 = vmatprep.subr.mxu0 0.0
    %981 = vmatpush1.msra.mxu0 0.0
    %982 = vmatprep.subr.mxu0 0.0
    %983 = vmatpush1.msra.mxu0 0.0
    %984 = vmatprep.subr.mxu0 0.0
    %985 = vmatpush1.msra.mxu0 0.0
    %986 = vmatprep.subr.mxu0 0.0
    %987 = vmatpush1.msra.mxu0 0.0
    %988 = vmatprep.subr.mxu0 0.0
    %989 = vmatpush1.msra.mxu0 0.0
    %990 = vmatprep.mubr.f32.mxu0 0.0
    %991 = vmatmul.mubr.f32.gmra.mrb[0].mxu0 %v921
    %v992 = vpop.f32.mrb[0].mxu0
    %v993 = vadd.f32 0.0, %v992
    %v994 = vpop.f32.mrb[0].mxu0
    %995 = vmatprep.mubr.f32.mxu0 0.0
    %996 = vmatmul.mubr.f32.gmra.mrb[0].mxu0 %v924
    %v997 = vpop.f32.mrb[0].mxu0
    %v998 = vadd.f32 0.0, %v997
    %v999 = vpop.f32.mrb[0].mxu0
    %1000 = vdwg.mxu0
    %v1001 = vrcp.pop %v910
    %v1002 = vrcp.pop %v913
    %v1003 = vmul.f32 %v993, %v1001
    %v1004 = vmul.f32 %v998, %v1002
    %1007 = vrot.lane.b32.xlu0 %v603, 8
    %v1008 = vpop.permute.xlu0 %1007
    %1009 = vrot.lane.b32.xlu0 %v604, 8
    %v1010 = vpop.permute.xlu0 %1009
    %1015 = vrot.lane.b32.xlu0 %v803, 16
    %v1016 = vpop.permute.xlu0 %1015
    %1017 = vrot.lane.b32.xlu0 %v804, 16
    %v1018 = vpop.permute.xlu0 %1017
    %1023 = vrot.lane.b32.xlu0 %v1003, 24
    %v1024 = vpop.permute.xlu0 %1023
    %1025 = vrot.lane.b32.xlu0 %v1004, 24
    %v1026 = vpop.permute.xlu0 %1025
    %v1029 = vsel %vm211, %v403, %v1008
    %v1030 = vsel %vm211, %v404, %v1010
    %v1031 = vsel %vm295, %v1029, %v1016
    %v1032 = vsel %vm295, %v1030, %v1018
    %vm1033 = vcmask 195584
    %v1034 = vsel %vm1033, %v1031, %v1024
    %v1035 = vsel %vm1033, %v1032, %v1026
    %v1036 = vld [vmem:[%s6] sm:$0xff]
    %v1037 = vld [vmem:[%s6 + $0x8] sm:$0xff]
    %v1038 = vld [vmem:[%s6 + $0x10] sm:$0xff]
    %v1039 = vld [vmem:[%s6 + $0x18] sm:$0xff]
    %v1040 = vld [vmem:[%s7] sm:$0x1]
    %v1042 = vlaneseq
    %v1043 = vshrl.u32 %v1042, 7
    %v1044 = vsub.s32 0, %v1043
    %v1045 = vrot.slane %v1040, %v1044
    %v1048 = vsel %vm67, %v1034, 0
    %v1051 = vsel %vm67, %v1035, 0
    %1053 = vmatprep.subr.mxu0 0.0
    %1054 = vmatpush1.msra.mxu0 %v1036
    %1055 = vmatprep.subr.mxu0 0.0
    %1056 = vmatpush1.msra.mxu0 %v1037
    %1057 = vmatprep.subr.mxu0 0.0
    %1058 = vmatpush1.msra.mxu0 %v1038
    %1059 = vmatprep.subr.mxu0 0.0
    %1060 = vmatpush1.msra.mxu0 %v1039
    %1061 = vmatprep.subr.mxu0 0.0
    %1062 = vmatpush1.msra.mxu0 0.0
    %1063 = vmatprep.subr.mxu0 0.0
    %1064 = vmatpush1.msra.mxu0 0.0
    %1065 = vmatprep.subr.mxu0 0.0
    %1066 = vmatpush1.msra.mxu0 0.0
    %1067 = vmatprep.subr.mxu0 0.0
    %1068 = vmatpush1.msra.mxu0 0.0
    %1069 = vmatprep.subr.mxu0 0.0
    %1070 = vmatpush1.msra.mxu0 0.0
    %1071 = vmatprep.subr.mxu0 0.0
    %1072 = vmatpush1.msra.mxu0 0.0
    %1073 = vmatprep.subr.mxu0 0.0
    %1074 = vmatpush1.msra.mxu0 0.0
    %1075 = vmatprep.subr.mxu0 0.0
    %1076 = vmatpush1.msra.mxu0 0.0
    %1077 = vmatprep.subr.mxu0 0.0
    %1078 = vmatpush1.msra.mxu0 0.0
    %1079 = vmatprep.subr.mxu0 0.0
    %1080 = vmatpush1.msra.mxu0 0.0
    %1081 = vmatprep.subr.mxu0 0.0
    %1082 = vmatpush1.msra.mxu0 0.0
    %1083 = vmatprep.subr.mxu0 0.0
    %1084 = vmatpush1.msra.mxu0 0.0
    %1085 = vmatprep.subr.mxu0 0.0
    %1086 = vmatpush1.msra.mxu0 0.0
    %1087 = vmatprep.subr.mxu0 0.0
    %1088 = vmatpush1.msra.mxu0 0.0
    %1089 = vmatprep.subr.mxu0 0.0
    %1090 = vmatpush1.msra.mxu0 0.0
    %1091 = vmatprep.subr.mxu0 0.0
    %1092 = vmatpush1.msra.mxu0 0.0
    %1093 = vmatprep.subr.mxu0 0.0
    %1094 = vmatpush1.msra.mxu0 0.0
    %1095 = vmatprep.subr.mxu0 0.0
    %1096 = vmatpush1.msra.mxu0 0.0
    %1097 = vmatprep.subr.mxu0 0.0
    %1098 = vmatpush1.msra.mxu0 0.0
    %1099 = vmatprep.subr.mxu0 0.0
    %1100 = vmatpush1.msra.mxu0 0.0
    %1101 = vmatprep.subr.mxu0 0.0
    %1102 = vmatpush1.msra.mxu0 0.0
    %1103 = vmatprep.subr.mxu0 0.0
    %1104 = vmatpush1.msra.mxu0 0.0
    %1105 = vmatprep.subr.mxu0 0.0
    %1106 = vmatpush1.msra.mxu0 0.0
    %1107 = vmatprep.subr.mxu0 0.0
    %1108 = vmatpush1.msra.mxu0 0.0
    %1109 = vmatprep.subr.mxu0 0.0
    %1110 = vmatpush1.msra.mxu0 0.0
    %1111 = vmatprep.subr.mxu0 0.0
    %1112 = vmatpush1.msra.mxu0 0.0
    %1113 = vmatprep.subr.mxu0 0.0
    %1114 = vmatpush1.msra.mxu0 0.0
    %1115 = vmatprep.subr.mxu0 0.0
    %1116 = vmatpush1.msra.mxu0 0.0
    %1117 = vmatprep.mubr.f32.mxu0 0.0
    %1118 = vmatmul.mubr.f32.gmra.mrb[0].mxu0 %v1048
    %v1119 = vpop.f32.mrb[0].mxu0
    %v1120 = vadd.f32 %v1045, %v1119
    %v1121 = vpop.f32.mrb[0].mxu0
    %1122 = vmatprep.mubr.f32.mxu0 0.0
    %1123 = vmatmul.mubr.f32.gmra.mrb[0].mxu0 %v1051
    %v1124 = vpop.f32.mrb[0].mxu0
    %v1125 = vadd.f32 %v1045, %v1124
    %v1126 = vpop.f32.mrb[0].mxu0
    %1127 = vdwg.mxu0
    %v1128 = vadd.f32 %v1120, %v109
    %v1129 = vadd.f32 %v1125, %v110
    %v1130 = vld [vmem:[%s8] sm:$0x1]
    %v1131 = vld [vmem:[%s9] sm:$0x1]
    %v1132 = vsel %vm67, %v1128, 0.0
    %1133 = vadd.xlane.f32.xlu0 %v1132
    %v1134 = vpop.xlane.xlu0 %1133
    %v1135 = vsel %vm67, %v1129, 0.0
    %1136 = vadd.xlane.f32.xlu0 %v1135
    %v1137 = vpop.xlane.xlu0 %1136
    %v1138 = vmul.f32 %v1134, %v74
    %v1139 = vmul.f32 %v1137, %v74
    %v1140 = vsub.f32 %v1128, %v1138
    %v1141 = vsub.f32 %v1129, %v1139
    %v1142 = vmul.f32 %v1140, %v1140
    %v1143 = vmul.f32 %v1141, %v1141
    %v1144 = vsel %vm67, %v1142, 0.0
    %1145 = vadd.xlane.f32.xlu0 %v1144
    %v1146 = vpop.xlane.xlu0 %1145
    %v1147 = vsel %vm67, %v1143, 0.0
    %1148 = vadd.xlane.f32.xlu0 %v1147
    %v1149 = vpop.xlane.xlu0 %1148
    %v1150 = vmul.f32 %v1146, %v74
    %v1151 = vmul.f32 %v1149, %v74
    %v1152 = vadd.f32 %v1150, 1e-12
    %v1153 = vadd.f32 %v1151, 1e-12
    %v1154 = vrsqrt.pop %v1152
    %v1155 = vrsqrt.pop %v1153
    %v1156 = vmul.f32 %v1140, %v1154
    %v1157 = vmul.f32 %v1141, %v1155
    %v1159 = vlaneseq
    %v1160 = vshrl.u32 %v1159, 7
    %v1161 = vsub.s32 0, %v1160
    %v1162 = vrot.slane %v1130, %v1161
    %v1164 = vmul.f32 %v1156, %v1162
    %v1165 = vmul.f32 %v1157, %v1162
    %v1167 = vlaneseq
    %v1168 = vshrl.u32 %v1167, 7
    %v1169 = vsub.s32 0, %v1168
    %v1170 = vrot.slane %v1131, %v1169
    %v1172 = vadd.f32 %v1164, %v1170
    %v1173 = vadd.f32 %v1165, %v1170
    %v1174 = vld [vmem:[%s10] sm:$0xff]
    %v1175 = vld [vmem:[%s10 + $0x8] sm:$0xff]
    %v1176 = vld [vmem:[%s10 + $0x10] sm:$0xff]
    %v1177 = vld [vmem:[%s10 + $0x18] sm:$0xff]
    %v1178 = vld [vmem:[%s11] sm:$0x1]
    %v1180 = vlaneseq
    %v1181 = vshrl.u32 %v1180, 7
    %v1182 = vsub.s32 0, %v1181
    %v1183 = vrot.slane %v1178, %v1182
    %v1186 = vsel %vm67, %v1172, 0
    %v1189 = vsel %vm67, %v1173, 0
    %1191 = vmatprep.subr.mxu0 0.0
    %1192 = vmatpush1.msra.mxu0 %v1174
    %1193 = vmatprep.subr.mxu0 0.0
    %1194 = vmatpush1.msra.mxu0 %v1175
    %1195 = vmatprep.subr.mxu0 0.0
    %1196 = vmatpush1.msra.mxu0 %v1176
    %1197 = vmatprep.subr.mxu0 0.0
    %1198 = vmatpush1.msra.mxu0 %v1177
    %1199 = vmatprep.subr.mxu0 0.0
    %1200 = vmatpush1.msra.mxu0 0.0
    %1201 = vmatprep.subr.mxu0 0.0
    %1202 = vmatpush1.msra.mxu0 0.0
    %1203 = vmatprep.subr.mxu0 0.0
    %1204 = vmatpush1.msra.mxu0 0.0
    %1205 = vmatprep.subr.mxu0 0.0
    %1206 = vmatpush1.msra.mxu0 0.0
    %1207 = vmatprep.subr.mxu0 0.0
    %1208 = vmatpush1.msra.mxu0 0.0
    %1209 = vmatprep.subr.mxu0 0.0
    %1210 = vmatpush1.msra.mxu0 0.0
    %1211 = vmatprep.subr.mxu0 0.0
    %1212 = vmatpush1.msra.mxu0 0.0
    %1213 = vmatprep.subr.mxu0 0.0
    %1214 = vmatpush1.msra.mxu0 0.0
    %1215 = vmatprep.subr.mxu0 0.0
    %1216 = vmatpush1.msra.mxu0 0.0
    %1217 = vmatprep.subr.mxu0 0.0
    %1218 = vmatpush1.msra.mxu0 0.0
    %1219 = vmatprep.subr.mxu0 0.0
    %1220 = vmatpush1.msra.mxu0 0.0
    %1221 = vmatprep.subr.mxu0 0.0
    %1222 = vmatpush1.msra.mxu0 0.0
    %1223 = vmatprep.subr.mxu0 0.0
    %1224 = vmatpush1.msra.mxu0 0.0
    %1225 = vmatprep.subr.mxu0 0.0
    %1226 = vmatpush1.msra.mxu0 0.0
    %1227 = vmatprep.subr.mxu0 0.0
    %1228 = vmatpush1.msra.mxu0 0.0
    %1229 = vmatprep.subr.mxu0 0.0
    %1230 = vmatpush1.msra.mxu0 0.0
    %1231 = vmatprep.subr.mxu0 0.0
    %1232 = vmatpush1.msra.mxu0 0.0
    %1233 = vmatprep.subr.mxu0 0.0
    %1234 = vmatpush1.msra.mxu0 0.0
    %1235 = vmatprep.subr.mxu0 0.0
    %1236 = vmatpush1.msra.mxu0 0.0
    %1237 = vmatprep.subr.mxu0 0.0
    %1238 = vmatpush1.msra.mxu0 0.0
    %1239 = vmatprep.subr.mxu0 0.0
    %1240 = vmatpush1.msra.mxu0 0.0
    %1241 = vmatprep.subr.mxu0 0.0
    %1242 = vmatpush1.msra.mxu0 0.0
    %1243 = vmatprep.subr.mxu0 0.0
    %1244 = vmatpush1.msra.mxu0 0.0
    %1245 = vmatprep.subr.mxu0 0.0
    %1246 = vmatpush1.msra.mxu0 0.0
    %1247 = vmatprep.subr.mxu0 0.0
    %1248 = vmatpush1.msra.mxu0 0.0
    %1249 = vmatprep.subr.mxu0 0.0
    %1250 = vmatpush1.msra.mxu0 0.0
    %1251 = vmatprep.subr.mxu0 0.0
    %1252 = vmatpush1.msra.mxu0 0.0
    %1253 = vmatprep.subr.mxu0 0.0
    %1254 = vmatpush1.msra.mxu0 0.0
    %1255 = vmatprep.mubr.f32.mxu0 0.0
    %1256 = vmatmul.mubr.f32.gmra.mrb[0].mxu0 %v1186
    %v1257 = vpop.f32.mrb[0].mxu0
    %v1258 = vadd.f32 %v1183, %v1257
    %v1259 = vpop.f32.mrb[0].mxu0
    %1260 = vmatprep.mubr.f32.mxu0 0.0
    %1261 = vmatmul.mubr.f32.gmra.mrb[0].mxu0 %v1189
    %v1262 = vpop.f32.mrb[0].mxu0
    %v1263 = vadd.f32 %v1183, %v1262
    %v1264 = vpop.f32.mrb[0].mxu0
    %1265 = vdwg.mxu0
    %v1266 = vmul.f32 %v1258, %v1258
    %v1267 = vmul.f32 %v1263, %v1263
    %v1268 = vmul.f32 %v1258, %v1266
    %v1269 = vmul.f32 %v1263, %v1267
    %v1270 = vmul.f32 %v1268, 0.044715
    %v1271 = vmul.f32 %v1269, 0.044715
    %v1272 = vadd.f32 %v1258, %v1270
    %v1273 = vadd.f32 %v1263, %v1271
    %v1274 = vmul.f32 %v1272, 0.7978846
    %v1275 = vmul.f32 %v1273, 0.7978846
    %v1276 = vtanh.pop %v1274
    %v1277 = vtanh.pop %v1275
    %v1278 = vadd.f32 %v1276, 1.0
    %v1279 = vadd.f32 %v1277, 1.0
    %v1280 = vmul.f32 %v1278, 0.5
    %v1281 = vmul.f32 %v1279, 0.5
    %v1282 = vmul.f32 %v1258, %v1280
    %v1283 = vmul.f32 %v1263, %v1281
    %v1284 = vld [vmem:[%s12] sm:$0xff]
    %v1285 = vld [vmem:[%s12 + $0x8] sm:$0xff]
    %v1286 = vld [vmem:[%s12 + $0x10] sm:$0xff]
    %v1287 = vld [vmem:[%s12 + $0x18] sm:$0xff]
    %v1288 = vld [vmem:[%s12 + $0x20] sm:$0xff]
    %v1289 = vld [vmem:[%s12 + $0x28] sm:$0xff]
    %v1290 = vld [vmem:[%s12 + $0x30] sm:$0xff]
    %v1291 = vld [vmem:[%s12 + $0x38] sm:$0xff]
    %v1292 = vld [vmem:[%s13] sm:$0x1]
    %v1294 = vlaneseq
    %v1295 = vshrl.u32 %v1294, 7
    %v1296 = vsub.s32 0, %v1295
    %v1297 = vrot.slane %v1292, %v1296
    %vm1299 = vcmask 523264
    %v1301 = vsel %vm1299, %v1282, 0
    %v1304 = vsel %vm1299, %v1283, 0
    %1306 = vmatprep.subr.mxu0 0.0
    %1307 = vmatpush1.msra.mxu0 %v1284
    %1308 = vmatprep.subr.mxu0 0.0
    %1309 = vmatpush1.msra.mxu0 %v1285
    %1310 = vmatprep.subr.mxu0 0.0
    %1311 = vmatpush1.msra.mxu0 %v1286
    %1312 = vmatprep.subr.mxu0 0.0
    %1313 = vmatpush1.msra.mxu0 %v1287
    %1314 = vmatprep.subr.mxu0 0.0
    %1315 = vmatpush1.msra.mxu0 %v1288
    %1316 = vmatprep.subr.mxu0 0.0
    %1317 = vmatpush1.msra.mxu0 %v1289
    %1318 = vmatprep.subr.mxu0 0.0
    %1319 = vmatpush1.msra.mxu0 %v1290
    %1320 = vmatprep.subr.mxu0 0.0
    %1321 = vmatpush1.msra.mxu0 %v1291
    %1322 = vmatprep.subr.mxu0 0.0
    %1323 = vmatpush1.msra.mxu0 0.0
    %1324 = vmatprep.subr.mxu0 0.0
    %1325 = vmatpush1.msra.mxu0 0.0
    %1326 = vmatprep.subr.mxu0 0.0
    %1327 = vmatpush1.msra.mxu0 0.0
    %1328 = vmatprep.subr.mxu0 0.0
    %1329 = vmatpush1.msra.mxu0 0.0
    %1330 = vmatprep.subr.mxu0 0.0
    %1331 = vmatpush1.msra.mxu0 0.0
    %1332 = vmatprep.subr.mxu0 0.0
    %1333 = vmatpush1.msra.mxu0 0.0
    %1334 = vmatprep.subr.mxu0 0.0
    %1335 = vmatpush1.msra.mxu0 0.0
    %1336 = vmatprep.subr.mxu0 0.0
    %1337 = vmatpush1.msra.mxu0 0.0
    %1338 = vmatprep.subr.mxu0 0.0
    %1339 = vmatpush1.msra.mxu0 0.0
    %1340 = vmatprep.subr.mxu0 0.0
    %1341 = vmatpush1.msra.mxu0 0.0
    %1342 = vmatprep.subr.mxu0 0.0
    %1343 = vmatpush1.msra.mxu0 0.0
    %1344 = vmatprep.subr.mxu0 0.0
    %1345 = vmatpush1.msra.mxu0 0.0
    %1346 = vmatprep.subr.mxu0 0.0
    %1347 = vmatpush1.msra.mxu0 0.0
    %1348 = vmatprep.subr.mxu0 0.0
    %1349 = vmatpush1.msra.mxu0 0.0
    %1350 = vmatprep.subr.mxu0 0.0
    %1351 = vmatpush1.msra.mxu0 0.0
    %1352 = vmatprep.subr.mxu0 0.0
    %1353 = vmatpush1.msra.mxu0 0.0
    %1354 = vmatprep.subr.mxu0 0.0
    %1355 = vmatpush1.msra.mxu0 0.0
    %1356 = vmatprep.subr.mxu0 0.0
    %1357 = vmatpush1.msra.mxu0 0.0
    %1358 = vmatprep.subr.mxu0 0.0
    %1359 = vmatpush1.msra.mxu0 0.0
    %1360 = vmatprep.subr.mxu0 0.0
    %1361 = vmatpush1.msra.mxu0 0.0
    %1362 = vmatprep.subr.mxu0 0.0
    %1363 = vmatpush1.msra.mxu0 0.0
    %1364 = vmatprep.subr.mxu0 0.0
    %1365 = vmatpush1.msra.mxu0 0.0
    %1366 = vmatprep.subr.mxu0 0.0
    %1367 = vmatpush1.msra.mxu0 0.0
    %1368 = vmatprep.subr.mxu0 0.0
    %1369 = vmatpush1.msra.mxu0 0.0
    %1370 = vmatprep.mubr.f32.mxu0 0.0
    %1371 = vmatmul.mubr.f32.gmra.mrb[0].mxu0 %v1301
    %v1372 = vpop.f32.mrb[0].mxu0
    %v1373 = vadd.f32 %v1297, %v1372
    %v1374 = vpop.f32.mrb[0].mxu0
    %1375 = vmatprep.mubr.f32.mxu0 0.0
    %1376 = vmatmul.mubr.f32.gmra.mrb[0].mxu0 %v1304
    %v1377 = vpop.f32.mrb[0].mxu0
    %v1378 = vadd.f32 %v1297, %v1377
    %v1379 = vpop.f32.mrb[0].mxu0
    %1380 = vdwg.mxu0
    %v1381 = vadd.f32 %v1373, %v1172
    %v1382 = vadd.f32 %v1378, %v1173
    %v1383 = vld [vmem:[%s14] sm:$0x1]
    %v1384 = vld [vmem:[%s15] sm:$0x1]
    %v1385 = vsel %vm67, %v1381, 0.0
    %1386 = vadd.xlane.f32.xlu0 %v1385
    %v1387 = vpop.xlane.xlu0 %1386
    %v1388 = vsel %vm67, %v1382, 0.0
    %1389 = vadd.xlane.f32.xlu0 %v1388
    %v1390 = vpop.xlane.xlu0 %1389
    %v1391 = vmul.f32 %v1387, %v74
    %v1392 = vmul.f32 %v1390, %v74
    %v1393 = vsub.f32 %v1381, %v1391
    %v1394 = vsub.f32 %v1382, %v1392
    %v1395 = vmul.f32 %v1393, %v1393
    %v1396 = vmul.f32 %v1394, %v1394
    %v1397 = vsel %vm67, %v1395, 0.0
    %1398 = vadd.xlane.f32.xlu0 %v1397
    %v1399 = vpop.xlane.xlu0 %1398
    %v1400 = vsel %vm67, %v1396, 0.0
    %1401 = vadd.xlane.f32.xlu0 %v1400
    %v1402 = vpop.xlane.xlu0 %1401
    %v1403 = vmul.f32 %v1399, %v74
    %v1404 = vmul.f32 %v1402, %v74
    %v1405 = vadd.f32 %v1403, 1e-12
    %v1406 = vadd.f32 %v1404, 1e-12
    %v1407 = vrsqrt.pop %v1405
    %v1408 = vrsqrt.pop %v1406
    %v1409 = vmul.f32 %v1393, %v1407
    %v1410 = vmul.f32 %v1394, %v1408
    %v1412 = vlaneseq
    %v1413 = vshrl.u32 %v1412, 7
    %v1414 = vsub.s32 0, %v1413
    %v1415 = vrot.slane %v1383, %v1414
    %v1417 = vmul.f32 %v1409, %v1415
    %v1418 = vmul.f32 %v1410, %v1415
    %v1420 = vlaneseq
    %v1421 = vshrl.u32 %v1420, 7
    %v1422 = vsub.s32 0, %v1421
    %v1423 = vrot.slane %v1384, %v1422
    %v1425 = vadd.f32 %v1417, %v1423
    %v1426 = vadd.f32 %v1418, %v1423
    %s1427 = scalar_lea.vmem %s4, 32
    %v1428 = vld [vmem:[%s1427] sm:$0xff]
    %v1429 = vld [vmem:[%s1427 + $0x8] sm:$0xff]
    %v1430 = vld [vmem:[%s1427 + $0x10] sm:$0xff]
    %v1431 = vld [vmem:[%s1427 + $0x18] sm:$0xff]
    %s1432 = scalar_lea.vmem %s5, 1
    %v1433 = vld [vmem:[%s1432] sm:$0x1]
    %v1435 = vlaneseq
    %v1436 = vshrl.u32 %v1435, 7
    %v1437 = vsub.s32 0, %v1436
    %v1438 = vrot.slane %v1433, %v1437
    %v1441 = vsel %vm67, %v1425, 0
    %v1444 = vsel %vm67, %v1426, 0
    %1446 = vmatprep.subr.mxu0 0.0
    %1447 = vmatpush1.msra.mxu0 %v1428
    %1448 = vmatprep.subr.mxu0 0.0
    %1449 = vmatpush1.msra.mxu0 %v1429
    %1450 = vmatprep.subr.mxu0 0.0
    %1451 = vmatpush1.msra.mxu0 %v1430
    %1452 = vmatprep.subr.mxu0 0.0
    %1453 = vmatpush1.msra.mxu0 %v1431
    %1454 = vmatprep.subr.mxu0 0.0
    %1455 = vmatpush1.msra.mxu0 0.0
    %1456 = vmatprep.subr.mxu0 0.0
    %1457 = vmatpush1.msra.mxu0 0.0
    %1458 = vmatprep.subr.mxu0 0.0
    %1459 = vmatpush1.msra.mxu0 0.0
    %1460 = vmatprep.subr.mxu0 0.0
    %1461 = vmatpush1.msra.mxu0 0.0
    %1462 = vmatprep.subr.mxu0 0.0
    %1463 = vmatpush1.msra.mxu0 0.0
    %1464 = vmatprep.subr.mxu0 0.0
    %1465 = vmatpush1.msra.mxu0 0.0
    %1466 = vmatprep.subr.mxu0 0.0
    %1467 = vmatpush1.msra.mxu0 0.0
    %1468 = vmatprep.subr.mxu0 0.0
    %1469 = vmatpush1.msra.mxu0 0.0
    %1470 = vmatprep.subr.mxu0 0.0
    %1471 = vmatpush1.msra.mxu0 0.0
    %1472 = vmatprep.subr.mxu0 0.0
    %1473 = vmatpush1.msra.mxu0 0.0
    %1474 = vmatprep.subr.mxu0 0.0
    %1475 = vmatpush1.msra.mxu0 0.0
    %1476 = vmatprep.subr.mxu0 0.0
    %1477 = vmatpush1.msra.mxu0 0.0
    %1478 = vmatprep.subr.mxu0 0.0
    %1479 = vmatpush1.msra.mxu0 0.0
    %1480 = vmatprep.subr.mxu0 0.0
    %1481 = vmatpush1.msra.mxu0 0.0
    %1482 = vmatprep.subr.mxu0 0.0
    %1483 = vmatpush1.msra.mxu0 0.0
    %1484 = vmatprep.subr.mxu0 0.0
    %1485 = vmatpush1.msra.mxu0 0.0
    %1486 = vmatprep.subr.mxu0 0.0
    %1487 = vmatpush1.msra.mxu0 0.0
    %1488 = vmatprep.subr.mxu0 0.0
    %1489 = vmatpush1.msra.mxu0 0.0
    %1490 = vmatprep.subr.mxu0 0.0
    %1491 = vmatpush1.msra.mxu0 0.0
    %1492 = vmatprep.subr.mxu0 0.0
    %1493 = vmatpush1.msra.mxu0 0.0
    %1494 = vmatprep.subr.mxu0 0.0
    %1495 = vmatpush1.msra.mxu0 0.0
    %1496 = vmatprep.subr.mxu0 0.0
    %1497 = vmatpush1.msra.mxu0 0.0
    %1498 = vmatprep.subr.mxu0 0.0
    %1499 = vmatpush1.msra.mxu0 0.0
    %1500 = vmatprep.subr.mxu0 0.0
    %1501 = vmatpush1.msra.mxu0 0.0
    %1502 = vmatprep.subr.mxu0 0.0
    %1503 = vmatpush1.msra.mxu0 0.0
    %1504 = vmatprep.subr.mxu0 0.0
    %1505 = vmatpush1.msra.mxu0 0.0
    %1506 = vmatprep.subr.mxu0 0.0
    %1507 = vmatpush1.msra.mxu0 0.0
    %1508 = vmatprep.subr.mxu0 0.0
    %1509 = vmatpush1.msra.mxu0 0.0
    %1510 = vmatprep.mubr.f32.mxu0 0.0
    %1511 = vmatmul.mubr.f32.gmra.mrb[0].mxu0 %v1441
    %v1512 = vpop.f32.mrb[0].mxu0
    %v1513 = vadd.f32 %v1438, %v1512
    %v1514 = vpop.f32.mrb[0].mxu0
    %1515 = vmatprep.mubr.f32.mxu0 0.0
    %1516 = vmatmul.mubr.f32.gmra.mrb[0].mxu0 %v1444
    %v1517 = vpop.f32.mrb[0].mxu0
    %v1518 = vadd.f32 %v1438, %v1517
    %v1519 = vpop.f32.mrb[0].mxu0
    %1520 = vdwg.mxu0
    %1523 = vrot.lane.b32.xlu0 %v1513, 96
    %v1524 = vpop.permute.xlu0 %1523
    %1525 = vrot.lane.b32.xlu0 %v1518, 96
    %v1526 = vpop.permute.xlu0 %1525
    %v1527 = vsel %vm211, %v1513, 0
    %v1529 = vsel %vm211, %v1518, 0
    %v1531 = vsel %vm211, %v1524, 0
    %v1533 = vsel %vm211, %v1526, 0
    %1535 = vmatprep.subr.mxu0 0.0
    %1536 = vmatpush1.xpose.msra.mxu0 %v1531
    %1537 = vmatprep.subr.mxu0 0.0
    %1538 = vmatpush1.xpose.msra.mxu0 %v1533
    %1539 = vmatprep.subr.mxu0 0.0
    %1540 = vmatpush1.xpose.msra.mxu0 0.0
    %1541 = vmatprep.subr.mxu0 0.0
    %1542 = vmatpush1.xpose.msra.mxu0 0.0
    %1543 = vmatprep.subr.mxu0 0.0
    %1544 = vmatpush1.xpose.msra.mxu0 0.0
    %1545 = vmatprep.subr.mxu0 0.0
    %1546 = vmatpush1.xpose.msra.mxu0 0.0
    %1547 = vmatprep.subr.mxu0 0.0
    %1548 = vmatpush1.xpose.msra.mxu0 0.0
    %1549 = vmatprep.subr.mxu0 0.0
    %1550 = vmatpush1.xpose.msra.mxu0 0.0
    %1551 = vmatprep.subr.mxu0 0.0
    %1552 = vmatpush1.xpose.msra.mxu0 0.0
    %1553 = vmatprep.subr.mxu0 0.0
    %1554 = vmatpush1.xpose.msra.mxu0 0.0
    %1555 = vmatprep.subr.mxu0 0.0
    %1556 = vmatpush1.xpose.msra.mxu0 0.0
    %1557 = vmatprep.subr.mxu0 0.0
    %1558 = vmatpush1.xpose.msra.mxu0 0.0
    %1559 = vmatprep.subr.mxu0 0.0
    %1560 = vmatpush1.xpose.msra.mxu0 0.0
    %1561 = vmatprep.subr.mxu0 0.0
    %1562 = vmatpush1.xpose.msra.mxu0 0.0
    %1563 = vmatprep.subr.mxu0 0.0
    %1564 = vmatpush1.xpose.msra.mxu0 0.0
    %1565 = vmatprep.subr.mxu0 0.0
    %1566 = vmatpush1.xpose.msra.mxu0 0.0
    %1567 = vmatprep.subr.mxu0 0.0
    %1568 = vmatpush1.xpose.msra.mxu0 0.0
    %1569 = vmatprep.subr.mxu0 0.0
    %1570 = vmatpush1.xpose.msra.mxu0 0.0
    %1571 = vmatprep.subr.mxu0 0.0
    %1572 = vmatpush1.xpose.msra.mxu0 0.0
    %1573 = vmatprep.subr.mxu0 0.0
    %1574 = vmatpush1.xpose.msra.mxu0 0.0
    %1575 = vmatprep.subr.mxu0 0.0
    %1576 = vmatpush1.xpose.msra.mxu0 0.0
    %1577 = vmatprep.subr.mxu0 0.0
    %1578 = vmatpush1.xpose.msra.mxu0 0.0
    %1579 = vmatprep.subr.mxu0 0.0
    %1580 = vmatpush1.xpose.msra.mxu0 0.0
    %1581 = vmatprep.subr.mxu0 0.0
    %1582 = vmatpush1.xpose.msra.mxu0 0.0
    %1583 = vmatprep.subr.mxu0 0.0
    %1584 = vmatpush1.xpose.msra.mxu0 0.0
    %1585 = vmatprep.subr.mxu0 0.0
    %1586 = vmatpush1.xpose.msra.mxu0 0.0
    %1587 = vmatprep.subr.mxu0 0.0
    %1588 = vmatpush1.xpose.msra.mxu0 0.0
    %1589 = vmatprep.subr.mxu0 0.0
    %1590 = vmatpush1.xpose.msra.mxu0 0.0
    %1591 = vmatprep.subr.mxu0 0.0
    %1592 = vmatpush1.xpose.msra.mxu0 0.0
    %1593 = vmatprep.subr.mxu0 0.0
    %1594 = vmatpush1.xpose.msra.mxu0 0.0
    %1595 = vmatprep.subr.mxu0 0.0
    %1596 = vmatpush1.xpose.msra.mxu0 0.0
    %1597 = vmatprep.subr.mxu0 0.0
    %1598 = vmatpush1.xpose.msra.mxu0 0.0
    %1599 = vmatprep.mubr.f32.mxu0 0.0
    %1600 = vmatmul.mubr.f32.gmra.mrb[0].mxu0 %v1527
    %v1601 = vpop.f32.mrb[0].mxu0
    %v1602 = vadd.f32 %v111, %v1601
    %v1603 = vpop.f32.mrb[0].mxu0
    %1604 = vmatprep.mubr.f32.mxu0 0.0
    %1605 = vmatmul.mubr.f32.gmra.mrb[0].mxu0 %v1529
    %v1606 = vpop.f32.mrb[0].mxu0
    %v1607 = vadd.f32 %v112, %v1606
    %v1608 = vpop.f32.mrb[0].mxu0
    %1609 = vdwg.mxu0
    %v1610 = vsel %vm295, %v1602, -inf
    %1611 = vmax.xlane.f32.xlu0 %v1610
    %v1612 = vpop.xlane.xlu0 %1611
    %v1613 = vsel %vm295, %v1607, -inf
    %1614 = vmax.xlane.f32.xlu0 %v1613
    %v1615 = vpop.xlane.xlu0 %1614
    %v1616 = vsub.f32 %v1602, %v1612
    %v1617 = vsub.f32 %v1607, %v1615
    %v1618 = vmul.f32 %v1616, 1.442695
    %v1619 = vpow.pop %v1618
    %v1620 = vmul.f32 %v1617, 1.442695
    %v1621 = vpow.pop %v1620
    %v1622 = vsel %vm295, %v1619, 0.0
    %1623 = vadd.xlane.f32.xlu0 %v1622
    %v1624 = vpop.xlane.xlu0 %1623
    %v1625 = vsel %vm295, %v1621, 0.0
    %1626 = vadd.xlane.f32.xlu0 %v1625
    %v1627 = vpop.xlane.xlu0 %1626
    %1628 = vrot.lane.b32.xlu0 %v1513, 64
    %v1629 = vpop.permute.xlu0 %1628
    %1630 = vrot.lane.b32.xlu0 %v1518, 64
    %v1631 = vpop.permute.xlu0 %1630
    %v1635 = vsel %vm295, %v1619, 0
    %v1638 = vsel %vm295, %v1621, 0
    %1640 = vmatprep.subr.mxu0 0.0
    %1641 = vmatpush1.msra.mxu0 %v1629
    %1642 = vmatprep.subr.mxu0 0.0
    %1643 = vmatpush1.msra.mxu0 %v1631
    %1644 = vmatprep.subr.mxu0 0.0
    %1645 = vmatpush1.msra.mxu0 0.0
    %1646 = vmatprep.subr.mxu0 0.0
    %1647 = vmatpush1.msra.mxu0 0.0
    %1648 = vmatprep.subr.mxu0 0.0
    %1649 = vmatpush1.msra.mxu0 0.0
    %1650 = vmatprep.subr.mxu0 0.0
    %1651 = vmatpush1.msra.mxu0 0.0
    %1652 = vmatprep.subr.mxu0 0.0
    %1653 = vmatpush1.msra.mxu0 0.0
    %1654 = vmatprep.subr.mxu0 0.0
    %1655 = vmatpush1.msra.mxu0 0.0
    %1656 = vmatprep.subr.mxu0 0.0
    %1657 = vmatpush1.msra.mxu0 0.0
    %1658 = vmatprep.subr.mxu0 0.0
    %1659 = vmatpush1.msra.mxu0 0.0
    %1660 = vmatprep.subr.mxu0 0.0
    %1661 = vmatpush1.msra.mxu0 0.0
    %1662 = vmatprep.subr.mxu0 0.0
    %1663 = vmatpush1.msra.mxu0 0.0
    %1664 = vmatprep.subr.mxu0 0.0
    %1665 = vmatpush1.msra.mxu0 0.0
    %1666 = vmatprep.subr.mxu0 0.0
    %1667 = vmatpush1.msra.mxu0 0.0
    %1668 = vmatprep.subr.mxu0 0.0
    %1669 = vmatpush1.msra.mxu0 0.0
    %1670 = vmatprep.subr.mxu0 0.0
    %1671 = vmatpush1.msra.mxu0 0.0
    %1672 = vmatprep.subr.mxu0 0.0
    %1673 = vmatpush1.msra.mxu0 0.0
    %1674 = vmatprep.subr.mxu0 0.0
    %1675 = vmatpush1.msra.mxu0 0.0
    %1676 = vmatprep.subr.mxu0 0.0
    %1677 = vmatpush1.msra.mxu0 0.0
    %1678 = vmatprep.subr.mxu0 0.0
    %1679 = vmatpush1.msra.mxu0 0.0
    %1680 = vmatprep.subr.mxu0 0.0
    %1681 = vmatpush1.msra.mxu0 0.0
    %1682 = vmatprep.subr.mxu0 0.0
    %1683 = vmatpush1.msra.mxu0 0.0
    %1684 = vmatprep.subr.mxu0 0.0
    %1685 = vmatpush1.msra.mxu0 0.0
    %1686 = vmatprep.subr.mxu0 0.0
    %1687 = vmatpush1.msra.mxu0 0.0
    %1688 = vmatprep.subr.mxu0 0.0
    %1689 = vmatpush1.msra.mxu0 0.0
    %1690 = vmatprep.subr.mxu0 0.0
    %1691 = vmatpush1.msra.mxu0 0.0
    %1692 = vmatprep.subr.mxu0 0.0
    %1693 = vmatpush1.msra.mxu0 0.0
    %1694 = vmatprep.subr.mxu0 0.0
    %1695 = vmatpush1.msra.mxu0 0.0
    %1696 = vmatprep.subr.mxu0 0.0
    %1697 = vmatpush1.msra.mxu0 0.0
    %1698 = vmatprep.subr.mxu0 0.0
    %1699 = vmatpush1.msra.mxu0 0.0
    %1700 = vmatprep.subr.mxu0 0.0
    %1701 = vmatpush1.msra.mxu0 0.0
    %1702 = vmatprep.subr.mxu0 0.0
    %1703 = vmatpush1.msra.mxu0 0.0
    %1704 = vmatprep.mubr.f32.mxu0 0.0
    %1705 = vmatmul.mubr.f32.gmra.mrb[0].mxu0 %v1635
    %v1706 = vpop.f32.mrb[0].mxu0
    %v1707 = vadd.f32 0.0, %v1706
    %v1708 = vpop.f32.mrb[0].mxu0
    %1709 = vmatprep.mubr.f32.mxu0 0.0
    %1710 = vmatmul.mubr.f32.gmra.mrb[0].mxu0 %v1638
    %v1711 = vpop.f32.mrb[0].mxu0
    %v1712 = vadd.f32 0.0, %v1711
    %v1713 = vpop.f32.mrb[0].mxu0
    %1714 = vdwg.mxu0
    %v1715 = vrcp.pop %v1624
    %v1716 = vrcp.pop %v1627
    %v1717 = vmul.f32 %v1707, %v1715
    %v1718 = vmul.f32 %v1712, %v1716
    %1719 = vrot.lane.b32.xlu0 %v1513, 120
    %v1720 = vpop.permute.xlu0 %1719
    %1721 = vrot.lane.b32.xlu0 %v1518, 120
    %v1722 = vpop.permute.xlu0 %1721
    %1723 = vrot.lane.b32.xlu0 %v1513, 88
    %v1724 = vpop.permute.xlu0 %1723
    %1725 = vrot.lane.b32.xlu0 %v1518, 88
    %v1726 = vpop.permute.xlu0 %1725
    %v1727 = vsel %vm211, %v1720, 0
    %v1729 = vsel %vm211, %v1722, 0
    %v1731 = vsel %vm211, %v1724, 0
    %v1733 = vsel %vm211, %v1726, 0
    %1735 = vmatprep.subr.mxu0 0.0
    %1736 = vmatpush1.xpose.msra.mxu0 %v1731
    %1737 = vmatprep.subr.mxu0 0.0
    %1738 = vmatpush1.xpose.msra.mxu0 %v1733
    %1739 = vmatprep.subr.mxu0 0.0
    %1740 = vmatpush1.xpose.msra.mxu0 0.0
    %1741 = vmatprep.subr.mxu0 0.0
    %1742 = vmatpush1.xpose.msra.mxu0 0.0
    %1743 = vmatprep.subr.mxu0 0.0
    %1744 = vmatpush1.xpose.msra.mxu0 0.0
    %1745 = vmatprep.subr.mxu0 0.0
    %1746 = vmatpush1.xpose.msra.mxu0 0.0
    %1747 = vmatprep.subr.mxu0 0.0
    %1748 = vmatpush1.xpose.msra.mxu0 0.0
    %1749 = vmatprep.subr.mxu0 0.0
    %1750 = vmatpush1.xpose.msra.mxu0 0.0
    %1751 = vmatprep.subr.mxu0 0.0
    %1752 = vmatpush1.xpose.msra.mxu0 0.0
    %1753 = vmatprep.subr.mxu0 0.0
    %1754 = vmatpush1.xpose.msra.mxu0 0.0
    %1755 = vmatprep.subr.mxu0 0.0
    %1756 = vmatpush1.xpose.msra.mxu0 0.0
    %1757 = vmatprep.subr.mxu0 0.0
    %1758 = vmatpush1.xpose.msra.mxu0 0.0
    %1759 = vmatprep.subr.mxu0 0.0
    %1760 = vmatpush1.xpose.msra.mxu0 0.0
    %1761 = vmatprep.subr.mxu0 0.0
    %1762 = vmatpush1.xpose.msra.mxu0 0.0
    %1763 = vmatprep.subr.mxu0 0.0
    %1764 = vmatpush1.xpose.msra.mxu0 0.0
    %1765 = vmatprep.subr.mxu0 0.0
    %1766 = vmatpush1.xpose.msra.mxu0 0.0
    %1767 = vmatprep.subr.mxu0 0.0
    %1768 = vmatpush1.xpose.msra.mxu0 0.0
    %1769 = vmatprep.subr.mxu0 0.0
    %1770 = vmatpush1.xpose.msra.mxu0 0.0
    %1771 = vmatprep.subr.mxu0 0.0
    %1772 = vmatpush1.xpose.msra.mxu0 0.0
    %1773 = vmatprep.subr.mxu0 0.0
    %1774 = vmatpush1.xpose.msra.mxu0 0.0
    %1775 = vmatprep.subr.mxu0 0.0
    %1776 = vmatpush1.xpose.msra.mxu0 0.0
    %1777 = vmatprep.subr.mxu0 0.0
    %1778 = vmatpush1.xpose.msra.mxu0 0.0
    %1779 = vmatprep.subr.mxu0 0.0
    %1780 = vmatpush1.xpose.msra.mxu0 0.0
    %1781 = vmatprep.subr.mxu0 0.0
    %1782 = vmatpush1.xpose.msra.mxu0 0.0
    %1783 = vmatprep.subr.mxu0 0.0
    %1784 = vmatpush1.xpose.msra.mxu0 0.0
    %1785 = vmatprep.subr.mxu0 0.0
    %1786 = vmatpush1.xpose.msra.mxu0 0.0
    %1787 = vmatprep.subr.mxu0 0.0
    %1788 = vmatpush1.xpose.msra.mxu0 0.0
    %1789 = vmatprep.subr.mxu0 0.0
    %1790 = vmatpush1.xpose.msra.mxu0 0.0
    %1791 = vmatprep.subr.mxu0 0.0
    %1792 = vmatpush1.xpose.msra.mxu0 0.0
    %1793 = vmatprep.subr.mxu0 0.0
    %1794 = vmatpush1.xpose.msra.mxu0 0.0
    %1795 = vmatprep.subr.mxu0 0.0
    %1796 = vmatpush1.xpose.msra.mxu0 0.0
    %1797 = vmatprep.subr.mxu0 0.0
    %1798 = vmatpush1.xpose.msra.mxu0 0.0
    %1799 = vmatprep.mubr.f32.mxu0 0.0
    %1800 = vmatmul.mubr.f32.gmra.mrb[0].mxu0 %v1727
    %v1801 = vpop.f32.mrb[0].mxu0
    %v1802 = vadd.f32 %v111, %v1801
    %v1803 = vpop.f32.mrb[0].mxu0
    %1804 = vmatprep.mubr.f32.mxu0 0.0
    %1805 = vmatmul.mubr.f32.gmra.mrb[0].mxu0 %v1729
    %v1806 = vpop.f32.mrb[0].mxu0
    %v1807 = vadd.f32 %v112, %v1806
    %v1808 = vpop.f32.mrb[0].mxu0
    %1809 = vdwg.mxu0
    %v1810 = vsel %vm295, %v1802, -inf
    %1811 = vmax.xlane.f32.xlu0 %v1810
    %v1812 = vpop.xlane.xlu0 %1811
    %v1813 = vsel %vm295, %v1807, -inf
    %1814 = vmax.xlane.f32.xlu0 %v1813
    %v1815 = vpop.xlane.xlu0 %1814
    %v1816 = vsub.f32 %v1802, %v1812
    %v1817 = vsub.f32 %v1807, %v1815
    %v1818 = vmul.f32 %v1816, 1.442695
    %v1819 = vpow.pop %v1818
    %v1820 = vmul.f32 %v1817, 1.442695
    %v1821 = vpow.pop %v1820
    %v1822 = vsel %vm295, %v1819, 0.0
    %1823 = vadd.xlane.f32.xlu0 %v1822
    %v1824 = vpop.xlane.xlu0 %1823
    %v1825 = vsel %vm295, %v1821, 0.0
    %1826 = vadd.xlane.f32.xlu0 %v1825
    %v1827 = vpop.xlane.xlu0 %1826
    %1828 = vrot.lane.b32.xlu0 %v1513, 56
    %v1829 = vpop.permute.xlu0 %1828
    %1830 = vrot.lane.b32.xlu0 %v1518, 56
    %v1831 = vpop.permute.xlu0 %1830
    %v1835 = vsel %vm295, %v1819, 0
    %v1838 = vsel %vm295, %v1821, 0
    %1840 = vmatprep.subr.mxu0 0.0
    %1841 = vmatpush1.msra.mxu0 %v1829
    %1842 = vmatprep.subr.mxu0 0.0
    %1843 = vmatpush1.msra.mxu0 %v1831
    %1844 = vmatprep.subr.mxu0 0.0
    %1845 = vmatpush1.msra.mxu0 0.0
    %1846 = vmatprep.subr.mxu0 0.0
    %1847 = vmatpush1.msra.mxu0 0.0
    %1848 = vmatprep.subr.mxu0 0.0
    %1849 = vmatpush1.msra.mxu0 0.0
    %1850 = vmatprep.subr.mxu0 0.0
    %1851 = vmatpush1.msra.mxu0 0.0
    %1852 = vmatprep.subr.mxu0 0.0
    %1853 = vmatpush1.msra.mxu0 0.0
    %1854 = vmatprep.subr.mxu0 0.0
    %1855 = vmatpush1.msra.mxu0 0.0
    %1856 = vmatprep.subr.mxu0 0.0
    %1857 = vmatpush1.msra.mxu0 0.0
    %1858 = vmatprep.subr.mxu0 0.0
    %1859 = vmatpush1.msra.mxu0 0.0
    %1860 = vmatprep.subr.mxu0 0.0
    %1861 = vmatpush1.msra.mxu0 0.0
    %1862 = vmatprep.subr.mxu0 0.0
    %1863 = vmatpush1.msra.mxu0 0.0
    %1864 = vmatprep.subr.mxu0 0.0
    %1865 = vmatpush1.msra.mxu0 0.0
    %1866 = vmatprep.subr.mxu0 0.0
    %1867 = vmatpush1.msra.mxu0 0.0
    %1868 = vmatprep.subr.mxu0 0.0
    %1869 = vmatpush1.msra.mxu0 0.0
    %1870 = vmatprep.subr.mxu0 0.0
    %1871 = vmatpush1.msra.mxu0 0.0
    %1872 = vmatprep.subr.mxu0 0.0
    %1873 = vmatpush1.msra.mxu0 0.0
    %1874 = vmatprep.subr.mxu0 0.0
    %1875 = vmatpush1.msra.mxu0 0.0
    %1876 = vmatprep.subr.mxu0 0.0
    %1877 = vmatpush1.msra.mxu0 0.0
    %1878 = vmatprep.subr.mxu0 0.0
    %1879 = vmatpush1.msra.mxu0 0.0
    %1880 = vmatprep.subr.mxu0 0.0
    %1881 = vmatpush1.msra.mxu0 0.0
    %1882 = vmatprep.subr.mxu0 0.0
    %1883 = vmatpush1.msra.mxu0 0.0
    %1884 = vmatprep.subr.mxu0 0.0
    %1885 = vmatpush1.msra.mxu0 0.0
    %1886 = vmatprep.subr.mxu0 0.0
    %1887 = vmatpush1.msra.mxu0 0.0
    %1888 = vmatprep.subr.mxu0 0.0
    %1889 = vmatpush1.msra.mxu0 0.0
    %1890 = vmatprep.subr.mxu0 0.0
    %1891 = vmatpush1.msra.mxu0 0.0
    %1892 = vmatprep.subr.mxu0 0.0
    %1893 = vmatpush1.msra.mxu0 0.0
    %1894 = vmatprep.subr.mxu0 0.0
    %1895 = vmatpush1.msra.mxu0 0.0
    %1896 = vmatprep.subr.mxu0 0.0
    %1897 = vmatpush1.msra.mxu0 0.0
    %1898 = vmatprep.subr.mxu0 0.0
    %1899 = vmatpush1.msra.mxu0 0.0
    %1900 = vmatprep.subr.mxu0 0.0
    %1901 = vmatpush1.msra.mxu0 0.0
    %1902 = vmatprep.subr.mxu0 0.0
    %1903 = vmatpush1.msra.mxu0 0.0
    %1904 = vmatprep.mubr.f32.mxu0 0.0
    %1905 = vmatmul.mubr.f32.gmra.mrb[0].mxu0 %v1835
    %v1906 = vpop.f32.mrb[0].mxu0
    %v1907 = vadd.f32 0.0, %v1906
    %v1908 = vpop.f32.mrb[0].mxu0
    %1909 = vmatprep.mubr.f32.mxu0 0.0
    %1910 = vmatmul.mubr.f32.gmra.mrb[0].mxu0 %v1838
    %v1911 = vpop.f32.mrb[0].mxu0
    %v1912 = vadd.f32 0.0, %v1911
    %v1913 = vpop.f32.mrb[0].mxu0
    %1914 = vdwg.mxu0
    %v1915 = vrcp.pop %v1824
    %v1916 = vrcp.pop %v1827
    %v1917 = vmul.f32 %v1907, %v1915
    %v1918 = vmul.f32 %v1912, %v1916
    %1919 = vrot.lane.b32.xlu0 %v1513, 112
    %v1920 = vpop.permute.xlu0 %1919
    %1921 = vrot.lane.b32.xlu0 %v1518, 112
    %v1922 = vpop.permute.xlu0 %1921
    %1923 = vrot.lane.b32.xlu0 %v1513, 80
    %v1924 = vpop.permute.xlu0 %1923
    %1925 = vrot.lane.b32.xlu0 %v1518, 80
    %v1926 = vpop.permute.xlu0 %1925
    %v1927 = vsel %vm211, %v1920, 0
    %v1929 = vsel %vm211, %v1922, 0
    %v1931 = vsel %vm211, %v1924, 0
    %v1933 = vsel %vm211, %v1926, 0
    %1935 = vmatprep.subr.mxu0 0.0
    %1936 = vmatpush1.xpose.msra.mxu0 %v1931
    %1937 = vmatprep.subr.mxu0 0.0
    %1938 = vmatpush1.xpose.msra.mxu0 %v1933
    %1939 = vmatprep.subr.mxu0 0.0
    %1940 = vmatpush1.xpose.msra.mxu0 0.0
    %1941 = vmatprep.subr.mxu0 0.0
    %1942 = vmatpush1.xpose.msra.mxu0 0.0
    %1943 = vmatprep.subr.mxu0 0.0
    %1944 = vmatpush1.xpose.msra.mxu0 0.0
    %1945 = vmatprep.subr.mxu0 0.0
    %1946 = vmatpush1.xpose.msra.mxu0 0.0
    %1947 = vmatprep.subr.mxu0 0.0
    %1948 = vmatpush1.xpose.msra.mxu0 0.0
    %1949 = vmatprep.subr.mxu0 0.0
    %1950 = vmatpush1.xpose.msra.mxu0 0.0
    %1951 = vmatprep.subr.mxu0 0.0
    %1952 = vmatpush1.xpose.msra.mxu0 0.0
    %1953 = vmatprep.subr.mxu0 0.0
    %1954 = vmatpush1.xpose.msra.mxu0 0.0
    %1955 = vmatprep.subr.mxu0 0.0
    %1956 = vmatpush1.xpose.msra.mxu0 0.0
    %1957 = vmatprep.subr.mxu0 0.0
    %1958 = vmatpush1.xpose.msra.mxu0 0.0
    %1959 = vmatprep.subr.mxu0 0.0
    %1960 = vmatpush1.xpose.msra.mxu0 0.0
    %1961 = vmatprep.subr.mxu0 0.0
    %1962 = vmatpush1.xpose.msra.mxu0 0.0
    %1963 = vmatprep.subr.mxu0 0.0
    %1964 = vmatpush1.xpose.msra.mxu0 0.0
    %1965 = vmatprep.subr.mxu0 0.0
    %1966 = vmatpush1.xpose.msra.mxu0 0.0
    %1967 = vmatprep.subr.mxu0 0.0
    %1968 = vmatpush1.xpose.msra.mxu0 0.0
    %1969 = vmatprep.subr.mxu0 0.0
    %1970 = vmatpush1.xpose.msra.mxu0 0.0
    %1971 = vmatprep.subr.mxu0 0.0
    %1972 = vmatpush1.xpose.msra.mxu0 0.0
    %1973 = vmatprep.subr.mxu0 0.0
    %1974 = vmatpush1.xpose.msra.mxu0 0.0
    %1975 = vmatprep.subr.mxu0 0.0
    %1976 = vmatpush1.xpose.msra.mxu0 0.0
    %1977 = vmatprep.subr.mxu0 0.0
    %1978 = vmatpush1.xpose.msra.mxu0 0.0
    %1979 = vmatprep.subr.mxu0 0.0
    %1980 = vmatpush1.xpose.msra.mxu0 0.0
    %1981 = vmatprep.subr.mxu0 0.0
    %1982 = vmatpush1.xpose.msra.mxu0 0.0
    %1983 = vmatprep.subr.mxu0 0.0
    %1984 = vmatpush1.xpose.msra.mxu0 0.0
    %1985 = vmatprep.subr.mxu0 0.0
    %1986 = vmatpush1.xpose.msra.mxu0 0.0
    %1987 = vmatprep.subr.mxu0 0.0
    %1988 = vmatpush1.xpose.msra.mxu0 0.0
    %1989 = vmatprep.subr.mxu0 0.0
    %1990 = vmatpush1.xpose.msra.mxu0 0.0
    %1991 = vmatprep.subr.mxu0 0.0
    %1992 = vmatpush1.xpose.msra.mxu0 0.0
    %1993 = vmatprep.subr.mxu0 0.0
    %1994 = vmatpush1.xpose.msra.mxu0 0.0
    %1995 = vmatprep.subr.mxu0 0.0
    %1996 = vmatpush1.xpose.msra.mxu0 0.0
    %1997 = vmatprep.subr.mxu0 0.0
    %1998 = vmatpush1.xpose.msra.mxu0 0.0
    %1999 = vmatprep.mubr.f32.mxu0 0.0
    %2000 = vmatmul.mubr.f32.gmra.mrb[0].mxu0 %v1927
    %v2001 = vpop.f32.mrb[0].mxu0
    %v2002 = vadd.f32 %v111, %v2001
    %v2003 = vpop.f32.mrb[0].mxu0
    %2004 = vmatprep.mubr.f32.mxu0 0.0
    %2005 = vmatmul.mubr.f32.gmra.mrb[0].mxu0 %v1929
    %v2006 = vpop.f32.mrb[0].mxu0
    %v2007 = vadd.f32 %v112, %v2006
    %v2008 = vpop.f32.mrb[0].mxu0
    %2009 = vdwg.mxu0
    %v2010 = vsel %vm295, %v2002, -inf
    %2011 = vmax.xlane.f32.xlu0 %v2010
    %v2012 = vpop.xlane.xlu0 %2011
    %v2013 = vsel %vm295, %v2007, -inf
    %2014 = vmax.xlane.f32.xlu0 %v2013
    %v2015 = vpop.xlane.xlu0 %2014
    %v2016 = vsub.f32 %v2002, %v2012
    %v2017 = vsub.f32 %v2007, %v2015
    %v2018 = vmul.f32 %v2016, 1.442695
    %v2019 = vpow.pop %v2018
    %v2020 = vmul.f32 %v2017, 1.442695
    %v2021 = vpow.pop %v2020
    %v2022 = vsel %vm295, %v2019, 0.0
    %2023 = vadd.xlane.f32.xlu0 %v2022
    %v2024 = vpop.xlane.xlu0 %2023
    %v2025 = vsel %vm295, %v2021, 0.0
    %2026 = vadd.xlane.f32.xlu0 %v2025
    %v2027 = vpop.xlane.xlu0 %2026
    %2028 = vrot.lane.b32.xlu0 %v1513, 48
    %v2029 = vpop.permute.xlu0 %2028
    %2030 = vrot.lane.b32.xlu0 %v1518, 48
    %v2031 = vpop.permute.xlu0 %2030
    %v2035 = vsel %vm295, %v2019, 0
    %v2038 = vsel %vm295, %v2021, 0
    %2040 = vmatprep.subr.mxu0 0.0
    %2041 = vmatpush1.msra.mxu0 %v2029
    %2042 = vmatprep.subr.mxu0 0.0
    %2043 = vmatpush1.msra.mxu0 %v2031
    %2044 = vmatprep.subr.mxu0 0.0
    %2045 = vmatpush1.msra.mxu0 0.0
    %2046 = vmatprep.subr.mxu0 0.0
    %2047 = vmatpush1.msra.mxu0 0.0
    %2048 = vmatprep.subr.mxu0 0.0
    %2049 = vmatpush1.msra.mxu0 0.0
    %2050 = vmatprep.subr.mxu0 0.0
    %2051 = vmatpush1.msra.mxu0 0.0
    %2052 = vmatprep.subr.mxu0 0.0
    %2053 = vmatpush1.msra.mxu0 0.0
    %2054 = vmatprep.subr.mxu0 0.0
    %2055 = vmatpush1.msra.mxu0 0.0
    %2056 = vmatprep.subr.mxu0 0.0
    %2057 = vmatpush1.msra.mxu0 0.0
    %2058 = vmatprep.subr.mxu0 0.0
    %2059 = vmatpush1.msra.mxu0 0.0
    %2060 = vmatprep.subr.mxu0 0.0
    %2061 = vmatpush1.msra.mxu0 0.0
    %2062 = vmatprep.subr.mxu0 0.0
    %2063 = vmatpush1.msra.mxu0 0.0
    %2064 = vmatprep.subr.mxu0 0.0
    %2065 = vmatpush1.msra.mxu0 0.0
    %2066 = vmatprep.subr.mxu0 0.0
    %2067 = vmatpush1.msra.mxu0 0.0
    %2068 = vmatprep.subr.mxu0 0.0
    %2069 = vmatpush1.msra.mxu0 0.0
    %2070 = vmatprep.subr.mxu0 0.0
    %2071 = vmatpush1.msra.mxu0 0.0
    %2072 = vmatprep.subr.mxu0 0.0
    %2073 = vmatpush1.msra.mxu0 0.0
    %2074 = vmatprep.subr.mxu0 0.0
    %2075 = vmatpush1.msra.mxu0 0.0
    %2076 = vmatprep.subr.mxu0 0.0
    %2077 = vmatpush1.msra.mxu0 0.0
    %2078 = vmatprep.subr.mxu0 0.0
    %2079 = vmatpush1.msra.mxu0 0.0
    %2080 = vmatprep.subr.mxu0 0.0
    %2081 = vmatpush1.msra.mxu0 0.0
    %2082 = vmatprep.subr.mxu0 0.0
    %2083 = vmatpush1.msra.mxu0 0.0
    %2084 = vmatprep.subr.mxu0 0.0
    %2085 = vmatpush1.msra.mxu0 0.0
    %2086 = vmatprep.subr.mxu0 0.0
    %2087 = vmatpush1.msra.mxu0 0.0
    %2088 = vmatprep.subr.mxu0 0.0
    %2089 = vmatpush1.msra.mxu0 0.0
    %2090 = vmatprep.subr.mxu0 0.0
    %2091 = vmatpush1.msra.mxu0 0.0
    %2092 = vmatprep.subr.mxu0 0.0
    %2093 = vmatpush1.msra.mxu0 0.0
    %2094 = vmatprep.subr.mxu0 0.0
    %2095 = vmatpush1.msra.mxu0 0.0
    %2096 = vmatprep.subr.mxu0 0.0
    %2097 = vmatpush1.msra.mxu0 0.0
    %2098 = vmatprep.subr.mxu0 0.0
    %2099 = vmatpush1.msra.mxu0 0.0
    %2100 = vmatprep.subr.mxu0 0.0
    %2101 = vmatpush1.msra.mxu0 0.0
    %2102 = vmatprep.subr.mxu0 0.0
    %2103 = vmatpush1.msra.mxu0 0.0
    %2104 = vmatprep.mubr.f32.mxu0 0.0
    %2105 = vmatmul.mubr.f32.gmra.mrb[0].mxu0 %v2035
    %v2106 = vpop.f32.mrb[0].mxu0
    %v2107 = vadd.f32 0.0, %v2106
    %v2108 = vpop.f32.mrb[0].mxu0
    %2109 = vmatprep.mubr.f32.mxu0 0.0
    %2110 = vmatmul.mubr.f32.gmra.mrb[0].mxu0 %v2038
    %v2111 = vpop.f32.mrb[0].mxu0
    %v2112 = vadd.f32 0.0, %v2111
    %v2113 = vpop.f32.mrb[0].mxu0
    %2114 = vdwg.mxu0
    %v2115 = vrcp.pop %v2024
    %v2116 = vrcp.pop %v2027
    %v2117 = vmul.f32 %v2107, %v2115
    %v2118 = vmul.f32 %v2112, %v2116
    %2119 = vrot.lane.b32.xlu0 %v1513, 104
    %v2120 = vpop.permute.xlu0 %2119
    %2121 = vrot.lane.b32.xlu0 %v1518, 104
    %v2122 = vpop.permute.xlu0 %2121
    %2123 = vrot.lane.b32.xlu0 %v1513, 72
    %v2124 = vpop.permute.xlu0 %2123
    %2125 = vrot.lane.b32.xlu0 %v1518, 72
    %v2126 = vpop.permute.xlu0 %2125
    %v2127 = vsel %vm211, %v2120, 0
    %v2129 = vsel %vm211, %v2122, 0
    %v2131 = vsel %vm211, %v2124, 0
    %v2133 = vsel %vm211, %v2126, 0
    %2135 = vmatprep.subr.mxu0 0.0
    %2136 = vmatpush1.xpose.msra.mxu0 %v2131
    %2137 = vmatprep.subr.mxu0 0.0
    %2138 = vmatpush1.xpose.msra.mxu0 %v2133
    %2139 = vmatprep.subr.mxu0 0.0
    %2140 = vmatpush1.xpose.msra.mxu0 0.0
    %2141 = vmatprep.subr.mxu0 0.0
    %2142 = vmatpush1.xpose.msra.mxu0 0.0
    %2143 = vmatprep.subr.mxu0 0.0
    %2144 = vmatpush1.xpose.msra.mxu0 0.0
    %2145 = vmatprep.subr.mxu0 0.0
    %2146 = vmatpush1.xpose.msra.mxu0 0.0
    %2147 = vmatprep.subr.mxu0 0.0
    %2148 = vmatpush1.xpose.msra.mxu0 0.0
    %2149 = vmatprep.subr.mxu0 0.0
    %2150 = vmatpush1.xpose.msra.mxu0 0.0
    %2151 = vmatprep.subr.mxu0 0.0
    %2152 = vmatpush1.xpose.msra.mxu0 0.0
    %2153 = vmatprep.subr.mxu0 0.0
    %2154 = vmatpush1.xpose.msra.mxu0 0.0
    %2155 = vmatprep.subr.mxu0 0.0
    %2156 = vmatpush1.xpose.msra.mxu0 0.0
    %2157 = vmatprep.subr.mxu0 0.0
    %2158 = vmatpush1.xpose.msra.mxu0 0.0
    %2159 = vmatprep.subr.mxu0 0.0
    %2160 = vmatpush1.xpose.msra.mxu0 0.0
    %2161 = vmatprep.subr.mxu0 0.0
    %2162 = vmatpush1.xpose.msra.mxu0 0.0
    %2163 = vmatprep.subr.mxu0 0.0
    %2164 = vmatpush1.xpose.msra.mxu0 0.0
    %2165 = vmatprep.subr.mxu0 0.0
    %2166 = vmatpush1.xpose.msra.mxu0 0.0
    %2167 = vmatprep.subr.mxu0 0.0
    %2168 = vmatpush1.xpose.msra.mxu0 0.0
    %2169 = vmatprep.subr.mxu0 0.0
    %2170 = vmatpush1.xpose.msra.mxu0 0.0
    %2171 = vmatprep.subr.mxu0 0.0
    %2172 = vmatpush1.xpose.msra.mxu0 0.0
    %2173 = vmatprep.subr.mxu0 0.0
    %2174 = vmatpush1.xpose.msra.mxu0 0.0
    %2175 = vmatprep.subr.mxu0 0.0
    %2176 = vmatpush1.xpose.msra.mxu0 0.0
    %2177 = vmatprep.subr.mxu0 0.0
    %2178 = vmatpush1.xpose.msra.mxu0 0.0
    %2179 = vmatprep.subr.mxu0 0.0
    %2180 = vmatpush1.xpose.msra.mxu0 0.0
    %2181 = vmatprep.subr.mxu0 0.0
    %2182 = vmatpush1.xpose.msra.mxu0 0.0
    %2183 = vmatprep.subr.mxu0 0.0
    %2184 = vmatpush1.xpose.msra.mxu0 0.0
    %2185 = vmatprep.subr.mxu0 0.0
    %2186 = vmatpush1.xpose.msra.mxu0 0.0
    %2187 = vmatprep.subr.mxu0 0.0
    %2188 = vmatpush1.xpose.msra.mxu0 0.0
    %2189 = vmatprep.subr.mxu0 0.0
    %2190 = vmatpush1.xpose.msra.mxu0 0.0
    %2191 = vmatprep.subr.mxu0 0.0
    %2192 = vmatpush1.xpose.msra.mxu0 0.0
    %2193 = vmatprep.subr.mxu0 0.0
    %2194 = vmatpush1.xpose.msra.mxu0 0.0
    %2195 = vmatprep.subr.mxu0 0.0
    %2196 = vmatpush1.xpose.msra.mxu0 0.0
    %2197 = vmatprep.subr.mxu0 0.0
    %2198 = vmatpush1.xpose.msra.mxu0 0.0
    %2199 = vmatprep.mubr.f32.mxu0 0.0
    %2200 = vmatmul.mubr.f32.gmra.mrb[0].mxu0 %v2127
    %v2201 = vpop.f32.mrb[0].mxu0
    %v2202 = vadd.f32 %v111, %v2201
    %v2203 = vpop.f32.mrb[0].mxu0
    %2204 = vmatprep.mubr.f32.mxu0 0.0
    %2205 = vmatmul.mubr.f32.gmra.mrb[0].mxu0 %v2129
    %v2206 = vpop.f32.mrb[0].mxu0
    %v2207 = vadd.f32 %v112, %v2206
    %v2208 = vpop.f32.mrb[0].mxu0
    %2209 = vdwg.mxu0
    %v2210 = vsel %vm295, %v2202, -inf
    %2211 = vmax.xlane.f32.xlu0 %v2210
    %v2212 = vpop.xlane.xlu0 %2211
    %v2213 = vsel %vm295, %v2207, -inf
    %2214 = vmax.xlane.f32.xlu0 %v2213
    %v2215 = vpop.xlane.xlu0 %2214
    %v2216 = vsub.f32 %v2202, %v2212
    %v2217 = vsub.f32 %v2207, %v2215
    %v2218 = vmul.f32 %v2216, 1.442695
    %v2219 = vpow.pop %v2218
    %v2220 = vmul.f32 %v2217, 1.442695
    %v2221 = vpow.pop %v2220
    %v2222 = vsel %vm295, %v2219, 0.0
    %2223 = vadd.xlane.f32.xlu0 %v2222
    %v2224 = vpop.xlane.xlu0 %2223
    %v2225 = vsel %vm295, %v2221, 0.0
    %2226 = vadd.xlane.f32.xlu0 %v2225
    %v2227 = vpop.xlane.xlu0 %2226
    %2228 = vrot.lane.b32.xlu0 %v1513, 40
    %v2229 = vpop.permute.xlu0 %2228
    %2230 = vrot.lane.b32.xlu0 %v1518, 40
    %v2231 = vpop.permute.xlu0 %2230
    %v2235 = vsel %vm295, %v2219, 0
    %v2238 = vsel %vm295, %v2221, 0
    %2240 = vmatprep.subr.mxu0 0.0
    %2241 = vmatpush1.msra.mxu0 %v2229
    %2242 = vmatprep.subr.mxu0 0.0
    %2243 = vmatpush1.msra.mxu0 %v2231
    %2244 = vmatprep.subr.mxu0 0.0
    %2245 = vmatpush1.msra.mxu0 0.0
    %2246 = vmatprep.subr.mxu0 0.0
    %2247 = vmatpush1.msra.mxu0 0.0
    %2248 = vmatprep.subr.mxu0 0.0
    %2249 = vmatpush1.msra.mxu0 0.0
    %2250 = vmatprep.subr.mxu0 0.0
    %2251 = vmatpush1.msra.mxu0 0.0
    %2252 = vmatprep.subr.mxu0 0.0
    %2253 = vmatpush1.msra.mxu0 0.0
    %2254 = vmatprep.subr.mxu0 0.0
    %2255 = vmatpush1.msra.mxu0 0.0
    %2256 = vmatprep.subr.mxu0 0.0
    %2257 = vmatpush1.msra.mxu0 0.0
    %2258 = vmatprep.subr.mxu0 0.0
    %2259 = vmatpush1.msra.mxu0 0.0
    %2260 = vmatprep.subr.mxu0 0.0
    %2261 = vmatpush1.msra.mxu0 0.0
    %2262 = vmatprep.subr.mxu0 0.0
    %2263 = vmatpush1.msra.mxu0 0.0
    %2264 = vmatprep.subr.mxu0 0.0
    %2265 = vmatpush1.msra.mxu0 0.0
    %2266 = vmatprep.subr.mxu0 0.0
    %2267 = vmatpush1.msra.mxu0 0.0
    %2268 = vmatprep.subr.mxu0 0.0
    %2269 = vmatpush1.msra.mxu0 0.0
    %2270 = vmatprep.subr.mxu0 0.0
    %2271 = vmatpush1.msra.mxu0 0.0
    %2272 = vmatprep.subr.mxu0 0.0
    %2273 = vmatpush1.msra.mxu0 0.0
    %2274 = vmatprep.subr.mxu0 0.0
    %2275 = vmatpush1.msra.mxu0 0.0
    %2276 = vmatprep.subr.mxu0 0.0
    %2277 = vmatpush1.msra.mxu0 0.0
    %2278 = vmatprep.subr.mxu0 0.0
    %2279 = vmatpush1.msra.mxu0 0.0
    %2280 = vmatprep.subr.mxu0 0.0
    %2281 = vmatpush1.msra.mxu0 0.0
    %2282 = vmatprep.subr.mxu0 0.0
    %2283 = vmatpush1.msra.mxu0 0.0
    %2284 = vmatprep.subr.mxu0 0.0
    %2285 = vmatpush1.msra.mxu0 0.0
    %2286 = vmatprep.subr.mxu0 0.0
    %2287 = vmatpush1.msra.mxu0 0.0
    %2288 = vmatprep.subr.mxu0 0.0
    %2289 = vmatpush1.msra.mxu0 0.0
    %2290 = vmatprep.subr.mxu0 0.0
    %2291 = vmatpush1.msra.mxu0 0.0
    %2292 = vmatprep.subr.mxu0 0.0
    %2293 = vmatpush1.msra.mxu0 0.0
    %2294 = vmatprep.subr.mxu0 0.0
    %2295 = vmatpush1.msra.mxu0 0.0
    %2296 = vmatprep.subr.mxu0 0.0
    %2297 = vmatpush1.msra.mxu0 0.0
    %2298 = vmatprep.subr.mxu0 0.0
    %2299 = vmatpush1.msra.mxu0 0.0
    %2300 = vmatprep.subr.mxu0 0.0
    %2301 = vmatpush1.msra.mxu0 0.0
    %2302 = vmatprep.subr.mxu0 0.0
    %2303 = vmatpush1.msra.mxu0 0.0
    %2304 = vmatprep.mubr.f32.mxu0 0.0
    %2305 = vmatmul.mubr.f32.gmra.mrb[0].mxu0 %v2235
    %v2306 = vpop.f32.mrb[0].mxu0
    %v2307 = vadd.f32 0.0, %v2306
    %v2308 = vpop.f32.mrb[0].mxu0
    %2309 = vmatprep.mubr.f32.mxu0 0.0
    %2310 = vmatmul.mubr.f32.gmra.mrb[0].mxu0 %v2238
    %v2311 = vpop.f32.mrb[0].mxu0
    %v2312 = vadd.f32 0.0, %v2311
    %v2313 = vpop.f32.mrb[0].mxu0
    %2314 = vdwg.mxu0
    %v2315 = vrcp.pop %v2224
    %v2316 = vrcp.pop %v2227
    %v2317 = vmul.f32 %v2307, %v2315
    %v2318 = vmul.f32 %v2312, %v2316
    %2321 = vrot.lane.b32.xlu0 %v1917, 8
    %v2322 = vpop.permute.xlu0 %2321
    %2323 = vrot.lane.b32.xlu0 %v1918, 8
    %v2324 = vpop.permute.xlu0 %2323
    %2329 = vrot.lane.b32.xlu0 %v2117, 16
    %v2330 = vpop.permute.xlu0 %2329
    %2331 = vrot.lane.b32.xlu0 %v2118, 16
    %v2332 = vpop.permute.xlu0 %2331
    %2337 = vrot.lane.b32.xlu0 %v2317, 24
    %v2338 = vpop.permute.xlu0 %2337
    %2339 = vrot.lane.b32.xlu0 %v2318, 24
    %v2340 = vpop.permute.xlu0 %2339
    %v2343 = vsel %vm211, %v1717, %v2322
    %v2344 = vsel %vm211, %v1718, %v2324
    %v2345 = vsel %vm295, %v2343, %v2330
    %v2346 = vsel %vm295, %v2344, %v2332
    %v2347 = vsel %vm1033, %v2345, %v2338
    %v2348 = vsel %vm1033, %v2346, %v2340
    %s2349 = scalar_lea.vmem %s6, 32
    %v2350 = vld [vmem:[%s2349] sm:$0xff]
    %v2351 = vld [vmem:[%s2349 + $0x8] sm:$0xff]
    %v2352 = vld [vmem:[%s2349 + $0x10] sm:$0xff]
    %v2353 = vld [vmem:[%s2349 + $0x18] sm:$0xff]
    %s2354 = scalar_lea.vmem %s7, 1
    %v2355 = vld [vmem:[%s2354] sm:$0x1]
    %v2357 = vlaneseq
    %v2358 = vshrl.u32 %v2357, 7
    %v2359 = vsub.s32 0, %v2358
    %v2360 = vrot.slane %v2355, %v2359
    %v2363 = vsel %vm67, %v2347, 0
    %v2366 = vsel %vm67, %v2348, 0
    %2368 = vmatprep.subr.mxu0 0.0
    %2369 = vmatpush1.msra.mxu0 %v2350
    %2370 = vmatprep.subr.mxu0 0.0
    %2371 = vmatpush1.msra.mxu0 %v2351
    %2372 = vmatprep.subr.mxu0 0.0
    %2373 = vmatpush1.msra.mxu0 %v2352
    %2374 = vmatprep.subr.mxu0 0.0
    %2375 = vmatpush1.msra.mxu0 %v2353
    %2376 = vmatprep.subr.mxu0 0.0
    %2377 = vmatpush1.msra.mxu0 0.0
    %2378 = vmatprep.subr.mxu0 0.0
    %2379 = vmatpush1.msra.mxu0 0.0
    %2380 = vmatprep.subr.mxu0 0.0
    %2381 = vmatpush1.msra.mxu0 0.0
    %2382 = vmatprep.subr.mxu0 0.0
    %2383 = vmatpush1.msra.mxu0 0.0
    %2384 = vmatprep.subr.mxu0 0.0
    %2385 = vmatpush1.msra.mxu0 0.0
    %2386 = vmatprep.subr.mxu0 0.0
    %2387 = vmatpush1.msra.mxu0 0.0
    %2388 = vmatprep.subr.mxu0 0.0
    %2389 = vmatpush1.msra.mxu0 0.0
    %2390 = vmatprep.subr.mxu0 0.0
    %2391 = vmatpush1.msra.mxu0 0.0
    %2392 = vmatprep.subr.mxu0 0.0
    %2393 = vmatpush1.msra.mxu0 0.0
    %2394 = vmatprep.subr.mxu0 0.0
    %2395 = vmatpush1.msra.mxu0 0.0
    %2396 = vmatprep.subr.mxu0 0.0
    %2397 = vmatpush1.msra.mxu0 0.0
    %2398 = vmatprep.subr.mxu0 0.0
    %2399 = vmatpush1.msra.mxu0 0.0
    %2400 = vmatprep.subr.mxu0 0.0
    %2401 = vmatpush1.msra.mxu0 0.0
    %2402 = vmatprep.subr.mxu0 0.0
    %2403 = vmatpush1.msra.mxu0 0.0
    %2404 = vmatprep.subr.mxu0 0.0
    %2405 = vmatpush1.msra.mxu0 0.0
    %2406 = vmatprep.subr.mxu0 0.0
    %2407 = vmatpush1.msra.mxu0 0.0
    %2408 = vmatprep.subr.mxu0 0.0
    %2409 = vmatpush1.msra.mxu0 0.0
    %2410 = vmatprep.subr.mxu0 0.0
    %2411 = vmatpush1.msra.mxu0 0.0
    %2412 = vmatprep.subr.mxu0 0.0
    %2413 = vmatpush1.msra.mxu0 0.0
    %2414 = vmatprep.subr.mxu0 0.0
    %2415 = vmatpush1.msra.mxu0 0.0
    %2416 = vmatprep.subr.mxu0 0.0
    %2417 = vmatpush1.msra.mxu0 0.0
    %2418 = vmatprep.subr.mxu0 0.0
    %2419 = vmatpush1.msra.mxu0 0.0
    %2420 = vmatprep.subr.mxu0 0.0
    %2421 = vmatpush1.msra.mxu0 0.0
    %2422 = vmatprep.subr.mxu0 0.0
    %2423 = vmatpush1.msra.mxu0 0.0
    %2424 = vmatprep.subr.mxu0 0.0
    %2425 = vmatpush1.msra.mxu0 0.0
    %2426 = vmatprep.subr.mxu0 0.0
    %2427 = vmatpush1.msra.mxu0 0.0
    %2428 = vmatprep.subr.mxu0 0.0
    %2429 = vmatpush1.msra.mxu0 0.0
    %2430 = vmatprep.subr.mxu0 0.0
    %2431 = vmatpush1.msra.mxu0 0.0
    %2432 = vmatprep.mubr.f32.mxu0 0.0
    %2433 = vmatmul.mubr.f32.gmra.mrb[0].mxu0 %v2363
    %v2434 = vpop.f32.mrb[0].mxu0
    %v2435 = vadd.f32 %v2360, %v2434
    %v2436 = vpop.f32.mrb[0].mxu0
    %2437 = vmatprep.mubr.f32.mxu0 0.0
    %2438 = vmatmul.mubr.f32.gmra.mrb[0].mxu0 %v2366
    %v2439 = vpop.f32.mrb[0].mxu0
    %v2440 = vadd.f32 %v2360, %v2439
    %v2441 = vpop.f32.mrb[0].mxu0
    %2442 = vdwg.mxu0
    %v2443 = vadd.f32 %v2435, %v1425
    %v2444 = vadd.f32 %v2440, %v1426
    %s2445 = scalar_lea.vmem %s8, 1
    %v2446 = vld [vmem:[%s2445] sm:$0x1]
    %s2447 = scalar_lea.vmem %s9, 1
    %v2448 = vld [vmem:[%s2447] sm:$0x1]
    %v2449 = vsel %vm67, %v2443, 0.0
    %2450 = vadd.xlane.f32.xlu0 %v2449
    %v2451 = vpop.xlane.xlu0 %2450
    %v2452 = vsel %vm67, %v2444, 0.0
    %2453 = vadd.xlane.f32.xlu0 %v2452
    %v2454 = vpop.xlane.xlu0 %2453
    %v2455 = vmul.f32 %v2451, %v74
    %v2456 = vmul.f32 %v2454, %v74
    %v2457 = vsub.f32 %v2443, %v2455
    %v2458 = vsub.f32 %v2444, %v2456
    %v2459 = vmul.f32 %v2457, %v2457
    %v2460 = vmul.f32 %v2458, %v2458
    %v2461 = vsel %vm67, %v2459, 0.0
    %2462 = vadd.xlane.f32.xlu0 %v2461
    %v2463 = vpop.xlane.xlu0 %2462
    %v2464 = vsel %vm67, %v2460, 0.0
    %2465 = vadd.xlane.f32.xlu0 %v2464
    %v2466 = vpop.xlane.xlu0 %2465
    %v2467 = vmul.f32 %v2463, %v74
    %v2468 = vmul.f32 %v2466, %v74
    %v2469 = vadd.f32 %v2467, 1e-12
    %v2470 = vadd.f32 %v2468, 1e-12
    %v2471 = vrsqrt.pop %v2469
    %v2472 = vrsqrt.pop %v2470
    %v2473 = vmul.f32 %v2457, %v2471
    %v2474 = vmul.f32 %v2458, %v2472
    %v2476 = vlaneseq
    %v2477 = vshrl.u32 %v2476, 7
    %v2478 = vsub.s32 0, %v2477
    %v2479 = vrot.slane %v2446, %v2478
    %v2481 = vmul.f32 %v2473, %v2479
    %v2482 = vmul.f32 %v2474, %v2479
    %v2484 = vlaneseq
    %v2485 = vshrl.u32 %v2484, 7
    %v2486 = vsub.s32 0, %v2485
    %v2487 = vrot.slane %v2448, %v2486
    %v2489 = vadd.f32 %v2481, %v2487
    %v2490 = vadd.f32 %v2482, %v2487
    %s2491 = scalar_lea.vmem %s10, 32
    %v2492 = vld [vmem:[%s2491] sm:$0xff]
    %v2493 = vld [vmem:[%s2491 + $0x8] sm:$0xff]
    %v2494 = vld [vmem:[%s2491 + $0x10] sm:$0xff]
    %v2495 = vld [vmem:[%s2491 + $0x18] sm:$0xff]
    %s2496 = scalar_lea.vmem %s11, 1
    %v2497 = vld [vmem:[%s2496] sm:$0x1]
    %v2499 = vlaneseq
    %v2500 = vshrl.u32 %v2499, 7
    %v2501 = vsub.s32 0, %v2500
    %v2502 = vrot.slane %v2497, %v2501
    %v2505 = vsel %vm67, %v2489, 0
    %v2508 = vsel %vm67, %v2490, 0
    %2510 = vmatprep.subr.mxu0 0.0
    %2511 = vmatpush1.msra.mxu0 %v2492
    %2512 = vmatprep.subr.mxu0 0.0
    %2513 = vmatpush1.msra.mxu0 %v2493
    %2514 = vmatprep.subr.mxu0 0.0
    %2515 = vmatpush1.msra.mxu0 %v2494
    %2516 = vmatprep.subr.mxu0 0.0
    %2517 = vmatpush1.msra.mxu0 %v2495
    %2518 = vmatprep.subr.mxu0 0.0
    %2519 = vmatpush1.msra.mxu0 0.0
    %2520 = vmatprep.subr.mxu0 0.0
    %2521 = vmatpush1.msra.mxu0 0.0
    %2522 = vmatprep.subr.mxu0 0.0
    %2523 = vmatpush1.msra.mxu0 0.0
    %2524 = vmatprep.subr.mxu0 0.0
    %2525 = vmatpush1.msra.mxu0 0.0
    %2526 = vmatprep.subr.mxu0 0.0
    %2527 = vmatpush1.msra.mxu0 0.0
    %2528 = vmatprep.subr.mxu0 0.0
    %2529 = vmatpush1.msra.mxu0 0.0
    %2530 = vmatprep.subr.mxu0 0.0
    %2531 = vmatpush1.msra.mxu0 0.0
    %2532 = vmatprep.subr.mxu0 0.0
    %2533 = vmatpush1.msra.mxu0 0.0
    %2534 = vmatprep.subr.mxu0 0.0
    %2535 = vmatpush1.msra.mxu0 0.0
    %2536 = vmatprep.subr.mxu0 0.0
    %2537 = vmatpush1.msra.mxu0 0.0
    %2538 = vmatprep.subr.mxu0 0.0
    %2539 = vmatpush1.msra.mxu0 0.0
    %2540 = vmatprep.subr.mxu0 0.0
    %2541 = vmatpush1.msra.mxu0 0.0
    %2542 = vmatprep.subr.mxu0 0.0
    %2543 = vmatpush1.msra.mxu0 0.0
    %2544 = vmatprep.subr.mxu0 0.0
    %2545 = vmatpush1.msra.mxu0 0.0
    %2546 = vmatprep.subr.mxu0 0.0
    %2547 = vmatpush1.msra.mxu0 0.0
    %2548 = vmatprep.subr.mxu0 0.0
    %2549 = vmatpush1.msra.mxu0 0.0
    %2550 = vmatprep.subr.mxu0 0.0
    %2551 = vmatpush1.msra.mxu0 0.0
    %2552 = vmatprep.subr.mxu0 0.0
    %2553 = vmatpush1.msra.mxu0 0.0
    %2554 = vmatprep.subr.mxu0 0.0
    %2555 = vmatpush1.msra.mxu0 0.0
    %2556 = vmatprep.subr.mxu0 0.0
    %2557 = vmatpush1.msra.mxu0 0.0
    %2558 = vmatprep.subr.mxu0 0.0
    %2559 = vmatpush1.msra.mxu0 0.0
    %2560 = vmatprep.subr.mxu0 0.0
    %2561 = vmatpush1.msra.mxu0 0.0
    %2562 = vmatprep.subr.mxu0 0.0
    %2563 = vmatpush1.msra.mxu0 0.0
    %2564 = vmatprep.subr.mxu0 0.0
    %2565 = vmatpush1.msra.mxu0 0.0
    %2566 = vmatprep.subr.mxu0 0.0
    %2567 = vmatpush1.msra.mxu0 0.0
    %2568 = vmatprep.subr.mxu0 0.0
    %2569 = vmatpush1.msra.mxu0 0.0
    %2570 = vmatprep.subr.mxu0 0.0
    %2571 = vmatpush1.msra.mxu0 0.0
    %2572 = vmatprep.subr.mxu0 0.0
    %2573 = vmatpush1.msra.mxu0 0.0
    %2574 = vmatprep.mubr.f32.mxu0 0.0
    %2575 = vmatmul.mubr.f32.gmra.mrb[0].mxu0 %v2505
    %v2576 = vpop.f32.mrb[0].mxu0
    %v2577 = vadd.f32 %v2502, %v2576
    %v2578 = vpop.f32.mrb[0].mxu0
    %2579 = vmatprep.mubr.f32.mxu0 0.0
    %2580 = vmatmul.mubr.f32.gmra.mrb[0].mxu0 %v2508
    %v2581 = vpop.f32.mrb[0].mxu0
    %v2582 = vadd.f32 %v2502, %v2581
    %v2583 = vpop.f32.mrb[0].mxu0
    %2584 = vdwg.mxu0
    %v2585 = vmul.f32 %v2577, %v2577
    %v2586 = vmul.f32 %v2582, %v2582
    %v2587 = vmul.f32 %v2577, %v2585
    %v2588 = vmul.f32 %v2582, %v2586
    %v2589 = vmul.f32 %v2587, 0.044715
    %v2590 = vmul.f32 %v2588, 0.044715
    %v2591 = vadd.f32 %v2577, %v2589
    %v2592 = vadd.f32 %v2582, %v2590
    %v2593 = vmul.f32 %v2591, 0.7978846
    %v2594 = vmul.f32 %v2592, 0.7978846
    %v2595 = vtanh.pop %v2593
    %v2596 = vtanh.pop %v2594
    %v2597 = vadd.f32 %v2595, 1.0
    %v2598 = vadd.f32 %v2596, 1.0
    %v2599 = vmul.f32 %v2597, 0.5
    %v2600 = vmul.f32 %v2598, 0.5
    %v2601 = vmul.f32 %v2577, %v2599
    %v2602 = vmul.f32 %v2582, %v2600
    %s2603 = scalar_lea.vmem %s12, 64
    %v2604 = vld [vmem:[%s2603] sm:$0xff]
    %v2605 = vld [vmem:[%s2603 + $0x8] sm:$0xff]
    %v2606 = vld [vmem:[%s2603 + $0x10] sm:$0xff]
    %v2607 = vld [vmem:[%s2603 + $0x18] sm:$0xff]
    %v2608 = vld [vmem:[%s2603 + $0x20] sm:$0xff]
    %v2609 = vld [vmem:[%s2603 + $0x28] sm:$0xff]
    %v2610 = vld [vmem:[%s2603 + $0x30] sm:$0xff]
    %v2611 = vld [vmem:[%s2603 + $0x38] sm:$0xff]
    %s2612 = scalar_lea.vmem %s13, 1
    %v2613 = vld [vmem:[%s2612] sm:$0x1]
    %v2615 = vlaneseq
    %v2616 = vshrl.u32 %v2615, 7
    %v2617 = vsub.s32 0, %v2616
    %v2618 = vrot.slane %v2613, %v2617
    %v2621 = vsel %vm1299, %v2601, 0
    %v2624 = vsel %vm1299, %v2602, 0
    %2626 = vmatprep.subr.mxu0 0.0
    %2627 = vmatpush1.msra.mxu0 %v2604
    %2628 = vmatprep.subr.mxu0 0.0
    %2629 = vmatpush1.msra.mxu0 %v2605
    %2630 = vmatprep.subr.mxu0 0.0
    %2631 = vmatpush1.msra.mxu0 %v2606
    %2632 = vmatprep.subr.mxu0 0.0
    %2633 = vmatpush1.msra.mxu0 %v2607
    %2634 = vmatprep.subr.mxu0 0.0
    %2635 = vmatpush1.msra.mxu0 %v2608
    %2636 = vmatprep.subr.mxu0 0.0
    %2637 = vmatpush1.msra.mxu0 %v2609
    %2638 = vmatprep.subr.mxu0 0.0
    %2639 = vmatpush1.msra.mxu0 %v2610
    %2640 = vmatprep.subr.mxu0 0.0
    %2641 = vmatpush1.msra.mxu0 %v2611
    %2642 = vmatprep.subr.mxu0 0.0
    %2643 = vmatpush1.msra.mxu0 0.0
    %2644 = vmatprep.subr.mxu0 0.0
    %2645 = vmatpush1.msra.mxu0 0.0
    %2646 = vmatprep.subr.mxu0 0.0
    %2647 = vmatpush1.msra.mxu0 0.0
    %2648 = vmatprep.subr.mxu0 0.0
    %2649 = vmatpush1.msra.mxu0 0.0
    %2650 = vmatprep.subr.mxu0 0.0
    %2651 = vmatpush1.msra.mxu0 0.0
    %2652 = vmatprep.subr.mxu0 0.0
    %2653 = vmatpush1.msra.mxu0 0.0
    %2654 = vmatprep.subr.mxu0 0.0
    %2655 = vmatpush1.msra.mxu0 0.0
    %2656 = vmatprep.subr.mxu0 0.0
    %2657 = vmatpush1.msra.mxu0 0.0
    %2658 = vmatprep.subr.mxu0 0.0
    %2659 = vmatpush1.msra.mxu0 0.0
    %2660 = vmatprep.subr.mxu0 0.0
    %2661 = vmatpush1.msra.mxu0 0.0
    %2662 = vmatprep.subr.mxu0 0.0
    %2663 = vmatpush1.msra.mxu0 0.0
    %2664 = vmatprep.subr.mxu0 0.0
    %2665 = vmatpush1.msra.mxu0 0.0
    %2666 = vmatprep.subr.mxu0 0.0
    %2667 = vmatpush1.msra.mxu0 0.0
    %2668 = vmatprep.subr.mxu0 0.0
    %2669 = vmatpush1.msra.mxu0 0.0
    %2670 = vmatprep.subr.mxu0 0.0
    %2671 = vmatpush1.msra.mxu0 0.0
    %2672 = vmatprep.subr.mxu0 0.0
    %2673 = vmatpush1.msra.mxu0 0.0
    %2674 = vmatprep.subr.mxu0 0.0
    %2675 = vmatpush1.msra.mxu0 0.0
    %2676 = vmatprep.subr.mxu0 0.0
    %2677 = vmatpush1.msra.mxu0 0.0
    %2678 = vmatprep.subr.mxu0 0.0
    %2679 = vmatpush1.msra.mxu0 0.0
    %2680 = vmatprep.subr.mxu0 0.0
    %2681 = vmatpush1.msra.mxu0 0.0
    %2682 = vmatprep.subr.mxu0 0.0
    %2683 = vmatpush1.msra.mxu0 0.0
    %2684 = vmatprep.subr.mxu0 0.0
    %2685 = vmatpush1.msra.mxu0 0.0
    %2686 = vmatprep.subr.mxu0 0.0
    %2687 = vmatpush1.msra.mxu0 0.0
    %2688 = vmatprep.subr.mxu0 0.0
    %2689 = vmatpush1.msra.mxu0 0.0
    %2690 = vmatprep.mubr.f32.mxu0 0.0
    %2691 = vmatmul.mubr.f32.gmra.mrb[0].mxu0 %v2621
    %v2692 = vpop.f32.mrb[0].mxu0
    %v2693 = vadd.f32 %v2618, %v2692
    %v2694 = vpop.f32.mrb[0].mxu0
    %2695 = vmatprep.mubr.f32.mxu0 0.0
    %2696 = vmatmul.mubr.f32.gmra.mrb[0].mxu0 %v2624
    %v2697 = vpop.f32.mrb[0].mxu0
    %v2698 = vadd.f32 %v2618, %v2697
    %v2699 = vpop.f32.mrb[0].mxu0
    %2700 = vdwg.mxu0
    %v2701 = vadd.f32 %v2693, %v2489
    %v2702 = vadd.f32 %v2698, %v2490
    %s2703 = scalar_lea.vmem %s14, 1
    %v2704 = vld [vmem:[%s2703] sm:$0x1]
    %s2705 = scalar_lea.vmem %s15, 1
    %v2706 = vld [vmem:[%s2705] sm:$0x1]
    %v2707 = vsel %vm67, %v2701, 0.0
    %2708 = vadd.xlane.f32.xlu0 %v2707
    %v2709 = vpop.xlane.xlu0 %2708
    %v2710 = vsel %vm67, %v2702, 0.0
    %2711 = vadd.xlane.f32.xlu0 %v2710
    %v2712 = vpop.xlane.xlu0 %2711
    %v2713 = vmul.f32 %v2709, %v74
    %v2714 = vmul.f32 %v2712, %v74
    %v2715 = vsub.f32 %v2701, %v2713
    %v2716 = vsub.f32 %v2702, %v2714
    %v2717 = vmul.f32 %v2715, %v2715
    %v2718 = vmul.f32 %v2716, %v2716
    %v2719 = vsel %vm67, %v2717, 0.0
    %2720 = vadd.xlane.f32.xlu0 %v2719
    %v2721 = vpop.xlane.xlu0 %2720
    %v2722 = vsel %vm67, %v2718, 0.0
    %2723 = vadd.xlane.f32.xlu0 %v2722
    %v2724 = vpop.xlane.xlu0 %2723
    %v2725 = vmul.f32 %v2721, %v74
    %v2726 = vmul.f32 %v2724, %v74
    %v2727 = vadd.f32 %v2725, 1e-12
    %v2728 = vadd.f32 %v2726, 1e-12
    %v2729 = vrsqrt.pop %v2727
    %v2730 = vrsqrt.pop %v2728
    %v2731 = vmul.f32 %v2715, %v2729
    %v2732 = vmul.f32 %v2716, %v2730
    %v2734 = vlaneseq
    %v2735 = vshrl.u32 %v2734, 7
    %v2736 = vsub.s32 0, %v2735
    %v2737 = vrot.slane %v2704, %v2736
    %v2739 = vmul.f32 %v2731, %v2737
    %v2740 = vmul.f32 %v2732, %v2737
    %v2742 = vlaneseq
    %v2743 = vshrl.u32 %v2742, 7
    %v2744 = vsub.s32 0, %v2743
    %v2745 = vrot.slane %v2706, %v2744
    %v2747 = vadd.f32 %v2739, %v2745
    %v2748 = vadd.f32 %v2740, %v2745
    %2749 = vst.msk [vmem:[#allocation2] sm:$0xff] %vm67, %v2747
    %2750 = vst.msk [vmem:[#allocation2 + $0x8] sm:$0xff] %vm67, %v2748
    %v2752 = vrot.slane %v2748, 7
    %vm2754 = vcmask 1040384
    %v2755 = vsel %vm2754, %v2747, %v2752
    %v2756 = vld [vmem:[%s16] sm:$0xff]
    %v2757 = vld [vmem:[%s16 + $0x8] sm:$0xff]
    %v2758 = vld [vmem:[%s16 + $0x10] sm:$0xff]
    %v2759 = vld [vmem:[%s16 + $0x18] sm:$0xff]
    %v2760 = vld [vmem:[%s17] sm:$0x1]
    %v2762 = vlaneseq
    %v2763 = vshrl.u32 %v2762, 7
    %v2764 = vsub.s32 0, %v2763
    %v2765 = vrot.slane %v2760, %v2764
    %v2768 = vsel %vm67, %v2755, 0
    %2770 = vmatprep.subr.mxu0 0.0
    %2771 = vmatpush1.msra.mxu0 %v2756
    %2772 = vmatprep.subr.mxu0 0.0
    %2773 = vmatpush1.msra.mxu0 %v2757
    %2774 = vmatprep.subr.mxu0 0.0
    %2775 = vmatpush1.msra.mxu0 %v2758
    %2776 = vmatprep.subr.mxu0 0.0
    %2777 = vmatpush1.msra.mxu0 %v2759
    %2778 = vmatprep.subr.mxu0 0.0
    %2779 = vmatpush1.msra.mxu0 0.0
    %2780 = vmatprep.subr.mxu0 0.0
    %2781 = vmatpush1.msra.mxu0 0.0
    %2782 = vmatprep.subr.mxu0 0.0
    %2783 = vmatpush1.msra.mxu0 0.0
    %2784 = vmatprep.subr.mxu0 0.0
    %2785 = vmatpush1.msra.mxu0 0.0
    %2786 = vmatprep.subr.mxu0 0.0
    %2787 = vmatpush1.msra.mxu0 0.0
    %2788 = vmatprep.subr.mxu0 0.0
    %2789 = vmatpush1.msra.mxu0 0.0
    %2790 = vmatprep.subr.mxu0 0.0
    %2791 = vmatpush1.msra.mxu0 0.0
    %2792 = vmatprep.subr.mxu0 0.0
    %2793 = vmatpush1.msra.mxu0 0.0
    %2794 = vmatprep.subr.mxu0 0.0
    %2795 = vmatpush1.msra.mxu0 0.0
    %2796 = vmatprep.subr.mxu0 0.0
    %2797 = vmatpush1.msra.mxu0 0.0
    %2798 = vmatprep.subr.mxu0 0.0
    %2799 = vmatpush1.msra.mxu0 0.0
    %2800 = vmatprep.subr.mxu0 0.0
    %2801 = vmatpush1.msra.mxu0 0.0
    %2802 = vmatprep.subr.mxu0 0.0
    %2803 = vmatpush1.msra.mxu0 0.0
    %2804 = vmatprep.subr.mxu0 0.0
    %2805 = vmatpush1.msra.mxu0 0.0
    %2806 = vmatprep.subr.mxu0 0.0
    %2807 = vmatpush1.msra.mxu0 0.0
    %2808 = vmatprep.subr.mxu0 0.0
    %2809 = vmatpush1.msra.mxu0 0.0
    %2810 = vmatprep.subr.mxu0 0.0
    %2811 = vmatpush1.msra.mxu0 0.0
    %2812 = vmatprep.subr.mxu0 0.0
    %2813 = vmatpush1.msra.mxu0 0.0
    %2814 = vmatprep.subr.mxu0 0.0
    %2815 = vmatpush1.msra.mxu0 0.0
    %2816 = vmatprep.subr.mxu0 0.0
    %2817 = vmatpush1.msra.mxu0 0.0
    %2818 = vmatprep.subr.mxu0 0.0
    %2819 = vmatpush1.msra.mxu0 0.0
    %2820 = vmatprep.subr.mxu0 0.0
    %2821 = vmatpush1.msra.mxu0 0.0
    %2822 = vmatprep.subr.mxu0 0.0
    %2823 = vmatpush1.msra.mxu0 0.0
    %2824 = vmatprep.subr.mxu0 0.0
    %2825 = vmatpush1.msra.mxu0 0.0
    %2826 = vmatprep.subr.mxu0 0.0
    %2827 = vmatpush1.msra.mxu0 0.0
    %2828 = vmatprep.subr.mxu0 0.0
    %2829 = vmatpush1.msra.mxu0 0.0
    %2830 = vmatprep.subr.mxu0 0.0
    %2831 = vmatpush1.msra.mxu0 0.0
    %2832 = vmatprep.subr.mxu0 0.0
    %2833 = vmatpush1.msra.mxu0 0.0
    %2834 = vmatprep.mubr.f32.mxu0 0.0
    %2835 = vmatmul.mubr.f32.gmra.mrb[0].mxu0 %v2768
    %v2836 = vpop.f32.mrb[0].mxu0
    %v2837 = vadd.f32 %v2765, %v2836
    %v2838 = vpop.f32.mrb[0].mxu0
    %2839 = vdwg.mxu0
    %v2840 = vtanh.pop %v2837
    %vm2841 = vcmask 254976
    %2842 = vst.msk [vmem:[#allocation4] sm:$0x3] %vm2841, %v2840
    // Predicated region
    $region74: #{bert_forward.1} parent=1 // pred_check
      _
    $region75: #{bert_forward.1} parent=1 // pred_check_branch
      %2844 = sbr.rel (0) target = $region77
    $region76: #{bert_forward.1} parent=1 // pred_region
      %s2846 = ssub.s32 256, 256
      %2847 = vsyncadd [#allocation3], %s2846
      %s2848 = sshll.u32 [#allocation2], 4
      %s2849 = int_to_ptr.vmem [resolvable:$true] %s2848
      %2854 = dma.vmem_to_hbm [thread:$0]  %s2849, 256, %s18, [#allocation3], 128, 128, 8
    $region77: #{bert_forward.1} parent=1 // pred_fallthru
      _
    // Predicated region
    $region78: #{bert_forward.1} parent=1 // pred_check
      _
    $region79: #{bert_forward.1} parent=1 // pred_check_branch
      %2856 = sbr.rel (0) target = $region81
    $region80: #{bert_forward.1} parent=1 // pred_region
      %s2858 = ssub.s32 32, 32
      %2859 = vsyncadd [#allocation5], %s2858
      %s2861 = sshll.u32 [#allocation4], 4
      %s2862 = int_to_ptr.vmem [resolvable:$true] %s2861
      %2864 = dma.vmem_to_hbm [thread:$0]  %s2862, 32, %s19, [#allocation5]
    $region81: #{bert_forward.1} parent=1 // pred_fallthru
      _
    // Predicated region
    $region82: #{bert_forward.1} parent=1 // pred_check
      _
    $region83: #{bert_forward.1} parent=1 // pred_check_branch
      %2866 = sbr.rel (0) target = $region85
    $region84: #{bert_forward.1} parent=1 // pred_region
      %2867 = dma.done [#allocation3], 256
    $region85: #{bert_forward.1} parent=1 // pred_fallthru
      _
    // Predicated region
    $region86: #{bert_forward.1} parent=1 // pred_check
      _
    $region87: #{bert_forward.1} parent=1 // pred_check_branch
      %2869 = sbr.rel (0) target = $region89
    $region88: #{bert_forward.1} parent=1 // pred_region
      %2870 = dma.done [#allocation5], 32
    $region89: #{bert_forward.1} parent=1 // pred_fallthru
      _
    %2871 = vsyncpa [#allocation3], 1
    %2872 = vsyncpa [#allocation5], 1

</llo_original>
